<compile_context>
chip_gen: v7x
topology: tpu7x:2x2x1
jax: 0.10.0
libtpu: 0.0.40
codegen_flags: <defaults>
</compile_context>

<pallas_src>
import functools
from collections import OrderedDict

import jax
import jax.numpy as jnp
from jax.experimental import pallas as pl
from jax.experimental.pallas import tpu as pltpu


def _round_up(x, m):
    return ((x + m - 1) // m) * m


# ----------------------------------------------------------------------------
# Pallas kernels
# ----------------------------------------------------------------------------
def _fused_seq_kernel(p1_ref, w1_ref, b1_ref, w2_ref, b2_ref, o_ref, y1_ref,
                      *, kh2, kw2, ho2, wo2):
    """conv1 -> ReLU -> conv2 -> ReLU for ONE image (grid is over batch).

    p1_ref : (Ho1*Wo1, K1P)        bf16 im2col of this image for conv1
    w1_ref : (K1P, C1P)            bf16 conv1 weights (zero padded)
    b1_ref : (1, C1P)              f32  conv1 bias (zero padded)
    w2_ref : (kh2*kw2, C1P, Cout2) bf16 conv2 per-tap weights (zero-padded Cin)
    b2_ref : (1, Cout2)            f32
    o_ref  : (Ho2*Wo2, Cout2)      f32 output rows of this image
    y1_ref : VMEM scratch (Ho1, Wo1, C1P) bf16 -- conv1+ReLU activations
    """
    # ---- layer 1: one im2col matmul; bias + ReLU epilogue in f32 ----------
    y1 = jnp.dot(p1_ref[...], w1_ref[...], preferred_element_type=jnp.float32)
    y1 = jnp.maximum(y1 + b1_ref[...], 0.0)
    y1_ref[...] = y1.astype(y1_ref.dtype).reshape(y1_ref.shape)

    # ---- layer 2: per-tap accumulation straight from y1 (no im2col scratch)
    # Total K work = kh2*kw2*C1P (600 here) instead of kh2*kw2*128 = 3200,
    # and ~3 MB of VMEM copy traffic for a patch matrix is avoided entirely.
    m2 = ho2 * wo2
    c1p = y1_ref.shape[-1]
    acc = jnp.zeros((m2, o_ref.shape[-1]), jnp.float32)
    # Static 25-iteration tap loop: windows are small (8x8xC1P), so live
    # ranges stay well under the vreg budget at this tile size.
    for kh in range(kh2):
        for kw in range(kw2):
            t = kh * kw2 + kw
            win = y1_ref[kh:kh + ho2, kw:kw + wo2, :]      # (ho2, wo2, C1P)
            a = win.reshape(m2, c1p)                        # bf16 operand
            acc = acc + jnp.dot(a, w2_ref[t],
                                preferred_element_type=jnp.float32)

    # bias + ReLU epilogue in f32; exact-Cout (masked 64-lane) store so the
    # wrapper needs no post-kernel channel slice (its reshape is metadata-only).
    o_ref[...] = jnp.maximum(acc + b2_ref[...], 0.0).astype(o_ref.dtype)


def _conv_kernel(p_ref, w_ref, b_ref, o_ref, *, apply_relu):
    """Fallback conv: one row-tile im2col matmul + bias (+ optional ReLU)."""
    acc = jnp.dot(p_ref[...], w_ref[...], preferred_element_type=jnp.float32)
    acc = acc + b_ref[...]
    if apply_relu:
        acc = jnp.maximum(acc, 0.0)
    o_ref[...] = acc.astype(o_ref.dtype)


def _relu_kernel(x_ref, o_ref):
    o_ref[...] = jnp.maximum(x_ref[...], jnp.zeros((), x_ref.dtype))


# ----------------------------------------------------------------------------
# Module wrappers (glue) -- mirror nn.Conv2d / nn.ReLU on NHWC arrays
# ----------------------------------------------------------------------------
class Conv2dPallas:
    """nn.Conv2d(in_ch, out_ch, k), stride=1, padding=0, on NHWC arrays.

    All weight flattening / padding / bf16 casting is hoisted here (done once).
    """

    def __init__(self, weight_oihw, bias):
        w = jnp.asarray(weight_oihw, jnp.float32)      # (Cout, Cin, KH, KW)
        b = jnp.asarray(bias, jnp.float32)
        self.cout, self.cin, self.kh, self.kw = map(int, w.shape)
        self.k_in = self.kh * self.kw * self.cin
        self.k_in_pad = _round_up(self.k_in, 8)
        self.cin_pad = _round_up(self.cin, 8)          # fused-consumer K pad
        self.cout_pad = _round_up(self.cout, 8)        # fused-producer C pad

        w_hwio = jnp.transpose(w, (2, 3, 1, 0))        # (KH, KW, Cin, Cout)
        w_flat = w_hwio.reshape(self.k_in, self.cout)
        kpad = (0, self.k_in_pad - self.k_in)

        # (a) standalone / first-layer weights: exact Cout columns (bf16).
        self.w_flat = jnp.pad(w_flat, (kpad, (0, 0))).astype(jnp.bfloat16)
        # (b) weights that produce an 8-aligned padded intermediate (fused
        #     producer). Padded Cout columns are zero.
        self.w_flat_mid = jnp.pad(
            w_flat, (kpad, (0, self.cout_pad - self.cout))).astype(jnp.bfloat16)
        # (c) per-tap weights consuming an 8-aligned padded intermediate
        #     (fused consumer): (KH*KW, cin_pad, Cout). Padded Cin rows are
        #     zero, so padded channels of the intermediate contribute nothing.
        self.w_taps = jnp.pad(
            w_hwio, ((0, 0), (0, 0), (0, self.cin_pad - self.cin), (0, 0))
        ).reshape(self.kh * self.kw, self.cin_pad, self.cout).astype(jnp.bfloat16)

        self.b_row = b.reshape(1, self.cout)                              # f32
        self.b_row_mid = jnp.pad(
            b, (0, self.cout_pad - self.cout)).reshape(1, self.cout_pad)  # f32

    def _im2col(self, x_nhwc):
        """Patch matrix (N*Ho*Wo, k_in_pad) bf16 for a valid, stride-1 conv."""
        # TODO(synk): for large inputs, build this inside the kernel from a
        # memory_space=pl.ANY HBM ref instead of materializing the kh*kw-
        # expanded patch matrix in XLA (negligible at this toy size).
        N, H, W, _ = x_nhwc.shape
        Ho, Wo = H - self.kh + 1, W - self.kw + 1
        cols = [x_nhwc[:, kh:kh + Ho, kw:kw + Wo, :]
                for kh in range(self.kh) for kw in range(self.kw)]
        p = jnp.stack(cols, axis=3).reshape(N * Ho * Wo, self.k_in)
        p = jnp.pad(p, ((0, 0), (0, self.k_in_pad - self.k_in)))
        return p.astype(jnp.bfloat16)

    def __call__(self, x_nhwc, apply_relu=False):
        # Generic / fallback path: row-tiled grid, ReLU fused into epilogue.
        N, H, W, _ = x_nhwc.shape
        Ho, Wo = H - self.kh + 1, W - self.kw + 1
        M = N * Ho * Wo
        p = self._im2col(x_nhwc)
        tm = min(256, _round_up(M, 16))
        m_pad = _round_up(M, tm)
        if m_pad != M:
            p = jnp.pad(p, ((0, m_pad - M), (0, 0)))
        out = pl.pallas_call(
            functools.partial(_conv_kernel, apply_relu=apply_relu),
            out_shape=jax.ShapeDtypeStruct((m_pad, self.cout), jnp.float32),
            grid_spec=pltpu.PrefetchScalarGridSpec(
                num_scalar_prefetch=0,
                grid=(m_pad // tm,),
                in_specs=[
                    pl.BlockSpec((tm, self.k_in_pad), lambda i: (i, 0)),
                    pl.BlockSpec((self.k_in_pad, self.cout), lambda i: (0, 0)),
                    pl.BlockSpec((1, self.cout), lambda i: (0, 0)),
                ],
                out_specs=pl.BlockSpec((tm, self.cout), lambda i: (i, 0))),
            compiler_params=pltpu.CompilerParams(
                dimension_semantics=("parallel",),
                vmem_limit_bytes=32 * 1024 * 1024),
        )(p, self.w_flat, self.b_row)
        if m_pad != M:
            out = out[:M]
        return out.reshape(N, Ho, Wo, self.cout)


class ReLUPallas:
    def __call__(self, x):
        return pl.pallas_call(
            _relu_kernel,
            out_shape=jax.ShapeDtypeStruct(x.shape, x.dtype),
        )(x)


def _fused_conv_relu_x2(conv1, conv2, x_nhwc):
    """Conv2d -> ReLU -> Conv2d -> ReLU as one pallas_call, grid over batch."""
    N, H, W, _ = x_nhwc.shape
    Ho1, Wo1 = H - conv1.kh + 1, W - conv1.kw + 1
    Ho2, Wo2 = Ho1 - conv2.kh + 1, Wo1 - conv2.kw + 1
    M1, M2 = Ho1 * Wo1, Ho2 * Wo2

    p1 = conv1._im2col(x_nhwc)   # (N*M1, K1P) bf16; tiny at this size

    kern = functools.partial(_fused_seq_kernel, kh2=conv2.kh, kw2=conv2.kw,
                             ho2=Ho2, wo2=Wo2)
    out = pl.pallas_call(
        kern,
        out_shape=jax.ShapeDtypeStruct((N * M2, conv2.cout), jnp.float32),
        grid_spec=pltpu.PrefetchScalarGridSpec(
            num_scalar_prefetch=0,
            grid=(N,),   # one image per grid step -> shards across TCs on v7x
            in_specs=[
                pl.BlockSpec((M1, conv1.k_in_pad), lambda n: (n, 0)),
                pl.BlockSpec((conv1.k_in_pad, conv1.cout_pad), lambda n: (0, 0)),
                pl.BlockSpec((1, conv1.cout_pad), lambda n: (0, 0)),
                pl.BlockSpec((conv2.kh * conv2.kw, conv2.cin_pad, conv2.cout),
                             lambda n: (0, 0, 0)),
                pl.BlockSpec((1, conv2.cout), lambda n: (0, 0)),
            ],
            out_specs=pl.BlockSpec((M2, conv2.cout), lambda n: (n, 0)),
            scratch_shapes=[
                pltpu.VMEM((Ho1, Wo1, conv1.cout_pad), jnp.bfloat16),  # y1
            ]),
        compiler_params=pltpu.CompilerParams(
            dimension_semantics=("parallel",),
            vmem_limit_bytes=32 * 1024 * 1024),
    )(p1, conv1.w_flat_mid, conv1.b_row_mid, conv2.w_taps, conv2.b_row)
    # (N*M2, Cout) -> (N, Ho2, Wo2, Cout) is a metadata-only reshape (no copy).
    return out.reshape(N, Ho2, Wo2, conv2.cout)


class SequentialPallas:
    """Faithful port of the Sequential container: forward applies modules in
    order.  The canonical Conv2d->ReLU->Conv2d->ReLU chain runs as one fused
    Pallas kernel; other chains use per-module kernels with Conv+ReLU
    peephole fusion."""

    def __init__(self, *args, **kwargs):
        self._modules = OrderedDict()
        if len(args) == 1 and isinstance(args[0], OrderedDict):
            for key, module in args[0].items():
                self._modules[key] = module
        else:
            for idx, module in enumerate(args):
                self._modules[str(idx)] = module
        for name, module in kwargs.items():
            if name in self._modules:
                raise ValueError('name exists.')
            self._modules[name] = module

    def __len__(self):
        return len(self._modules)

    def __getitem__(self, idx):
        if not -len(self) <= idx < len(self):
            raise IndexError('index {} is out of range'.format(idx))
        if idx < 0:
            idx += len(self)
        return list(self._modules.values())[idx]

    def add(self, module, name=None):
        if name is None:
            name = str(len(self._modules))
            if name in self._modules:
                raise KeyError('name exists')
        self._modules[name] = module

    @staticmethod
    def _fusible(mods):
        # NOTE: the fused path zero-pads the intermediate channel dim.  This
        # is only correct because (a) the bias padding is zero and (b) the
        # activation between the convs is ReLU with f(0) == 0, so padded
        # channels stay exactly zero and the zero-padded rows of conv2's
        # per-tap weights contribute nothing.  Do NOT extend this pattern to
        # activations with f(0) != 0 without revisiting the padding.
        return (len(mods) == 4
                and isinstance(mods[0], Conv2dPallas)
                and isinstance(mods[1], ReLUPallas)
                and isinstance(mods[2], Conv2dPallas)
                and isinstance(mods[3], ReLUPallas)
                and mods[0].cout == mods[2].cin)

    def forward(self, x):
        mods = list(self._modules.values())
        if self._fusible(mods):
            N, H, W, _ = x.shape
            Ho1, Wo1 = H - mods[0].kh + 1, W - mods[0].kw + 1
            Ho2, Wo2 = Ho1 - mods[2].kh + 1, Wo1 - mods[2].kw + 1
            if (Ho1 > 0 and Wo1 > 0 and Ho2 > 0 and Wo2 > 0
                    and (Ho1 * Wo1) % 16 == 0 and (Ho2 * Wo2) % 8 == 0):
                return _fused_conv_relu_x2(mods[0], mods[2], x)
        # Generic path: apply modules in order, fusing Conv2d+ReLU pairs.
        i = 0
        while i < len(mods):
            m = mods[i]
            if (isinstance(m, Conv2dPallas) and i + 1 < len(mods)
                    and isinstance(mods[i + 1], ReLUPallas)):
                x = m(x, apply_relu=True)
                i += 2
            else:
                x = m(x)
                i += 1
        return x

    __call__ = forward


# ----------------------------------------------------------------------------
# Main
# ----------------------------------------------------------------------------
if __name__ == "__main__":
    key = jax.random.PRNGKey(0)
    k_x, k_w1, k_b1, k_w2, k_b2 = jax.random.split(key, 5)

    # Input in PyTorch NCHW layout: batch=2, channels=1, 16x16 spatial.
    x_nchw = jax.random.normal(k_x, (2, 1, 16, 16), dtype=jnp.float32)

    # Parameters in PyTorch Conv2d layout (Cout, Cin, KH, KW).
    w1 = 0.1 * jax.random.normal(k_w1, (20, 1, 5, 5), dtype=jnp.float32)
    b1 = 0.1 * jax.random.normal(k_b1, (20,), dtype=jnp.float32)
    w2 = 0.1 * jax.random.normal(k_w2, (64, 20, 5, 5), dtype=jnp.float32)
    b2 = 0.1 * jax.random.normal(k_b2, (64,), dtype=jnp.float32)

    model = SequentialPallas(OrderedDict([
        ('conv1', Conv2dPallas(w1, b1)),
        ('relu1', ReLUPallas()),
        ('conv2', Conv2dPallas(w2, b2)),
        ('relu2', ReLUPallas()),
    ]))

    # Kernels work in NHWC; transpose at the boundary, transpose back at end.
    x_nhwc = jnp.transpose(x_nchw, (0, 2, 3, 1))
    fwd = jax.jit(model.forward)
    out_nhwc = jax.block_until_ready(fwd(x_nhwc))
    out_nchw = jnp.transpose(out_nhwc, (0, 3, 1, 2))
    assert out_nchw.shape == (2, 64, 8, 8), out_nchw.shape

    # --- references ---------------------------------------------------------
    dn = ('NHWC', 'HWIO', 'NHWC')

    def conv_f32(x, w, b):
        return jax.lax.conv_general_dilated(
            x, jnp.transpose(w, (2, 3, 1, 0)), (1, 1), 'VALID',
            dimension_numbers=dn) + b

    def ref_f32(x):                       # module semantics in f32
        y = jnp.maximum(conv_f32(x, w1, b1), 0.0)
        return jnp.maximum(conv_f32(y, w2, b2), 0.0)

    def ref_bf16(x):                      # mirrors the kernel's mixed precision
        bf = jnp.bfloat16
        y = jax.lax.conv_general_dilated(
            x.astype(bf), jnp.transpose(w1, (2, 3, 1, 0)).astype(bf),
            (1, 1), 'VALID', dimension_numbers=dn,
            preferred_element_type=jnp.float32) + b1
        y = jnp.maximum(y, 0.0).astype(bf)
        y = jax.lax.conv_general_dilated(
            y, jnp.transpose(w2, (2, 3, 1, 0)).astype(bf),
            (1, 1), 'VALID', dimension_numbers=dn,
            preferred_element_type=jnp.float32) + b2
        return jnp.maximum(y, 0.0)

    ref32 = jax.block_until_ready(ref_f32(x_nhwc))
    refbf = jax.block_until_ready(ref_bf16(x_nhwc))
    # Tight check vs a precision-matched (bf16 MXU operands, f32 accum) ref,
    # loose semantic check vs the pure-f32 reference.
    assert jnp.allclose(out_nhwc, refbf, atol=5e-3, rtol=5e-3), \
        "mismatch vs bf16-matched reference"
    assert jnp.allclose(out_nhwc, ref32, atol=5e-2, rtol=5e-2), \
        "mismatch vs f32 reference"

    # --- exercise the generic (non-fused) fallback path too -----------------
    sub = SequentialPallas(Conv2dPallas(w1, b1), ReLUPallas())
    sub_out = jax.block_until_ready(jax.jit(sub.forward)(x_nhwc))
    sub_ref = jnp.maximum(conv_f32(x_nhwc, w1, b1), 0.0)
    assert sub_out.shape == sub_ref.shape, (sub_out.shape, sub_ref.shape)
    assert jnp.allclose(sub_out, sub_ref, atol=5e-2, rtol=5e-2), \
        "fallback mismatch vs f32 reference"

    print("KERNEL_OK")
</pallas_src>

<mosaic_0001>
module attributes {stable_mosaic.version = 11 : i64} {
  func.func @_fused_seq_kernel(%arg0: i32, %arg1: memref<144x32xbf16, #tpu.memory_space<vmem>>, %arg2: memref<32x24xbf16, #tpu.memory_space<vmem>>, %arg3: memref<1x24xf32, #tpu.memory_space<vmem>>, %arg4: memref<25x24x64xbf16, #tpu.memory_space<vmem>>, %arg5: memref<1x64xf32, #tpu.memory_space<vmem>>, %arg6: memref<64x64xf32, #tpu.memory_space<vmem>>, %arg7: memref<12x12x24xbf16, #tpu.memory_space<vmem>>) attributes {dimension_semantics = [#tpu.dimension_semantics<parallel>], iteration_bounds = array<i64: 2>, scalar_prefetch = 0 : i64, scratch_operands = 1 : i64, tpu.core_type = #tpu.core_type<tc>, window_params = [{transform_indices = @transform_0, window_bounds = array<i64: 144, 32>}, {pipeline_mode = #tpu.pipeline_mode<synchronous>, transform_indices = @transform_1, window_bounds = array<i64: 32, 24>}, {pipeline_mode = #tpu.pipeline_mode<synchronous>, transform_indices = @transform_2, window_bounds = array<i64: 1, 24>}, {pipeline_mode = #tpu.pipeline_mode<synchronous>, transform_indices = @transform_3, window_bounds = array<i64: 25, 24, 64>}, {pipeline_mode = #tpu.pipeline_mode<synchronous>, transform_indices = @transform_4, window_bounds = array<i64: 1, 64>}, {transform_indices = @transform_5, window_bounds = array<i64: 64, 64>}]} {
    %c0 = arith.constant 0 : index
    %c0_0 = arith.constant 0 : index
    %0 = vector.load %arg1[%c0, %c0_0] : memref<144x32xbf16, #tpu.memory_space<vmem>>, vector<144x32xbf16>
    %c0_1 = arith.constant 0 : index
    %c0_2 = arith.constant 0 : index
    %1 = vector.load %arg2[%c0_1, %c0_2] : memref<32x24xbf16, #tpu.memory_space<vmem>>, vector<32x24xbf16>
    %cst = arith.constant dense<0.000000e+00> : vector<144x24xf32>
    %2 = tpu.matmul %0, %1, %cst {dimension_numbers = #tpu.dot_dimension_numbers<[1], [0], [0], [1], [0, 0, 1, 1], [], []>} : vector<144x32xbf16>, vector<32x24xbf16>, vector<144x24xf32> -> vector<144x24xf32>
    %c0_3 = arith.constant 0 : index
    %c0_4 = arith.constant 0 : index
    %3 = vector.load %arg3[%c0_3, %c0_4] : memref<1x24xf32, #tpu.memory_space<vmem>>, vector<1x24xf32>
    %4 = vector.broadcast %3 : vector<1x24xf32> to vector<144x24xf32>
    %5 = arith.addf %2, %4 : vector<144x24xf32>
    %cst_5 = arith.constant 0.000000e+00 : f32
    %6 = vector.broadcast %cst_5 : f32 to vector<144x24xf32>
    %7 = arith.maximumf %5, %6 : vector<144x24xf32>
    %8 = arith.truncf %7 : vector<144x24xf32> to vector<144x24xbf16>
    %9 = vector.shape_cast %8 : vector<144x24xbf16> to vector<12x12x24xbf16>
    %c0_6 = arith.constant 0 : index
    %c0_7 = arith.constant 0 : index
    %c0_8 = arith.constant 0 : index
    %10 = vector.load %arg7[%c0_6, %c0_7, %c0_8] : memref<12x12x24xbf16, #tpu.memory_space<vmem>>, vector<12x12x24xbf16>
    tpu.vector_store %arg7[%c0_6, %c0_7, %c0_8], %9 {strides = array<i32>} : memref<12x12x24xbf16, #tpu.memory_space<vmem>>, vector<12x12x24xbf16>,
    %cst_9 = arith.constant 0.000000e+00 : f32
    %11 = vector.broadcast %cst_9 : f32 to vector<64x64xf32>
    %c0_10 = arith.constant 0 : index
    %c0_11 = arith.constant 0 : index
    %c0_12 = arith.constant 0 : index
    %12 = vector.load %arg7[%c0_10, %c0_11, %c0_12] : memref<12x12x24xbf16, #tpu.memory_space<vmem>>, vector<8x8x24xbf16>
    %13 = vector.shape_cast %12 : vector<8x8x24xbf16> to vector<64x24xbf16>
    %c0_13 = arith.constant 0 : index
    %c0_14 = arith.constant 0 : index
    %c0_15 = arith.constant 0 : index
    %14 = vector.load %arg4[%c0_13, %c0_14, %c0_15] : memref<25x24x64xbf16, #tpu.memory_space<vmem>>, vector<1x24x64xbf16>
    %15 = vector.shape_cast %14 : vector<1x24x64xbf16> to vector<24x64xbf16>
    %cst_16 = arith.constant dense<0.000000e+00> : vector<64x64xf32>
    %16 = tpu.matmul %13, %15, %cst_16 {dimension_numbers = #tpu.dot_dimension_numbers<[1], [0], [0], [1], [0, 0, 1, 1], [], []>} : vector<64x24xbf16>, vector<24x64xbf16>, vector<64x64xf32> -> vector<64x64xf32>
    %17 = arith.addf %11, %16 : vector<64x64xf32>
    %c0_17 = arith.constant 0 : index
    %c1 = arith.constant 1 : index
    %c0_18 = arith.constant 0 : index
    %18 = vector.load %arg7[%c0_17, %c1, %c0_18] : memref<12x12x24xbf16, #tpu.memory_space<vmem>>, vector<8x8x24xbf16>
    %19 = vector.shape_cast %18 : vector<8x8x24xbf16> to vector<64x24xbf16>
    %c1_19 = arith.constant 1 : index
    %c0_20 = arith.constant 0 : index
    %c0_21 = arith.constant 0 : index
    %20 = vector.load %arg4[%c1_19, %c0_20, %c0_21] : memref<25x24x64xbf16, #tpu.memory_space<vmem>>, vector<1x24x64xbf16>
    %21 = vector.shape_cast %20 : vector<1x24x64xbf16> to vector<24x64xbf16>
    %cst_22 = arith.constant dense<0.000000e+00> : vector<64x64xf32>
    %22 = tpu.matmul %19, %21, %cst_22 {dimension_numbers = #tpu.dot_dimension_numbers<[1], [0], [0], [1], [0, 0, 1, 1], [], []>} : vector<64x24xbf16>, vector<24x64xbf16>, vector<64x64xf32> -> vector<64x64xf32>
    %23 = arith.addf %17, %22 : vector<64x64xf32>
    %c0_23 = arith.constant 0 : index
    %c2 = arith.constant 2 : index
    %c0_24 = arith.constant 0 : index
    %24 = vector.load %arg7[%c0_23, %c2, %c0_24] : memref<12x12x24xbf16, #tpu.memory_space<vmem>>, vector<8x8x24xbf16>
    %25 = vector.shape_cast %24 : vector<8x8x24xbf16> to vector<64x24xbf16>
    %c2_25 = arith.constant 2 : index
    %c0_26 = arith.constant 0 : index
    %c0_27 = arith.constant 0 : index
    %26 = vector.load %arg4[%c2_25, %c0_26, %c0_27] : memref<25x24x64xbf16, #tpu.memory_space<vmem>>, vector<1x24x64xbf16>
    %27 = vector.shape_cast %26 : vector<1x24x64xbf16> to vector<24x64xbf16>
    %cst_28 = arith.constant dense<0.000000e+00> : vector<64x64xf32>
    %28 = tpu.matmul %25, %27, %cst_28 {dimension_numbers = #tpu.dot_dimension_numbers<[1], [0], [0], [1], [0, 0, 1, 1], [], []>} : vector<64x24xbf16>, vector<24x64xbf16>, vector<64x64xf32> -> vector<64x64xf32>
    %29 = arith.addf %23, %28 : vector<64x64xf32>
    %c0_29 = arith.constant 0 : index
    %c3 = arith.constant 3 : index
    %c0_30 = arith.constant 0 : index
    %30 = vector.load %arg7[%c0_29, %c3, %c0_30] : memref<12x12x24xbf16, #tpu.memory_space<vmem>>, vector<8x8x24xbf16>
    %31 = vector.shape_cast %30 : vector<8x8x24xbf16> to vector<64x24xbf16>
    %c3_31 = arith.constant 3 : index
    %c0_32 = arith.constant 0 : index
    %c0_33 = arith.constant 0 : index
    %32 = vector.load %arg4[%c3_31, %c0_32, %c0_33] : memref<25x24x64xbf16, #tpu.memory_space<vmem>>, vector<1x24x64xbf16>
    %33 = vector.shape_cast %32 : vector<1x24x64xbf16> to vector<24x64xbf16>
    %cst_34 = arith.constant dense<0.000000e+00> : vector<64x64xf32>
    %34 = tpu.matmul %31, %33, %cst_34 {dimension_numbers = #tpu.dot_dimension_numbers<[1], [0], [0], [1], [0, 0, 1, 1], [], []>} : vector<64x24xbf16>, vector<24x64xbf16>, vector<64x64xf32> -> vector<64x64xf32>
    %35 = arith.addf %29, %34 : vector<64x64xf32>
    %c0_35 = arith.constant 0 : index
    %c4 = arith.constant 4 : index
    %c0_36 = arith.constant 0 : index
    %36 = vector.load %arg7[%c0_35, %c4, %c0_36] : memref<12x12x24xbf16, #tpu.memory_space<vmem>>, vector<8x8x24xbf16>
    %37 = vector.shape_cast %36 : vector<8x8x24xbf16> to vector<64x24xbf16>
    %c4_37 = arith.constant 4 : index
    %c0_38 = arith.constant 0 : index
    %c0_39 = arith.constant 0 : index
    %38 = vector.load %arg4[%c4_37, %c0_38, %c0_39] : memref<25x24x64xbf16, #tpu.memory_space<vmem>>, vector<1x24x64xbf16>
    %39 = vector.shape_cast %38 : vector<1x24x64xbf16> to vector<24x64xbf16>
    %cst_40 = arith.constant dense<0.000000e+00> : vector<64x64xf32>
    %40 = tpu.matmul %37, %39, %cst_40 {dimension_numbers = #tpu.dot_dimension_numbers<[1], [0], [0], [1], [0, 0, 1, 1], [], []>} : vector<64x24xbf16>, vector<24x64xbf16>, vector<64x64xf32> -> vector<64x64xf32>
    %41 = arith.addf %35, %40 : vector<64x64xf32>
    %c1_41 = arith.constant 1 : index
    %c0_42 = arith.constant 0 : index
    %c0_43 = arith.constant 0 : index
    %42 = vector.load %arg7[%c1_41, %c0_42, %c0_43] : memref<12x12x24xbf16, #tpu.memory_space<vmem>>, vector<8x8x24xbf16>
    %43 = vector.shape_cast %42 : vector<8x8x24xbf16> to vector<64x24xbf16>
    %c5 = arith.constant 5 : index
    %c0_44 = arith.constant 0 : index
    %c0_45 = arith.constant 0 : index
    %44 = vector.load %arg4[%c5, %c0_44, %c0_45] : memref<25x24x64xbf16, #tpu.memory_space<vmem>>, vector<1x24x64xbf16>
    %45 = vector.shape_cast %44 : vector<1x24x64xbf16> to vector<24x64xbf16>
    %cst_46 = arith.constant dense<0.000000e+00> : vector<64x64xf32>
    %46 = tpu.matmul %43, %45, %cst_46 {dimension_numbers = #tpu.dot_dimension_numbers<[1], [0], [0], [1], [0, 0, 1, 1], [], []>} : vector<64x24xbf16>, vector<24x64xbf16>, vector<64x64xf32> -> vector<64x64xf32>
    %47 = arith.addf %41, %46 : vector<64x64xf32>
    %c1_47 = arith.constant 1 : index
    %c1_48 = arith.constant 1 : index
    %c0_49 = arith.constant 0 : index
    %48 = vector.load %arg7[%c1_47, %c1_48, %c0_49] : memref<12x12x24xbf16, #tpu.memory_space<vmem>>, vector<8x8x24xbf16>
    %49 = vector.shape_cast %48 : vector<8x8x24xbf16> to vector<64x24xbf16>
    %c6 = arith.constant 6 : index
    %c0_50 = arith.constant 0 : index
    %c0_51 = arith.constant 0 : index
    %50 = vector.load %arg4[%c6, %c0_50, %c0_51] : memref<25x24x64xbf16, #tpu.memory_space<vmem>>, vector<1x24x64xbf16>
    %51 = vector.shape_cast %50 : vector<1x24x64xbf16> to vector<24x64xbf16>
    %cst_52 = arith.constant dense<0.000000e+00> : vector<64x64xf32>
    %52 = tpu.matmul %49, %51, %cst_52 {dimension_numbers = #tpu.dot_dimension_numbers<[1], [0], [0], [1], [0, 0, 1, 1], [], []>} : vector<64x24xbf16>, vector<24x64xbf16>, vector<64x64xf32> -> vector<64x64xf32>
    %53 = arith.addf %47, %52 : vector<64x64xf32>
    %c1_53 = arith.constant 1 : index
    %c2_54 = arith.constant 2 : index
    %c0_55 = arith.constant 0 : index
    %54 = vector.load %arg7[%c1_53, %c2_54, %c0_55] : memref<12x12x24xbf16, #tpu.memory_space<vmem>>, vector<8x8x24xbf16>
    %55 = vector.shape_cast %54 : vector<8x8x24xbf16> to vector<64x24xbf16>
    %c7 = arith.constant 7 : index
    %c0_56 = arith.constant 0 : index
    %c0_57 = arith.constant 0 : index
    %56 = vector.load %arg4[%c7, %c0_56, %c0_57] : memref<25x24x64xbf16, #tpu.memory_space<vmem>>, vector<1x24x64xbf16>
    %57 = vector.shape_cast %56 : vector<1x24x64xbf16> to vector<24x64xbf16>
    %cst_58 = arith.constant dense<0.000000e+00> : vector<64x64xf32>
    %58 = tpu.matmul %55, %57, %cst_58 {dimension_numbers = #tpu.dot_dimension_numbers<[1], [0], [0], [1], [0, 0, 1, 1], [], []>} : vector<64x24xbf16>, vector<24x64xbf16>, vector<64x64xf32> -> vector<64x64xf32>
    %59 = arith.addf %53, %58 : vector<64x64xf32>
    %c1_59 = arith.constant 1 : index
    %c3_60 = arith.constant 3 : index
    %c0_61 = arith.constant 0 : index
    %60 = vector.load %arg7[%c1_59, %c3_60, %c0_61] : memref<12x12x24xbf16, #tpu.memory_space<vmem>>, vector<8x8x24xbf16>
    %61 = vector.shape_cast %60 : vector<8x8x24xbf16> to vector<64x24xbf16>
    %c8 = arith.constant 8 : index
    %c0_62 = arith.constant 0 : index
    %c0_63 = arith.constant 0 : index
    %62 = vector.load %arg4[%c8, %c0_62, %c0_63] : memref<25x24x64xbf16, #tpu.memory_space<vmem>>, vector<1x24x64xbf16>
    %63 = vector.shape_cast %62 : vector<1x24x64xbf16> to vector<24x64xbf16>
    %cst_64 = arith.constant dense<0.000000e+00> : vector<64x64xf32>
    %64 = tpu.matmul %61, %63, %cst_64 {dimension_numbers = #tpu.dot_dimension_numbers<[1], [0], [0], [1], [0, 0, 1, 1], [], []>} : vector<64x24xbf16>, vector<24x64xbf16>, vector<64x64xf32> -> vector<64x64xf32>
    %65 = arith.addf %59, %64 : vector<64x64xf32>
    %c1_65 = arith.constant 1 : index
    %c4_66 = arith.constant 4 : index
    %c0_67 = arith.constant 0 : index
    %66 = vector.load %arg7[%c1_65, %c4_66, %c0_67] : memref<12x12x24xbf16, #tpu.memory_space<vmem>>, vector<8x8x24xbf16>
    %67 = vector.shape_cast %66 : vector<8x8x24xbf16> to vector<64x24xbf16>
    %c9 = arith.constant 9 : index
    %c0_68 = arith.constant 0 : index
    %c0_69 = arith.constant 0 : index
    %68 = vector.load %arg4[%c9, %c0_68, %c0_69] : memref<25x24x64xbf16, #tpu.memory_space<vmem>>, vector<1x24x64xbf16>
    %69 = vector.shape_cast %68 : vector<1x24x64xbf16> to vector<24x64xbf16>
    %cst_70 = arith.constant dense<0.000000e+00> : vector<64x64xf32>
    %70 = tpu.matmul %67, %69, %cst_70 {dimension_numbers = #tpu.dot_dimension_numbers<[1], [0], [0], [1], [0, 0, 1, 1], [], []>} : vector<64x24xbf16>, vector<24x64xbf16>, vector<64x64xf32> -> vector<64x64xf32>
    %71 = arith.addf %65, %70 : vector<64x64xf32>
    %c2_71 = arith.constant 2 : index
    %c0_72 = arith.constant 0 : index
    %c0_73 = arith.constant 0 : index
    %72 = vector.load %arg7[%c2_71, %c0_72, %c0_73] : memref<12x12x24xbf16, #tpu.memory_space<vmem>>, vector<8x8x24xbf16>
    %73 = vector.shape_cast %72 : vector<8x8x24xbf16> to vector<64x24xbf16>
    %c10 = arith.constant 10 : index
    %c0_74 = arith.constant 0 : index
    %c0_75 = arith.constant 0 : index
    %74 = vector.load %arg4[%c10, %c0_74, %c0_75] : memref<25x24x64xbf16, #tpu.memory_space<vmem>>, vector<1x24x64xbf16>
    %75 = vector.shape_cast %74 : vector<1x24x64xbf16> to vector<24x64xbf16>
    %cst_76 = arith.constant dense<0.000000e+00> : vector<64x64xf32>
    %76 = tpu.matmul %73, %75, %cst_76 {dimension_numbers = #tpu.dot_dimension_numbers<[1], [0], [0], [1], [0, 0, 1, 1], [], []>} : vector<64x24xbf16>, vector<24x64xbf16>, vector<64x64xf32> -> vector<64x64xf32>
    %77 = arith.addf %71, %76 : vector<64x64xf32>
    %c2_77 = arith.constant 2 : index
    %c1_78 = arith.constant 1 : index
    %c0_79 = arith.constant 0 : index
    %78 = vector.load %arg7[%c2_77, %c1_78, %c0_79] : memref<12x12x24xbf16, #tpu.memory_space<vmem>>, vector<8x8x24xbf16>
    %79 = vector.shape_cast %78 : vector<8x8x24xbf16> to vector<64x24xbf16>
    %c11 = arith.constant 11 : index
    %c0_80 = arith.constant 0 : index
    %c0_81 = arith.constant 0 : index
    %80 = vector.load %arg4[%c11, %c0_80, %c0_81] : memref<25x24x64xbf16, #tpu.memory_space<vmem>>, vector<1x24x64xbf16>
    %81 = vector.shape_cast %80 : vector<1x24x64xbf16> to vector<24x64xbf16>
    %cst_82 = arith.constant dense<0.000000e+00> : vector<64x64xf32>
    %82 = tpu.matmul %79, %81, %cst_82 {dimension_numbers = #tpu.dot_dimension_numbers<[1], [0], [0], [1], [0, 0, 1, 1], [], []>} : vector<64x24xbf16>, vector<24x64xbf16>, vector<64x64xf32> -> vector<64x64xf32>
    %83 = arith.addf %77, %82 : vector<64x64xf32>
    %c2_83 = arith.constant 2 : index
    %c2_84 = arith.constant 2 : index
    %c0_85 = arith.constant 0 : index
    %84 = vector.load %arg7[%c2_83, %c2_84, %c0_85] : memref<12x12x24xbf16, #tpu.memory_space<vmem>>, vector<8x8x24xbf16>
    %85 = vector.shape_cast %84 : vector<8x8x24xbf16> to vector<64x24xbf16>
    %c12 = arith.constant 12 : index
    %c0_86 = arith.constant 0 : index
    %c0_87 = arith.constant 0 : index
    %86 = vector.load %arg4[%c12, %c0_86, %c0_87] : memref<25x24x64xbf16, #tpu.memory_space<vmem>>, vector<1x24x64xbf16>
    %87 = vector.shape_cast %86 : vector<1x24x64xbf16> to vector<24x64xbf16>
    %cst_88 = arith.constant dense<0.000000e+00> : vector<64x64xf32>
    %88 = tpu.matmul %85, %87, %cst_88 {dimension_numbers = #tpu.dot_dimension_numbers<[1], [0], [0], [1], [0, 0, 1, 1], [], []>} : vector<64x24xbf16>, vector<24x64xbf16>, vector<64x64xf32> -> vector<64x64xf32>
    %89 = arith.addf %83, %88 : vector<64x64xf32>
    %c2_89 = arith.constant 2 : index
    %c3_90 = arith.constant 3 : index
    %c0_91 = arith.constant 0 : index
    %90 = vector.load %arg7[%c2_89, %c3_90, %c0_91] : memref<12x12x24xbf16, #tpu.memory_space<vmem>>, vector<8x8x24xbf16>
    %91 = vector.shape_cast %90 : vector<8x8x24xbf16> to vector<64x24xbf16>
    %c13 = arith.constant 13 : index
    %c0_92 = arith.constant 0 : index
    %c0_93 = arith.constant 0 : index
    %92 = vector.load %arg4[%c13, %c0_92, %c0_93] : memref<25x24x64xbf16, #tpu.memory_space<vmem>>, vector<1x24x64xbf16>
    %93 = vector.shape_cast %92 : vector<1x24x64xbf16> to vector<24x64xbf16>
    %cst_94 = arith.constant dense<0.000000e+00> : vector<64x64xf32>
    %94 = tpu.matmul %91, %93, %cst_94 {dimension_numbers = #tpu.dot_dimension_numbers<[1], [0], [0], [1], [0, 0, 1, 1], [], []>} : vector<64x24xbf16>, vector<24x64xbf16>, vector<64x64xf32> -> vector<64x64xf32>
    %95 = arith.addf %89, %94 : vector<64x64xf32>
    %c2_95 = arith.constant 2 : index
    %c4_96 = arith.constant 4 : index
    %c0_97 = arith.constant 0 : index
    %96 = vector.load %arg7[%c2_95, %c4_96, %c0_97] : memref<12x12x24xbf16, #tpu.memory_space<vmem>>, vector<8x8x24xbf16>
    %97 = vector.shape_cast %96 : vector<8x8x24xbf16> to vector<64x24xbf16>
    %c14 = arith.constant 14 : index
    %c0_98 = arith.constant 0 : index
    %c0_99 = arith.constant 0 : index
    %98 = vector.load %arg4[%c14, %c0_98, %c0_99] : memref<25x24x64xbf16, #tpu.memory_space<vmem>>, vector<1x24x64xbf16>
    %99 = vector.shape_cast %98 : vector<1x24x64xbf16> to vector<24x64xbf16>
    %cst_100 = arith.constant dense<0.000000e+00> : vector<64x64xf32>
    %100 = tpu.matmul %97, %99, %cst_100 {dimension_numbers = #tpu.dot_dimension_numbers<[1], [0], [0], [1], [0, 0, 1, 1], [], []>} : vector<64x24xbf16>, vector<24x64xbf16>, vector<64x64xf32> -> vector<64x64xf32>
    %101 = arith.addf %95, %100 : vector<64x64xf32>
    %c3_101 = arith.constant 3 : index
    %c0_102 = arith.constant 0 : index
    %c0_103 = arith.constant 0 : index
    %102 = vector.load %arg7[%c3_101, %c0_102, %c0_103] : memref<12x12x24xbf16, #tpu.memory_space<vmem>>, vector<8x8x24xbf16>
    %103 = vector.shape_cast %102 : vector<8x8x24xbf16> to vector<64x24xbf16>
    %c15 = arith.constant 15 : index
    %c0_104 = arith.constant 0 : index
    %c0_105 = arith.constant 0 : index
    %104 = vector.load %arg4[%c15, %c0_104, %c0_105] : memref<25x24x64xbf16, #tpu.memory_space<vmem>>, vector<1x24x64xbf16>
    %105 = vector.shape_cast %104 : vector<1x24x64xbf16> to vector<24x64xbf16>
    %cst_106 = arith.constant dense<0.000000e+00> : vector<64x64xf32>
    %106 = tpu.matmul %103, %105, %cst_106 {dimension_numbers = #tpu.dot_dimension_numbers<[1], [0], [0], [1], [0, 0, 1, 1], [], []>} : vector<64x24xbf16>, vector<24x64xbf16>, vector<64x64xf32> -> vector<64x64xf32>
    %107 = arith.addf %101, %106 : vector<64x64xf32>
    %c3_107 = arith.constant 3 : index
    %c1_108 = arith.constant 1 : index
    %c0_109 = arith.constant 0 : index
    %108 = vector.load %arg7[%c3_107, %c1_108, %c0_109] : memref<12x12x24xbf16, #tpu.memory_space<vmem>>, vector<8x8x24xbf16>
    %109 = vector.shape_cast %108 : vector<8x8x24xbf16> to vector<64x24xbf16>
    %c16 = arith.constant 16 : index
    %c0_110 = arith.constant 0 : index
    %c0_111 = arith.constant 0 : index
    %110 = vector.load %arg4[%c16, %c0_110, %c0_111] : memref<25x24x64xbf16, #tpu.memory_space<vmem>>, vector<1x24x64xbf16>
    %111 = vector.shape_cast %110 : vector<1x24x64xbf16> to vector<24x64xbf16>
    %cst_112 = arith.constant dense<0.000000e+00> : vector<64x64xf32>
    %112 = tpu.matmul %109, %111, %cst_112 {dimension_numbers = #tpu.dot_dimension_numbers<[1], [0], [0], [1], [0, 0, 1, 1], [], []>} : vector<64x24xbf16>, vector<24x64xbf16>, vector<64x64xf32> -> vector<64x64xf32>
    %113 = arith.addf %107, %112 : vector<64x64xf32>
    %c3_113 = arith.constant 3 : index
    %c2_114 = arith.constant 2 : index
    %c0_115 = arith.constant 0 : index
    %114 = vector.load %arg7[%c3_113, %c2_114, %c0_115] : memref<12x12x24xbf16, #tpu.memory_space<vmem>>, vector<8x8x24xbf16>
    %115 = vector.shape_cast %114 : vector<8x8x24xbf16> to vector<64x24xbf16>
    %c17 = arith.constant 17 : index
    %c0_116 = arith.constant 0 : index
    %c0_117 = arith.constant 0 : index
    %116 = vector.load %arg4[%c17, %c0_116, %c0_117] : memref<25x24x64xbf16, #tpu.memory_space<vmem>>, vector<1x24x64xbf16>
    %117 = vector.shape_cast %116 : vector<1x24x64xbf16> to vector<24x64xbf16>
    %cst_118 = arith.constant dense<0.000000e+00> : vector<64x64xf32>
    %118 = tpu.matmul %115, %117, %cst_118 {dimension_numbers = #tpu.dot_dimension_numbers<[1], [0], [0], [1], [0, 0, 1, 1], [], []>} : vector<64x24xbf16>, vector<24x64xbf16>, vector<64x64xf32> -> vector<64x64xf32>
    %119 = arith.addf %113, %118 : vector<64x64xf32>
    %c3_119 = arith.constant 3 : index
    %c3_120 = arith.constant 3 : index
    %c0_121 = arith.constant 0 : index
    %120 = vector.load %arg7[%c3_119, %c3_120, %c0_121] : memref<12x12x24xbf16, #tpu.memory_space<vmem>>, vector<8x8x24xbf16>
    %121 = vector.shape_cast %120 : vector<8x8x24xbf16> to vector<64x24xbf16>
    %c18 = arith.constant 18 : index
    %c0_122 = arith.constant 0 : index
    %c0_123 = arith.constant 0 : index
    %122 = vector.load %arg4[%c18, %c0_122, %c0_123] : memref<25x24x64xbf16, #tpu.memory_space<vmem>>, vector<1x24x64xbf16>
    %123 = vector.shape_cast %122 : vector<1x24x64xbf16> to vector<24x64xbf16>
    %cst_124 = arith.constant dense<0.000000e+00> : vector<64x64xf32>
    %124 = tpu.matmul %121, %123, %cst_124 {dimension_numbers = #tpu.dot_dimension_numbers<[1], [0], [0], [1], [0, 0, 1, 1], [], []>} : vector<64x24xbf16>, vector<24x64xbf16>, vector<64x64xf32> -> vector<64x64xf32>
    %125 = arith.addf %119, %124 : vector<64x64xf32>
    %c3_125 = arith.constant 3 : index
    %c4_126 = arith.constant 4 : index
    %c0_127 = arith.constant 0 : index
    %126 = vector.load %arg7[%c3_125, %c4_126, %c0_127] : memref<12x12x24xbf16, #tpu.memory_space<vmem>>, vector<8x8x24xbf16>
    %127 = vector.shape_cast %126 : vector<8x8x24xbf16> to vector<64x24xbf16>
    %c19 = arith.constant 19 : index
    %c0_128 = arith.constant 0 : index
    %c0_129 = arith.constant 0 : index
    %128 = vector.load %arg4[%c19, %c0_128, %c0_129] : memref<25x24x64xbf16, #tpu.memory_space<vmem>>, vector<1x24x64xbf16>
    %129 = vector.shape_cast %128 : vector<1x24x64xbf16> to vector<24x64xbf16>
    %cst_130 = arith.constant dense<0.000000e+00> : vector<64x64xf32>
    %130 = tpu.matmul %127, %129, %cst_130 {dimension_numbers = #tpu.dot_dimension_numbers<[1], [0], [0], [1], [0, 0, 1, 1], [], []>} : vector<64x24xbf16>, vector<24x64xbf16>, vector<64x64xf32> -> vector<64x64xf32>
    %131 = arith.addf %125, %130 : vector<64x64xf32>
    %c4_131 = arith.constant 4 : index
    %c0_132 = arith.constant 0 : index
    %c0_133 = arith.constant 0 : index
    %132 = vector.load %arg7[%c4_131, %c0_132, %c0_133] : memref<12x12x24xbf16, #tpu.memory_space<vmem>>, vector<8x8x24xbf16>
    %133 = vector.shape_cast %132 : vector<8x8x24xbf16> to vector<64x24xbf16>
    %c20 = arith.constant 20 : index
    %c0_134 = arith.constant 0 : index
    %c0_135 = arith.constant 0 : index
    %134 = vector.load %arg4[%c20, %c0_134, %c0_135] : memref<25x24x64xbf16, #tpu.memory_space<vmem>>, vector<1x24x64xbf16>
    %135 = vector.shape_cast %134 : vector<1x24x64xbf16> to vector<24x64xbf16>
    %cst_136 = arith.constant dense<0.000000e+00> : vector<64x64xf32>
    %136 = tpu.matmul %133, %135, %cst_136 {dimension_numbers = #tpu.dot_dimension_numbers<[1], [0], [0], [1], [0, 0, 1, 1], [], []>} : vector<64x24xbf16>, vector<24x64xbf16>, vector<64x64xf32> -> vector<64x64xf32>
    %137 = arith.addf %131, %136 : vector<64x64xf32>
    %c4_137 = arith.constant 4 : index
    %c1_138 = arith.constant 1 : index
    %c0_139 = arith.constant 0 : index
    %138 = vector.load %arg7[%c4_137, %c1_138, %c0_139] : memref<12x12x24xbf16, #tpu.memory_space<vmem>>, vector<8x8x24xbf16>
    %139 = vector.shape_cast %138 : vector<8x8x24xbf16> to vector<64x24xbf16>
    %c21 = arith.constant 21 : index
    %c0_140 = arith.constant 0 : index
    %c0_141 = arith.constant 0 : index
    %140 = vector.load %arg4[%c21, %c0_140, %c0_141] : memref<25x24x64xbf16, #tpu.memory_space<vmem>>, vector<1x24x64xbf16>
    %141 = vector.shape_cast %140 : vector<1x24x64xbf16> to vector<24x64xbf16>
    %cst_142 = arith.constant dense<0.000000e+00> : vector<64x64xf32>
    %142 = tpu.matmul %139, %141, %cst_142 {dimension_numbers = #tpu.dot_dimension_numbers<[1], [0], [0], [1], [0, 0, 1, 1], [], []>} : vector<64x24xbf16>, vector<24x64xbf16>, vector<64x64xf32> -> vector<64x64xf32>
    %143 = arith.addf %137, %142 : vector<64x64xf32>
    %c4_143 = arith.constant 4 : index
    %c2_144 = arith.constant 2 : index
    %c0_145 = arith.constant 0 : index
    %144 = vector.load %arg7[%c4_143, %c2_144, %c0_145] : memref<12x12x24xbf16, #tpu.memory_space<vmem>>, vector<8x8x24xbf16>
    %145 = vector.shape_cast %144 : vector<8x8x24xbf16> to vector<64x24xbf16>
    %c22 = arith.constant 22 : index
    %c0_146 = arith.constant 0 : index
    %c0_147 = arith.constant 0 : index
    %146 = vector.load %arg4[%c22, %c0_146, %c0_147] : memref<25x24x64xbf16, #tpu.memory_space<vmem>>, vector<1x24x64xbf16>
    %147 = vector.shape_cast %146 : vector<1x24x64xbf16> to vector<24x64xbf16>
    %cst_148 = arith.constant dense<0.000000e+00> : vector<64x64xf32>
    %148 = tpu.matmul %145, %147, %cst_148 {dimension_numbers = #tpu.dot_dimension_numbers<[1], [0], [0], [1], [0, 0, 1, 1], [], []>} : vector<64x24xbf16>, vector<24x64xbf16>, vector<64x64xf32> -> vector<64x64xf32>
    %149 = arith.addf %143, %148 : vector<64x64xf32>
    %c4_149 = arith.constant 4 : index
    %c3_150 = arith.constant 3 : index
    %c0_151 = arith.constant 0 : index
    %150 = vector.load %arg7[%c4_149, %c3_150, %c0_151] : memref<12x12x24xbf16, #tpu.memory_space<vmem>>, vector<8x8x24xbf16>
    %151 = vector.shape_cast %150 : vector<8x8x24xbf16> to vector<64x24xbf16>
    %c23 = arith.constant 23 : index
    %c0_152 = arith.constant 0 : index
    %c0_153 = arith.constant 0 : index
    %152 = vector.load %arg4[%c23, %c0_152, %c0_153] : memref<25x24x64xbf16, #tpu.memory_space<vmem>>, vector<1x24x64xbf16>
    %153 = vector.shape_cast %152 : vector<1x24x64xbf16> to vector<24x64xbf16>
    %cst_154 = arith.constant dense<0.000000e+00> : vector<64x64xf32>
    %154 = tpu.matmul %151, %153, %cst_154 {dimension_numbers = #tpu.dot_dimension_numbers<[1], [0], [0], [1], [0, 0, 1, 1], [], []>} : vector<64x24xbf16>, vector<24x64xbf16>, vector<64x64xf32> -> vector<64x64xf32>
    %155 = arith.addf %149, %154 : vector<64x64xf32>
    %c4_155 = arith.constant 4 : index
    %c4_156 = arith.constant 4 : index
    %c0_157 = arith.constant 0 : index
    %156 = vector.load %arg7[%c4_155, %c4_156, %c0_157] : memref<12x12x24xbf16, #tpu.memory_space<vmem>>, vector<8x8x24xbf16>
    %157 = vector.shape_cast %156 : vector<8x8x24xbf16> to vector<64x24xbf16>
    %c24 = arith.constant 24 : index
    %c0_158 = arith.constant 0 : index
    %c0_159 = arith.constant 0 : index
    %158 = vector.load %arg4[%c24, %c0_158, %c0_159] : memref<25x24x64xbf16, #tpu.memory_space<vmem>>, vector<1x24x64xbf16>
    %159 = vector.shape_cast %158 : vector<1x24x64xbf16> to vector<24x64xbf16>
    %cst_160 = arith.constant dense<0.000000e+00> : vector<64x64xf32>
    %160 = tpu.matmul %157, %159, %cst_160 {dimension_numbers = #tpu.dot_dimension_numbers<[1], [0], [0], [1], [0, 0, 1, 1], [], []>} : vector<64x24xbf16>, vector<24x64xbf16>, vector<64x64xf32> -> vector<64x64xf32>
    %161 = arith.addf %155, %160 : vector<64x64xf32>
    %c0_161 = arith.constant 0 : index
    %c0_162 = arith.constant 0 : index
    %162 = vector.load %arg5[%c0_161, %c0_162] : memref<1x64xf32, #tpu.memory_space<vmem>>, vector<1x64xf32>
    %163 = vector.broadcast %162 : vector<1x64xf32> to vector<64x64xf32>
    %164 = arith.addf %161, %163 : vector<64x64xf32>
    %cst_163 = arith.constant 0.000000e+00 : f32
    %165 = vector.broadcast %cst_163 : f32 to vector<64x64xf32>
    %166 = arith.maximumf %164, %165 : vector<64x64xf32>
    %c0_164 = arith.constant 0 : index
    %c0_165 = arith.constant 0 : index
    %167 = vector.load %arg6[%c0_164, %c0_165] : memref<64x64xf32, #tpu.memory_space<vmem>>, vector<64x64xf32>
    tpu.vector_store %arg6[%c0_164, %c0_165], %166 {strides = array<i32>} : memref<64x64xf32, #tpu.memory_space<vmem>>, vector<64x64xf32>,
    return
  }
  func.func @transform_0(%arg0: i32) -> (i32, i32) {
    %c0_i32 = arith.constant 0 : i32
    %c0_i32_0 = arith.constant 0 : i32
    return %arg0, %c0_i32 : i32, i32
  }
  func.func @transform_1(%arg0: i32) -> (i32, i32) {
    %c0_i32 = arith.constant 0 : i32
    %c0_i32_0 = arith.constant 0 : i32
    %c0_i32_1 = arith.constant 0 : i32
    return %c0_i32, %c0_i32_0 : i32, i32
  }
  func.func @transform_2(%arg0: i32) -> (i32, i32) {
    %c0_i32 = arith.constant 0 : i32
    %c0_i32_0 = arith.constant 0 : i32
    %c0_i32_1 = arith.constant 0 : i32
    return %c0_i32, %c0_i32_0 : i32, i32
  }
  func.func @transform_3(%arg0: i32) -> (i32, i32, i32) {
    %c0_i32 = arith.constant 0 : i32
    %c0_i32_0 = arith.constant 0 : i32
    %c0_i32_1 = arith.constant 0 : i32
    %c0_i32_2 = arith.constant 0 : i32
    return %c0_i32, %c0_i32_0, %c0_i32_1 : i32, i32, i32
  }
  func.func @transform_4(%arg0: i32) -> (i32, i32) {
    %c0_i32 = arith.constant 0 : i32
    %c0_i32_0 = arith.constant 0 : i32
    %c0_i32_1 = arith.constant 0 : i32
    return %c0_i32, %c0_i32_0 : i32, i32
  }
  func.func @transform_5(%arg0: i32) -> (i32, i32) {
    %c0_i32 = arith.constant 0 : i32
    %c0_i32_0 = arith.constant 0 : i32
    return %arg0, %c0_i32 : i32, i32
  }
}

</mosaic_0001>

<llo_original>
// kernel: forward.1
$region0: #{forward.1}
  #allocation0 [shape = 'u32[]', space=smem, size = 0x4, offset = 0x4, fixed_abs, tag = 'smem constant byte address 0x4 - core index']
  #allocation1 [shape = 'u32[144,128]{1,0:T(1,128)}', space=vmem, size = 0x12000, scoped, tag = 'internal scratch']
  #allocation2 [shape = 'bf16[12,12,24]{2,1,0:T(8,128)(2,1)}', space=vmem, size = 0xc000, scoped, tag = 'scratch operand']
  %s0 = inlined_call_operand.vmem [shape: bf16[288,32], index: 0, kind: input, shape index: {}]
  %s1 = inlined_call_operand.vmem [shape: bf16[32,24], index: 1, kind: input, shape index: {}]
  %s2 = inlined_call_operand.vmem [shape: f32[1,24], index: 2, kind: input, shape index: {}]
  %s3 = inlined_call_operand.vmem [shape: bf16[25,24,64], index: 3, kind: input, shape index: {}]
  %s4 = inlined_call_operand.vmem [shape: f32[1,64], index: 4, kind: input, shape index: {}]
  %s5 = inlined_call_operand.hbm [shape: f32[128,64], index: 5, kind: output, shape index: {}]
  %s6 = sld [smem:[#allocation0]]
  $region53: #{forward.1} parent=0
    _
  %s8 = ssub.s32 1, %s6
  %s9 = scalar_select 0, %s8, %s6
  $region1: #{forward.1} parent=0
    #allocation3 [shape = 'u8[65536]{0}', space=vmem, size = 0x10000, scoped, tag = 'output window, operand 0']
    #allocation4 [shape = 's32[2]{0}', space=sflag, size = 0x8, scoped, tag = 'scoped memory for forward.1']
    %10 = vsyncpa [#allocation4], 0
    %s11 = scalar_lea.sflag [#allocation4], 1
    %12 = vsyncpa %s11, 0
    loop: start=0, step=1, limit=4
    $region2: #{forward.1} parent=1 // loop_pre_header
      _
    $region3: #{forward.1} parent=1 // loop_header
      %s14 = sphi 0, %s18
      %p15 = scmp.ge.s32.totalorder %s14, 4
      %s24 = sphi 0, %s26
      %s27 = sphi 0, %s24
      %s28 = sphi 0, %s27
      %s44 = sphi 0, %s28
      %s48 = sphi 0, %s48
      %s50 = sphi 0, %s48
      %s51 = sphi 0, %s50
      %s65 = sphi 0, %s51
      %s69 = sphi 0, %s69
      %s71 = sphi 0, %s69
      %s72 = sphi 0, %s71
      %s86 = sphi 0, %s72
      %s90 = sphi 0, %s90
      %s92 = sphi 0, %s90
      %s93 = sphi 0, %s92
      %s107 = sphi 0, %s93
      %s111 = sphi 0, %s111
      %s113 = sphi 0, %s111
      %s114 = sphi 0, %s113
      %s128 = sphi 0, %s114
      %s134 = sphi 0, %s136
      %s137 = sphi 0, %s134
      %s138 = sphi 0, %s137
      %s154 = sphi 0, %s138
    $region4: #{forward.1} parent=1 // loop_header_branch
      %17 = sbr.rel (%p15) target = $region8
    $region5: #{forward.1} parent=1 // loop_body
      %s19 = ssub.s32 %s14, 1
      %s20 = ssub.s32 %s14, 2
      %s21 = sadd.s32 %s14, 1
      %s22 = ssub.s32 %s14, %s21
      %p23 = scmp.eq.s32.totalorder %s22, 0
      %s25 = sadd.s32 %s24, 1
      %s26 = scalar_select %p23, %s24, %s25
      %p29 = pneg %p23
      %p30 = scmp.eq.s32.totalorder %s14, 1
      %p31 = por %p29, %p30
      %p32 = scmp.ne.s32.totalorder %s24, %s27
      %p33 = scmp.eq.s32.totalorder %s14, 0
      %p34 = por %p32, %p33
      %p35 = scmp.ne.s32.totalorder %s24, %s27
      %p36 = scmp.eq.s32.totalorder %s19, 1
      %p37 = por %p35, %p36
      %p38 = scmp.ne.s32.totalorder %s27, %s28
      %p39 = scmp.eq.s32.totalorder %s19, 0
      %p40 = por %p38, %p39
      %p41 = scmp.ne.s32.totalorder %s27, %s28
      %p42 = scmp.eq.s32.totalorder %s20, 1
      %p43 = por %p41, %p42
      %p45 = scmp.ne.s32.totalorder %s28, %s44
      %p46 = scmp.eq.s32.totalorder %s20, 0
      %p47 = por %p45, %p46
      %s49 = sadd.s32 %s48, 1
      %p52 = scmp.eq.s32.totalorder %s14, 1
      %p53 = scmp.ne.s32.totalorder %s48, %s50
      %p54 = scmp.eq.s32.totalorder %s14, 0
      %p55 = por %p53, %p54
      %p56 = scmp.ne.s32.totalorder %s48, %s50
      %p57 = scmp.eq.s32.totalorder %s19, 1
      %p58 = por %p56, %p57
      %p59 = scmp.ne.s32.totalorder %s50, %s51
      %p60 = scmp.eq.s32.totalorder %s19, 0
      %p61 = por %p59, %p60
      %p62 = scmp.ne.s32.totalorder %s50, %s51
      %p63 = scmp.eq.s32.totalorder %s20, 1
      %p64 = por %p62, %p63
      %p66 = scmp.ne.s32.totalorder %s51, %s65
      %p67 = scmp.eq.s32.totalorder %s20, 0
      %p68 = por %p66, %p67
      %s70 = sadd.s32 %s69, 1
      %p73 = scmp.eq.s32.totalorder %s14, 1
      %p74 = scmp.ne.s32.totalorder %s69, %s71
      %p75 = scmp.eq.s32.totalorder %s14, 0
      %p76 = por %p74, %p75
      %p77 = scmp.ne.s32.totalorder %s69, %s71
      %p78 = scmp.eq.s32.totalorder %s19, 1
      %p79 = por %p77, %p78
      %p80 = scmp.ne.s32.totalorder %s71, %s72
      %p81 = scmp.eq.s32.totalorder %s19, 0
      %p82 = por %p80, %p81
      %p83 = scmp.ne.s32.totalorder %s71, %s72
      %p84 = scmp.eq.s32.totalorder %s20, 1
      %p85 = por %p83, %p84
      %p87 = scmp.ne.s32.totalorder %s72, %s86
      %p88 = scmp.eq.s32.totalorder %s20, 0
      %p89 = por %p87, %p88
      %s91 = sadd.s32 %s90, 1
      %p94 = scmp.eq.s32.totalorder %s14, 1
      %p95 = scmp.ne.s32.totalorder %s90, %s92
      %p96 = scmp.eq.s32.totalorder %s14, 0
      %p97 = por %p95, %p96
      %p98 = scmp.ne.s32.totalorder %s90, %s92
      %p99 = scmp.eq.s32.totalorder %s19, 1
      %p100 = por %p98, %p99
      %p101 = scmp.ne.s32.totalorder %s92, %s93
      %p102 = scmp.eq.s32.totalorder %s19, 0
      %p103 = por %p101, %p102
      %p104 = scmp.ne.s32.totalorder %s92, %s93
      %p105 = scmp.eq.s32.totalorder %s20, 1
      %p106 = por %p104, %p105
      %p108 = scmp.ne.s32.totalorder %s93, %s107
      %p109 = scmp.eq.s32.totalorder %s20, 0
      %p110 = por %p108, %p109
      %s112 = sadd.s32 %s111, 1
      %p115 = scmp.eq.s32.totalorder %s14, 1
      %p116 = scmp.ne.s32.totalorder %s111, %s113
      %p117 = scmp.eq.s32.totalorder %s14, 0
      %p118 = por %p116, %p117
      %p119 = scmp.ne.s32.totalorder %s111, %s113
      %p120 = scmp.eq.s32.totalorder %s19, 1
      %p121 = por %p119, %p120
      %p122 = scmp.ne.s32.totalorder %s113, %s114
      %p123 = scmp.eq.s32.totalorder %s19, 0
      %p124 = por %p122, %p123
      %p125 = scmp.ne.s32.totalorder %s113, %s114
      %p126 = scmp.eq.s32.totalorder %s20, 1
      %p127 = por %p125, %p126
      %p129 = scmp.ne.s32.totalorder %s114, %s128
      %p130 = scmp.eq.s32.totalorder %s20, 0
      %p131 = por %p129, %p130
      %s132 = ssub.s32 %s14, %s21
      %p133 = scmp.eq.s32.totalorder %s132, 0
      %s135 = sadd.s32 %s134, 1
      %s136 = scalar_select %p133, %s134, %s135
      %p139 = pneg %p133
      %p140 = scmp.eq.s32.totalorder %s14, 1
      %p141 = por %p139, %p140
      %p142 = scmp.ne.s32.totalorder %s134, %s137
      %p143 = scmp.eq.s32.totalorder %s14, 0
      %p144 = por %p142, %p143
      %p145 = scmp.ne.s32.totalorder %s134, %s137
      %p146 = scmp.eq.s32.totalorder %s19, 1
      %p147 = por %p145, %p146
      %p148 = scmp.ne.s32.totalorder %s137, %s138
      %p149 = scmp.eq.s32.totalorder %s19, 0
      %p150 = por %p148, %p149
      %p151 = scmp.ne.s32.totalorder %s137, %s138
      %p152 = scmp.eq.s32.totalorder %s20, 1
      %p153 = por %p151, %p152
      %p155 = scmp.ne.s32.totalorder %s138, %s154
      %p156 = scmp.eq.s32.totalorder %s20, 0
      %p157 = por %p155, %p156
      %p158 = scmp.le.s32.totalorder 1, %s14
      %p159 = scmp.lt.s32.totalorder %s14, 3
      %p160 = pnand %p158, %p159
      %p161 = pneg %p160
      // Predicated region
      $region9: #{forward.1} parent=5 // pred_check
        _
      $region10: #{forward.1} parent=5 // pred_check_branch
        %163 = sbr.rel (%p160) target = $region12
      $region11: #{forward.1} parent=5 // pred_region
        %s164 = ssub.s32 %s14, 1
        // Predicated region
        $region13: #{forward.1} parent=11 // pred_check
          %p165 = pneg %p61
        $region14: #{forward.1} parent=11 // pred_check_branch
          %167 = sbr.rel (%p165) target = $region16
        $region15: #{forward.1} parent=11 // pred_region
          _
        $region16: #{forward.1} parent=11 // pred_fallthru
          _
        // Predicated region
        $region17: #{forward.1} parent=11 // pred_check
          %p168 = pneg %p82
        $region18: #{forward.1} parent=11 // pred_check_branch
          %170 = sbr.rel (%p168) target = $region20
        $region19: #{forward.1} parent=11 // pred_region
          _
        $region20: #{forward.1} parent=11 // pred_fallthru
          _
        // Predicated region
        $region21: #{forward.1} parent=11 // pred_check
          %p171 = pneg %p103
        $region22: #{forward.1} parent=11 // pred_check_branch
          %173 = sbr.rel (%p171) target = $region24
        $region23: #{forward.1} parent=11 // pred_region
          _
        $region24: #{forward.1} parent=11 // pred_fallthru
          _
        // Predicated region
        $region25: #{forward.1} parent=11 // pred_check
          %p174 = pneg %p124
        $region26: #{forward.1} parent=11 // pred_check_branch
          %176 = sbr.rel (%p174) target = $region28
        $region27: #{forward.1} parent=11 // pred_region
          _
        $region28: #{forward.1} parent=11 // pred_fallthru
          _
      $region12: #{forward.1} parent=5 // pred_fallthru
        _
      %p177 = scmp.lt.s32.totalorder %s14, 2
      // Predicated region
      $region29: #{forward.1} parent=5 // pred_check
        %p178 = pneg %p177
      $region30: #{forward.1} parent=5 // pred_check_branch
        %180 = sbr.rel (%p178) target = $region32
      $region31: #{forward.1} parent=5 // pred_region
        // Predicated region
        $region33: #{forward.1} parent=31 // pred_check
          %p181 = pneg %p34
        $region34: #{forward.1} parent=31 // pred_check_branch
          %183 = sbr.rel (%p181) target = $region36
        $region35: #{forward.1} parent=31 // pred_region
          %s184 = smul.u32 18, %s14
          %p185 = scmp.lt.s32.totalorder %s184, 35
          %s186 = scalar_select %p185, %s184, 35
          %s187 = smul.addr %s186, 4
          %s188 = scalar_lea.vmem %s0, %s187
          %s189 = smul.u32 18, %s14
        $region36: #{forward.1} parent=31 // pred_fallthru
          _
      $region32: #{forward.1} parent=5 // pred_fallthru
        _
      %p190 = scmp.le.s32.totalorder 1, %s14
      %p191 = scmp.lt.s32.totalorder %s14, 3
      %p192 = pnand %p190, %p191
      %p193 = pneg %p192
      // Predicated region
      $region37: #{forward.1} parent=5 // pred_check
        _
      $region38: #{forward.1} parent=5 // pred_check_branch
        %195 = sbr.rel (%p192) target = $region40
      $region39: #{forward.1} parent=5 // pred_region
        %s196 = ssub.s32 %s14, 1
        %s197 = smul.u32 18, %s19
        %p198 = scmp.lt.s32.totalorder %s197, 35
        %s199 = scalar_select %p198, %s197, 35
        %s200 = smul.addr %s199, 4
        %s201 = scalar_lea.vmem %s0, %s200
        %p202 = pneg %p40
        %p203 = pneg %p37
        %p204 = pneg %p61
        %p205 = pneg %p58
        %p206 = pneg %p82
        %p207 = pneg %p79
        %p208 = pneg %p103
        %p209 = pneg %p100
        %p210 = pneg %p124
        %p211 = pneg %p121
        %p212 = pneg %p150
        %p213 = pneg %p147
        %s214 = sand.u32 %s137, 1
        %s215 = scalar_lea.sflag [#allocation4], %s214
        %s216 = sand.u32 %s137, 1
        %s217 = smul.addr %s216, 64
        %s218 = scalar_lea.vmem [#allocation3], %s217
        %s219 = smul.u32 18, %s19
        %p220 = scmp.lt.s32.totalorder %s219, 35
        %s221 = scalar_select %p220, %s219, 35
        %s222 = smul.addr %s221, 4
        %s223 = scalar_lea.vmem %s0, %s222
        %s224 = smul.u32 18, %s19
        %s225 = smul.u32 8, %s19
        %v227 = vld [vmem:[%s223] sm:$0xf]
        %v228 = vld [vmem:[%s223 + $0x4] sm:$0xf]
        %v229 = vld [vmem:[%s223 + $0x8] sm:$0xf]
        %v230 = vld [vmem:[%s223 + $0xc] sm:$0xf]
        %v231 = vld [vmem:[%s223 + $0x10] sm:$0xf]
        %v232 = vld [vmem:[%s223 + $0x14] sm:$0xf]
        %v233 = vld [vmem:[%s223 + $0x18] sm:$0xf]
        %v234 = vld [vmem:[%s223 + $0x1c] sm:$0xf]
        %v235 = vld [vmem:[%s223 + $0x20] sm:$0xf]
        %v236 = vld [vmem:[%s223 + $0x24] sm:$0xf]
        %v237 = vld [vmem:[%s223 + $0x28] sm:$0xf]
        %v238 = vld [vmem:[%s223 + $0x2c] sm:$0xf]
        %v239 = vld [vmem:[%s223 + $0x30] sm:$0xf]
        %v240 = vld [vmem:[%s223 + $0x34] sm:$0xf]
        %v241 = vld [vmem:[%s223 + $0x38] sm:$0xf]
        %v242 = vld [vmem:[%s223 + $0x3c] sm:$0xf]
        %v243 = vld [vmem:[%s223 + $0x40] sm:$0xf]
        %v244 = vld [vmem:[%s223 + $0x44] sm:$0xf]
        %v245 = vld [vmem:[%s1] sm:$0xf]
        %v246 = vld [vmem:[%s1 + $0x4] sm:$0xf]
        %v247 = vld [vmem:[%s1 + $0x8] sm:$0xf]
        %v248 = vld [vmem:[%s1 + $0xc] sm:$0xf]
        %v249 = vld [vmem:[%s2] sm:$0x1]
        %v251 = vlaneseq
        %v252 = vshrl.u32 %v251, 7
        %v253 = vsub.s32 0, %v252
        %v254 = vrot.slane %v249, %v253
        %v274 = vunpack.c.l.b16 %v227
        %v275 = vunpack.c.l.b16 %v228
        %v276 = vunpack.c.l.b16 %v229
        %v277 = vunpack.c.l.b16 %v230
        %v278 = vunpack.c.l.b16 %v231
        %v279 = vunpack.c.l.b16 %v232
        %v280 = vunpack.c.l.b16 %v233
        %v281 = vunpack.c.l.b16 %v234
        %v282 = vunpack.c.l.b16 %v235
        %v283 = vunpack.c.l.b16 %v236
        %v284 = vunpack.c.l.b16 %v237
        %v285 = vunpack.c.l.b16 %v238
        %v286 = vunpack.c.l.b16 %v239
        %v287 = vunpack.c.l.b16 %v240
        %v288 = vunpack.c.l.b16 %v241
        %v289 = vunpack.c.l.b16 %v242
        %v290 = vunpack.c.l.b16 %v243
        %v291 = vunpack.c.l.b16 %v244
        %v292 = vpack.c.b16 %v275, %v274
        %v293 = vpack.c.b16 %v277, %v276
        %v294 = vpack.c.b16 %v279, %v278
        %v295 = vpack.c.b16 %v281, %v280
        %v296 = vpack.c.b16 %v283, %v282
        %v297 = vpack.c.b16 %v285, %v284
        %v298 = vpack.c.b16 %v287, %v286
        %v299 = vpack.c.b16 %v289, %v288
        %v300 = vpack.c.b16 %v291, %v290
        %v305 = vunpack.c.l.b16 %v245
        %v306 = vunpack.c.l.b16 %v246
        %v307 = vunpack.c.l.b16 %v247
        %v308 = vunpack.c.l.b16 %v248
        %v309 = vpack.c.b16 %v306, %v305
        %v310 = vpack.c.b16 %v308, %v307
        %vm313 = vcmask 261120
        %v315 = vsel %vm313, %v292, 0
        %v318 = vsel %vm313, %v293, 0
        %v321 = vsel %vm313, %v294, 0
        %v324 = vsel %vm313, %v295, 0
        %v327 = vsel %vm313, %v296, 0
        %v330 = vsel %vm313, %v297, 0
        %v333 = vsel %vm313, %v298, 0
        %v336 = vsel %vm313, %v299, 0
        %v339 = vsel %vm313, %v300, 0
        %341 = vmatprep.subr.bf16.mxu0 0
        %342 = vmatpush1.bf16.msra.mxu0 %v309
        %343 = vmatprep.subr.bf16.mxu0 0
        %344 = vmatpush1.bf16.msra.mxu0 %v310
        %345 = vmatprep.subr.bf16.mxu0 0
        %346 = vmatpush1.bf16.msra.mxu0 0
        %347 = vmatprep.subr.bf16.mxu0 0
        %348 = vmatpush1.bf16.msra.mxu0 0
        %349 = vmatprep.subr.bf16.mxu0 0
        %350 = vmatpush1.bf16.msra.mxu0 0
        %351 = vmatprep.subr.bf16.mxu0 0
        %352 = vmatpush1.bf16.msra.mxu0 0
        %353 = vmatprep.subr.bf16.mxu0 0
        %354 = vmatpush1.bf16.msra.mxu0 0
        %355 = vmatprep.subr.bf16.mxu0 0
        %356 = vmatpush1.bf16.msra.mxu0 0
        %357 = vmatprep.subr.bf16.mxu0 0
        %358 = vmatpush1.bf16.msra.mxu0 0
        %359 = vmatprep.subr.bf16.mxu0 0
        %360 = vmatpush1.bf16.msra.mxu0 0
        %361 = vmatprep.subr.bf16.mxu0 0
        %362 = vmatpush1.bf16.msra.mxu0 0
        %363 = vmatprep.subr.bf16.mxu0 0
        %364 = vmatpush1.bf16.msra.mxu0 0
        %365 = vmatprep.subr.bf16.mxu0 0
        %366 = vmatpush1.bf16.msra.mxu0 0
        %367 = vmatprep.subr.bf16.mxu0 0
        %368 = vmatpush1.bf16.msra.mxu0 0
        %369 = vmatprep.subr.bf16.mxu0 0
        %370 = vmatpush1.bf16.msra.mxu0 0
        %371 = vmatprep.subr.bf16.mxu0 0
        %372 = vmatpush1.bf16.msra.mxu0 0
        %373 = vmatprep.mubr.bf16.mxu0 0
        %374 = vmatmul.mubr.bf16.gmra.mrb[0].mxu0 %v315
        %v375 = vpop.f32.mrb[0].mxu0
        %v376 = vadd.f32 %v254, %v375
        %v377 = vpop.f32.mrb[0].mxu0
        %v378 = vpop.f32.mrb[0].mxu0
        %v379 = vadd.f32 %v254, %v378
        %v380 = vpop.f32.mrb[0].mxu0
        %381 = vmatprep.mubr.bf16.mxu0 0
        %382 = vmatmul.mubr.bf16.gmra.mrb[0].mxu0 %v318
        %v383 = vpop.f32.mrb[0].mxu0
        %v384 = vadd.f32 %v254, %v383
        %v385 = vpop.f32.mrb[0].mxu0
        %v386 = vpop.f32.mrb[0].mxu0
        %v387 = vadd.f32 %v254, %v386
        %v388 = vpop.f32.mrb[0].mxu0
        %389 = vmatprep.mubr.bf16.mxu0 0
        %390 = vmatmul.mubr.bf16.gmra.mrb[0].mxu0 %v321
        %v391 = vpop.f32.mrb[0].mxu0
        %v392 = vadd.f32 %v254, %v391
        %v393 = vpop.f32.mrb[0].mxu0
        %v394 = vpop.f32.mrb[0].mxu0
        %v395 = vadd.f32 %v254, %v394
        %v396 = vpop.f32.mrb[0].mxu0
        %397 = vmatprep.mubr.bf16.mxu0 0
        %398 = vmatmul.mubr.bf16.gmra.mrb[0].mxu0 %v324
        %v399 = vpop.f32.mrb[0].mxu0
        %v400 = vadd.f32 %v254, %v399
        %v401 = vpop.f32.mrb[0].mxu0
        %v402 = vpop.f32.mrb[0].mxu0
        %v403 = vadd.f32 %v254, %v402
        %v404 = vpop.f32.mrb[0].mxu0
        %405 = vmatprep.mubr.bf16.mxu0 0
        %406 = vmatmul.mubr.bf16.gmra.mrb[0].mxu0 %v327
        %v407 = vpop.f32.mrb[0].mxu0
        %v408 = vadd.f32 %v254, %v407
        %v409 = vpop.f32.mrb[0].mxu0
        %v410 = vpop.f32.mrb[0].mxu0
        %v411 = vadd.f32 %v254, %v410
        %v412 = vpop.f32.mrb[0].mxu0
        %413 = vmatprep.mubr.bf16.mxu0 0
        %414 = vmatmul.mubr.bf16.gmra.mrb[0].mxu0 %v330
        %v415 = vpop.f32.mrb[0].mxu0
        %v416 = vadd.f32 %v254, %v415
        %v417 = vpop.f32.mrb[0].mxu0
        %v418 = vpop.f32.mrb[0].mxu0
        %v419 = vadd.f32 %v254, %v418
        %v420 = vpop.f32.mrb[0].mxu0
        %421 = vmatprep.mubr.bf16.mxu0 0
        %422 = vmatmul.mubr.bf16.gmra.mrb[0].mxu0 %v333
        %v423 = vpop.f32.mrb[0].mxu0
        %v424 = vadd.f32 %v254, %v423
        %v425 = vpop.f32.mrb[0].mxu0
        %v426 = vpop.f32.mrb[0].mxu0
        %v427 = vadd.f32 %v254, %v426
        %v428 = vpop.f32.mrb[0].mxu0
        %429 = vmatprep.mubr.bf16.mxu0 0
        %430 = vmatmul.mubr.bf16.gmra.mrb[0].mxu0 %v336
        %v431 = vpop.f32.mrb[0].mxu0
        %v432 = vadd.f32 %v254, %v431
        %v433 = vpop.f32.mrb[0].mxu0
        %v434 = vpop.f32.mrb[0].mxu0
        %v435 = vadd.f32 %v254, %v434
        %v436 = vpop.f32.mrb[0].mxu0
        %437 = vmatprep.mubr.bf16.mxu0 0
        %438 = vmatmul.mubr.bf16.gmra.mrb[0].mxu0 %v339
        %v439 = vpop.f32.mrb[0].mxu0
        %v440 = vadd.f32 %v254, %v439
        %v441 = vpop.f32.mrb[0].mxu0
        %v442 = vpop.f32.mrb[0].mxu0
        %v443 = vadd.f32 %v254, %v442
        %v444 = vpop.f32.mrb[0].mxu0
        %445 = vdwg.mxu0
        %v446 = vmax.f32 %v376, 0.0
        %v447 = vmax.f32 %v379, 0.0
        %v448 = vmax.f32 %v384, 0.0
        %v449 = vmax.f32 %v387, 0.0
        %v450 = vmax.f32 %v392, 0.0
        %v451 = vmax.f32 %v395, 0.0
        %v452 = vmax.f32 %v400, 0.0
        %v453 = vmax.f32 %v403, 0.0
        %v454 = vmax.f32 %v408, 0.0
        %v455 = vmax.f32 %v411, 0.0
        %v456 = vmax.f32 %v416, 0.0
        %v457 = vmax.f32 %v419, 0.0
        %v458 = vmax.f32 %v424, 0.0
        %v459 = vmax.f32 %v427, 0.0
        %v460 = vmax.f32 %v432, 0.0
        %v461 = vmax.f32 %v435, 0.0
        %v462 = vmax.f32 %v440, 0.0
        %v463 = vmax.f32 %v443, 0.0
        %v464 = vpack.c.bf16 %v447, %v446
        %v465 = vpack.c.bf16 %v449, %v448
        %v466 = vpack.c.bf16 %v451, %v450
        %v467 = vpack.c.bf16 %v453, %v452
        %v468 = vpack.c.bf16 %v455, %v454
        %v469 = vpack.c.bf16 %v457, %v456
        %v470 = vpack.c.bf16 %v459, %v458
        %v471 = vpack.c.bf16 %v461, %v460
        %v472 = vpack.c.bf16 %v463, %v462
        %v482 = vcombine.high %v464, %v464
        %v484 = vunpack.c.l.s4 1983009808
        %v485 = vunpack.c.0.s8 %v484
        %v486 = vlaneseq
        %v487 = vshrl.u32 %v486, 7
        %v488 = vsub.s32 %v485, %v487
        %v489 = vrot.slane %v464, %v488
        %v491 = vunpack.c.l.s4 1983009808
        %v492 = vunpack.c.0.s8 %v491
        %v493 = vlaneseq
        %v494 = vshrl.u32 %v493, 7
        %v495 = vsub.s32 %v492, %v494
        %v496 = vrot.slane %v482, %v495
        %v497 = vcombine.high %v489, %v489
        %v498 = vcombine.high %v496, %v496
        %v499 = vcombine.high %v465, %v465
        %v501 = vunpack.c.l.s4 1983009808
        %v502 = vunpack.c.0.s8 %v501
        %v503 = vlaneseq
        %v504 = vshrl.u32 %v503, 7
        %v505 = vsub.s32 %v502, %v504
        %v506 = vrot.slane %v465, %v505
        %v508 = vunpack.c.l.s4 1983009808
        %v509 = vunpack.c.0.s8 %v508
        %v510 = vlaneseq
        %v511 = vshrl.u32 %v510, 7
        %v512 = vsub.s32 %v509, %v511
        %v513 = vrot.slane %v499, %v512
        %v514 = vcombine.high %v506, %v506
        %v515 = vcombine.high %v513, %v513
        %v516 = vcombine.high %v466, %v466
        %v518 = vunpack.c.l.s4 1983009808
        %v519 = vunpack.c.0.s8 %v518
        %v520 = vlaneseq
        %v521 = vshrl.u32 %v520, 7
        %v522 = vsub.s32 %v519, %v521
        %v523 = vrot.slane %v466, %v522
        %v525 = vunpack.c.l.s4 1983009808
        %v526 = vunpack.c.0.s8 %v525
        %v527 = vlaneseq
        %v528 = vshrl.u32 %v527, 7
        %v529 = vsub.s32 %v526, %v528
        %v530 = vrot.slane %v516, %v529
        %v531 = vcombine.high %v523, %v523
        %v532 = vcombine.high %v530, %v530
        %v533 = vcombine.high %v467, %v467
        %v535 = vunpack.c.l.s4 1983009808
        %v536 = vunpack.c.0.s8 %v535
        %v537 = vlaneseq
        %v538 = vshrl.u32 %v537, 7
        %v539 = vsub.s32 %v536, %v538
        %v540 = vrot.slane %v467, %v539
        %v542 = vunpack.c.l.s4 1983009808
        %v543 = vunpack.c.0.s8 %v542
        %v544 = vlaneseq
        %v545 = vshrl.u32 %v544, 7
        %v546 = vsub.s32 %v543, %v545
        %v547 = vrot.slane %v533, %v546
        %v548 = vcombine.high %v540, %v540
        %v549 = vcombine.high %v547, %v547
        %v550 = vcombine.high %v468, %v468
        %v552 = vunpack.c.l.s4 1983009808
        %v553 = vunpack.c.0.s8 %v552
        %v554 = vlaneseq
        %v555 = vshrl.u32 %v554, 7
        %v556 = vsub.s32 %v553, %v555
        %v557 = vrot.slane %v468, %v556
        %v559 = vunpack.c.l.s4 1983009808
        %v560 = vunpack.c.0.s8 %v559
        %v561 = vlaneseq
        %v562 = vshrl.u32 %v561, 7
        %v563 = vsub.s32 %v560, %v562
        %v564 = vrot.slane %v550, %v563
        %v565 = vcombine.high %v557, %v557
        %v566 = vcombine.high %v564, %v564
        %v567 = vcombine.high %v469, %v469
        %v569 = vunpack.c.l.s4 1983009808
        %v570 = vunpack.c.0.s8 %v569
        %v571 = vlaneseq
        %v572 = vshrl.u32 %v571, 7
        %v573 = vsub.s32 %v570, %v572
        %v574 = vrot.slane %v469, %v573
        %v576 = vunpack.c.l.s4 1983009808
        %v577 = vunpack.c.0.s8 %v576
        %v578 = vlaneseq
        %v579 = vshrl.u32 %v578, 7
        %v580 = vsub.s32 %v577, %v579
        %v581 = vrot.slane %v567, %v580
        %v582 = vcombine.high %v574, %v574
        %v583 = vcombine.high %v581, %v581
        %v584 = vcombine.high %v470, %v470
        %v586 = vunpack.c.l.s4 1983009808
        %v587 = vunpack.c.0.s8 %v586
        %v588 = vlaneseq
        %v589 = vshrl.u32 %v588, 7
        %v590 = vsub.s32 %v587, %v589
        %v591 = vrot.slane %v470, %v590
        %v593 = vunpack.c.l.s4 1983009808
        %v594 = vunpack.c.0.s8 %v593
        %v595 = vlaneseq
        %v596 = vshrl.u32 %v595, 7
        %v597 = vsub.s32 %v594, %v596
        %v598 = vrot.slane %v584, %v597
        %v599 = vcombine.high %v591, %v591
        %v600 = vcombine.high %v598, %v598
        %v601 = vcombine.high %v471, %v471
        %v603 = vunpack.c.l.s4 1983009808
        %v604 = vunpack.c.0.s8 %v603
        %v605 = vlaneseq
        %v606 = vshrl.u32 %v605, 7
        %v607 = vsub.s32 %v604, %v606
        %v608 = vrot.slane %v471, %v607
        %v610 = vunpack.c.l.s4 1983009808
        %v611 = vunpack.c.0.s8 %v610
        %v612 = vlaneseq
        %v613 = vshrl.u32 %v612, 7
        %v614 = vsub.s32 %v611, %v613
        %v615 = vrot.slane %v601, %v614
        %v616 = vcombine.high %v608, %v608
        %v617 = vcombine.high %v615, %v615
        %v618 = vcombine.high %v472, %v472
        %v620 = vunpack.c.l.s4 1983009808
        %v621 = vunpack.c.0.s8 %v620
        %v622 = vlaneseq
        %v623 = vshrl.u32 %v622, 7
        %v624 = vsub.s32 %v621, %v623
        %v625 = vrot.slane %v472, %v624
        %v627 = vunpack.c.l.s4 1983009808
        %v628 = vunpack.c.0.s8 %v627
        %v629 = vlaneseq
        %v630 = vshrl.u32 %v629, 7
        %v631 = vsub.s32 %v628, %v630
        %v632 = vrot.slane %v618, %v631
        %v633 = vcombine.high %v625, %v625
        %v634 = vcombine.high %v632, %v632
        %v635 = vcombine.low %v489, %v497
        %v637 = vunpack.c.l.s4 1983009808
        %v638 = vunpack.c.0.s8 %v637
        %v639 = vlaneseq
        %v640 = vshrl.u32 %v639, 7
        %v641 = vsub.s32 %v638, %v640
        %v642 = vrot.slane %v635, %v641
        %v644 = vunpack.c.l.s4 1983009808
        %v645 = vunpack.c.0.s8 %v644
        %v646 = vlaneseq
        %v647 = vshrl.u32 %v646, 7
        %v648 = vsub.s32 %v645, %v647
        %v649 = vrot.slane %v496, %v648
        %v650 = vcombine.low %v498, %v506
        %v652 = vunpack.c.l.s4 1983009808
        %v653 = vunpack.c.0.s8 %v652
        %v654 = vlaneseq
        %v655 = vshrl.u32 %v654, 7
        %v656 = vsub.s32 %v653, %v655
        %v657 = vrot.slane %v650, %v656
        %v659 = vunpack.c.l.s4 1983009808
        %v660 = vunpack.c.0.s8 %v659
        %v661 = vlaneseq
        %v662 = vshrl.u32 %v661, 7
        %v663 = vsub.s32 %v660, %v662
        %v664 = vrot.slane %v514, %v663
        %v665 = vcombine.low %v513, %v515
        %v667 = vunpack.c.l.s4 1983009808
        %v668 = vunpack.c.0.s8 %v667
        %v669 = vlaneseq
        %v670 = vshrl.u32 %v669, 7
        %v671 = vsub.s32 %v668, %v670
        %v672 = vrot.slane %v665, %v671
        %v674 = vunpack.c.l.s4 1983009808
        %v675 = vunpack.c.0.s8 %v674
        %v676 = vlaneseq
        %v677 = vshrl.u32 %v676, 7
        %v678 = vsub.s32 %v675, %v677
        %v679 = vrot.slane %v523, %v678
        %v680 = vcombine.low %v531, %v530
        %v682 = vunpack.c.l.s4 1983009808
        %v683 = vunpack.c.0.s8 %v682
        %v684 = vlaneseq
        %v685 = vshrl.u32 %v684, 7
        %v686 = vsub.s32 %v683, %v685
        %v687 = vrot.slane %v680, %v686
        %v689 = vunpack.c.l.s4 1983009808
        %v690 = vunpack.c.0.s8 %v689
        %v691 = vlaneseq
        %v692 = vshrl.u32 %v691, 7
        %v693 = vsub.s32 %v690, %v692
        %v694 = vrot.slane %v532, %v693
        %v695 = vcombine.low %v540, %v548
        %v697 = vunpack.c.l.s4 1983009808
        %v698 = vunpack.c.0.s8 %v697
        %v699 = vlaneseq
        %v700 = vshrl.u32 %v699, 7
        %v701 = vsub.s32 %v698, %v700
        %v702 = vrot.slane %v695, %v701
        %v704 = vunpack.c.l.s4 1983009808
        %v705 = vunpack.c.0.s8 %v704
        %v706 = vlaneseq
        %v707 = vshrl.u32 %v706, 7
        %v708 = vsub.s32 %v705, %v707
        %v709 = vrot.slane %v547, %v708
        %v710 = vcombine.low %v549, %v557
        %v712 = vunpack.c.l.s4 1983009808
        %v713 = vunpack.c.0.s8 %v712
        %v714 = vlaneseq
        %v715 = vshrl.u32 %v714, 7
        %v716 = vsub.s32 %v713, %v715
        %v717 = vrot.slane %v710, %v716
        %v719 = vunpack.c.l.s4 1983009808
        %v720 = vunpack.c.0.s8 %v719
        %v721 = vlaneseq
        %v722 = vshrl.u32 %v721, 7
        %v723 = vsub.s32 %v720, %v722
        %v724 = vrot.slane %v565, %v723
        %v725 = vcombine.low %v564, %v566
        %v727 = vunpack.c.l.s4 1983009808
        %v728 = vunpack.c.0.s8 %v727
        %v729 = vlaneseq
        %v730 = vshrl.u32 %v729, 7
        %v731 = vsub.s32 %v728, %v730
        %v732 = vrot.slane %v725, %v731
        %v734 = vunpack.c.l.s4 1983009808
        %v735 = vunpack.c.0.s8 %v734
        %v736 = vlaneseq
        %v737 = vshrl.u32 %v736, 7
        %v738 = vsub.s32 %v735, %v737
        %v739 = vrot.slane %v574, %v738
        %v740 = vcombine.low %v582, %v581
        %v742 = vunpack.c.l.s4 1983009808
        %v743 = vunpack.c.0.s8 %v742
        %v744 = vlaneseq
        %v745 = vshrl.u32 %v744, 7
        %v746 = vsub.s32 %v743, %v745
        %v747 = vrot.slane %v740, %v746
        %v749 = vunpack.c.l.s4 1983009808
        %v750 = vunpack.c.0.s8 %v749
        %v751 = vlaneseq
        %v752 = vshrl.u32 %v751, 7
        %v753 = vsub.s32 %v750, %v752
        %v754 = vrot.slane %v583, %v753
        %v755 = vcombine.low %v591, %v599
        %v757 = vunpack.c.l.s4 1983009808
        %v758 = vunpack.c.0.s8 %v757
        %v759 = vlaneseq
        %v760 = vshrl.u32 %v759, 7
        %v761 = vsub.s32 %v758, %v760
        %v762 = vrot.slane %v755, %v761
        %v764 = vunpack.c.l.s4 1983009808
        %v765 = vunpack.c.0.s8 %v764
        %v766 = vlaneseq
        %v767 = vshrl.u32 %v766, 7
        %v768 = vsub.s32 %v765, %v767
        %v769 = vrot.slane %v598, %v768
        %v770 = vcombine.low %v600, %v608
        %v772 = vunpack.c.l.s4 1983009808
        %v773 = vunpack.c.0.s8 %v772
        %v774 = vlaneseq
        %v775 = vshrl.u32 %v774, 7
        %v776 = vsub.s32 %v773, %v775
        %v777 = vrot.slane %v770, %v776
        %v779 = vunpack.c.l.s4 1983009808
        %v780 = vunpack.c.0.s8 %v779
        %v781 = vlaneseq
        %v782 = vshrl.u32 %v781, 7
        %v783 = vsub.s32 %v780, %v782
        %v784 = vrot.slane %v616, %v783
        %v785 = vcombine.low %v615, %v617
        %v787 = vunpack.c.l.s4 1983009808
        %v788 = vunpack.c.0.s8 %v787
        %v789 = vlaneseq
        %v790 = vshrl.u32 %v789, 7
        %v791 = vsub.s32 %v788, %v790
        %v792 = vrot.slane %v785, %v791
        %v794 = vunpack.c.l.s4 1983009808
        %v795 = vunpack.c.0.s8 %v794
        %v796 = vlaneseq
        %v797 = vshrl.u32 %v796, 7
        %v798 = vsub.s32 %v795, %v797
        %v799 = vrot.slane %v625, %v798
        %v800 = vcombine.low %v633, %v632
        %v802 = vunpack.c.l.s4 1983009808
        %v803 = vunpack.c.0.s8 %v802
        %v804 = vlaneseq
        %v805 = vshrl.u32 %v804, 7
        %v806 = vsub.s32 %v803, %v805
        %v807 = vrot.slane %v800, %v806
        %v809 = vunpack.c.l.s4 1983009808
        %v810 = vunpack.c.0.s8 %v809
        %v811 = vlaneseq
        %v812 = vshrl.u32 %v811, 7
        %v813 = vsub.s32 %v810, %v812
        %v814 = vrot.slane %v634, %v813
        %vm839 = vcmask 191488
        %840 = vst.msk [vmem:[#allocation2] sm:$0xf] %vm839, %v642
        %vm841 = vcmask 189440
        %842 = vst.msk [vmem:[#allocation2 + $0x4] sm:$0x3] %vm841, %v649
        %843 = vst.msk [vmem:[#allocation2 + $0x8] sm:$0xf] %vm839, %v657
        %844 = vst.msk [vmem:[#allocation2 + $0xc] sm:$0x3] %vm841, %v664
        %845 = vst.msk [vmem:[#allocation2 + $0x10] sm:$0xf] %vm839, %v672
        %846 = vst.msk [vmem:[#allocation2 + $0x14] sm:$0x3] %vm841, %v679
        %847 = vst.msk [vmem:[#allocation2 + $0x18] sm:$0xf] %vm839, %v687
        %848 = vst.msk [vmem:[#allocation2 + $0x1c] sm:$0x3] %vm841, %v694
        %849 = vst.msk [vmem:[#allocation2 + $0x20] sm:$0xf] %vm839, %v702
        %850 = vst.msk [vmem:[#allocation2 + $0x24] sm:$0x3] %vm841, %v709
        %851 = vst.msk [vmem:[#allocation2 + $0x28] sm:$0xf] %vm839, %v717
        %852 = vst.msk [vmem:[#allocation2 + $0x2c] sm:$0x3] %vm841, %v724
        %853 = vst.msk [vmem:[#allocation2 + $0x30] sm:$0xf] %vm839, %v732
        %854 = vst.msk [vmem:[#allocation2 + $0x34] sm:$0x3] %vm841, %v739
        %855 = vst.msk [vmem:[#allocation2 + $0x38] sm:$0xf] %vm839, %v747
        %856 = vst.msk [vmem:[#allocation2 + $0x3c] sm:$0x3] %vm841, %v754
        %857 = vst.msk [vmem:[#allocation2 + $0x40] sm:$0xf] %vm839, %v762
        %858 = vst.msk [vmem:[#allocation2 + $0x44] sm:$0x3] %vm841, %v769
        %859 = vst.msk [vmem:[#allocation2 + $0x48] sm:$0xf] %vm839, %v777
        %860 = vst.msk [vmem:[#allocation2 + $0x4c] sm:$0x3] %vm841, %v784
        %861 = vst.msk [vmem:[#allocation2 + $0x50] sm:$0xf] %vm839, %v792
        %862 = vst.msk [vmem:[#allocation2 + $0x54] sm:$0x3] %vm841, %v799
        %863 = vst.msk [vmem:[#allocation2 + $0x58] sm:$0xf] %vm839, %v807
        %864 = vst.msk [vmem:[#allocation2 + $0x5c] sm:$0x3] %vm841, %v814
        %v865 = vld [vmem:[#allocation2] sm:$0xf]
        %v866 = vld [vmem:[#allocation2 + $0x8] sm:$0xf]
        %v867 = vld [vmem:[#allocation2 + $0x10] sm:$0xf]
        %v868 = vld [vmem:[#allocation2 + $0x18] sm:$0xf]
        %v869 = vld [vmem:[#allocation2 + $0x20] sm:$0xf]
        %v870 = vld [vmem:[#allocation2 + $0x28] sm:$0xf]
        %v871 = vld [vmem:[#allocation2 + $0x30] sm:$0xf]
        %v872 = vld [vmem:[#allocation2 + $0x38] sm:$0xf]
        %v873 = vld [vmem:[%s3] sm:$0xf]
        %v874 = vld [vmem:[%s3 + $0x4] sm:$0xf]
        %v875 = vld [vmem:[%s3 + $0x8] sm:$0xf]
        %v876 = vld [vmem:[#allocation2 + $0x4] sm:$0x1]
        %v877 = vld [vmem:[#allocation2 + $0xc] sm:$0x1]
        %v878 = vld [vmem:[#allocation2 + $0x14] sm:$0x1]
        %v879 = vld [vmem:[#allocation2 + $0x1c] sm:$0x1]
        %v880 = vld [vmem:[#allocation2 + $0x24] sm:$0x1]
        %v881 = vld [vmem:[#allocation2 + $0x2c] sm:$0x1]
        %v882 = vld [vmem:[#allocation2 + $0x34] sm:$0x1]
        %v883 = vld [vmem:[#allocation2 + $0x3c] sm:$0x1]
        %vm884 = vsmask.f32 3328
        %vm885 = vsmask.f32 7440
        %vm886 = vmor %vm884, %vm885
        %v888 = vshrl.u32 %v865, 16
        %v890 = vrot.slane %v888, 4
        %v891 = vshll.u32 %v865, 16
        %v893 = vrot.slane %v891, 5
        %v894 = vor.u32 %v890, %v893
        %v895 = vrot.slane %v894, 4
        %v897 = vshll.u32 %v876, 16
        %v899 = vrot.slane %v897, 5
        %v900 = vsel %vm886, %v895, %v899
        %v902 = vshrl.u32 %v866, 16
        %v904 = vrot.slane %v902, 4
        %v905 = vshll.u32 %v866, 16
        %v907 = vrot.slane %v905, 5
        %v908 = vor.u32 %v904, %v907
        %v909 = vrot.slane %v908, 4
        %v911 = vshll.u32 %v877, 16
        %v913 = vrot.slane %v911, 5
        %v914 = vsel %vm886, %v909, %v913
        %v916 = vshrl.u32 %v867, 16
        %v918 = vrot.slane %v916, 4
        %v919 = vshll.u32 %v867, 16
        %v921 = vrot.slane %v919, 5
        %v922 = vor.u32 %v918, %v921
        %v923 = vrot.slane %v922, 4
        %v925 = vshll.u32 %v878, 16
        %v927 = vrot.slane %v925, 5
        %v928 = vsel %vm886, %v923, %v927
        %v930 = vshrl.u32 %v868, 16
        %v932 = vrot.slane %v930, 4
        %v933 = vshll.u32 %v868, 16
        %v935 = vrot.slane %v933, 5
        %v936 = vor.u32 %v932, %v935
        %v937 = vrot.slane %v936, 4
        %v939 = vshll.u32 %v879, 16
        %v941 = vrot.slane %v939, 5
        %v942 = vsel %vm886, %v937, %v941
        %v944 = vshrl.u32 %v869, 16
        %v946 = vrot.slane %v944, 4
        %v947 = vshll.u32 %v869, 16
        %v949 = vrot.slane %v947, 5
        %v950 = vor.u32 %v946, %v949
        %v951 = vrot.slane %v950, 4
        %v953 = vshll.u32 %v880, 16
        %v955 = vrot.slane %v953, 5
        %v956 = vsel %vm886, %v951, %v955
        %v958 = vshrl.u32 %v870, 16
        %v960 = vrot.slane %v958, 4
        %v961 = vshll.u32 %v870, 16
        %v963 = vrot.slane %v961, 5
        %v964 = vor.u32 %v960, %v963
        %v965 = vrot.slane %v964, 4
        %v967 = vshll.u32 %v881, 16
        %v969 = vrot.slane %v967, 5
        %v970 = vsel %vm886, %v965, %v969
        %v972 = vshrl.u32 %v871, 16
        %v974 = vrot.slane %v972, 4
        %v975 = vshll.u32 %v871, 16
        %v977 = vrot.slane %v975, 5
        %v978 = vor.u32 %v974, %v977
        %v979 = vrot.slane %v978, 4
        %v981 = vshll.u32 %v882, 16
        %v983 = vrot.slane %v981, 5
        %v984 = vsel %vm886, %v979, %v983
        %v986 = vshrl.u32 %v872, 16
        %v988 = vrot.slane %v986, 4
        %v989 = vshll.u32 %v872, 16
        %v991 = vrot.slane %v989, 5
        %v992 = vor.u32 %v988, %v991
        %v993 = vrot.slane %v992, 4
        %v995 = vshll.u32 %v883, 16
        %v997 = vrot.slane %v995, 5
        %v998 = vsel %vm886, %v993, %v997
        %s999 = scalar_lea.vmem %s3, 12
        %v1000 = vld [vmem:[%s999] sm:$0xf]
        %v1001 = vld [vmem:[%s999 + $0x4] sm:$0xf]
        %v1002 = vld [vmem:[%s999 + $0x8] sm:$0xf]
        %v1003 = vunpack.c.l.b16 %v900
        %v1004 = vunpack.c.l.b16 %v914
        %v1005 = vunpack.c.l.b16 %v928
        %v1006 = vunpack.c.l.b16 %v942
        %v1007 = vunpack.c.l.b16 %v956
        %v1008 = vunpack.c.l.b16 %v970
        %v1009 = vunpack.c.l.b16 %v984
        %v1010 = vunpack.c.l.b16 %v998
        %v1011 = vpack.c.b16 %v1004, %v1003
        %v1012 = vpack.c.b16 %v1006, %v1005
        %v1013 = vpack.c.b16 %v1008, %v1007
        %v1014 = vpack.c.b16 %v1010, %v1009
        %v1018 = vunpack.c.l.b16 %v1000
        %v1019 = vunpack.c.l.b16 %v1001
        %v1020 = vunpack.c.l.b16 %v1002
        %v1021 = vpack.c.b16 %v1019, %v1018
        %v1022 = vpack.c.b16 %v1020, %v1020
        %vm1024 = vcmask 195584
        %v1026 = vsel %vm1024, %v1011, 0
        %v1029 = vsel %vm1024, %v1012, 0
        %v1032 = vsel %vm1024, %v1013, 0
        %v1035 = vsel %vm1024, %v1014, 0
        %vm1037 = vcmask 1043456
        %v1039 = vsel %vm1037, %v1022, 0
        %1041 = vmatprep.subr.bf16.mxu0 0
        %1042 = vmatpush1.bf16.msra.mxu0 %v1021
        %1043 = vmatprep.subr.bf16.mxu0 0
        %1044 = vmatpush1.bf16.msra.mxu0 %v1039
        %1045 = vmatprep.subr.bf16.mxu0 0
        %1046 = vmatpush1.bf16.msra.mxu0 0
        %1047 = vmatprep.subr.bf16.mxu0 0
        %1048 = vmatpush1.bf16.msra.mxu0 0
        %1049 = vmatprep.subr.bf16.mxu0 0
        %1050 = vmatpush1.bf16.msra.mxu0 0
        %1051 = vmatprep.subr.bf16.mxu0 0
        %1052 = vmatpush1.bf16.msra.mxu0 0
        %1053 = vmatprep.subr.bf16.mxu0 0
        %1054 = vmatpush1.bf16.msra.mxu0 0
        %1055 = vmatprep.subr.bf16.mxu0 0
        %1056 = vmatpush1.bf16.msra.mxu0 0
        %1057 = vmatprep.subr.bf16.mxu0 0
        %1058 = vmatpush1.bf16.msra.mxu0 0
        %1059 = vmatprep.subr.bf16.mxu0 0
        %1060 = vmatpush1.bf16.msra.mxu0 0
        %1061 = vmatprep.subr.bf16.mxu0 0
        %1062 = vmatpush1.bf16.msra.mxu0 0
        %1063 = vmatprep.subr.bf16.mxu0 0
        %1064 = vmatpush1.bf16.msra.mxu0 0
        %1065 = vmatprep.subr.bf16.mxu0 0
        %1066 = vmatpush1.bf16.msra.mxu0 0
        %1067 = vmatprep.subr.bf16.mxu0 0
        %1068 = vmatpush1.bf16.msra.mxu0 0
        %1069 = vmatprep.subr.bf16.mxu0 0
        %1070 = vmatpush1.bf16.msra.mxu0 0
        %1071 = vmatprep.subr.bf16.mxu0 0
        %1072 = vmatpush1.bf16.msra.mxu0 0
        %1073 = vmatprep.mubr.bf16.mxu0 0
        %1074 = vmatmul.mubr.bf16.gmra.mrb[0].mxu0 %v1026
        %v1075 = vpop.f32.mrb[0].mxu0
        %v1076 = vadd.f32 0.0, %v1075
        %v1077 = vpop.f32.mrb[0].mxu0
        %v1078 = vpop.f32.mrb[0].mxu0
        %v1079 = vadd.f32 0.0, %v1078
        %v1080 = vpop.f32.mrb[0].mxu0
        %1081 = vmatprep.mubr.bf16.mxu0 0
        %1082 = vmatmul.mubr.bf16.gmra.mrb[0].mxu0 %v1029
        %v1083 = vpop.f32.mrb[0].mxu0
        %v1084 = vadd.f32 0.0, %v1083
        %v1085 = vpop.f32.mrb[0].mxu0
        %v1086 = vpop.f32.mrb[0].mxu0
        %v1087 = vadd.f32 0.0, %v1086
        %v1088 = vpop.f32.mrb[0].mxu0
        %1089 = vmatprep.mubr.bf16.mxu0 0
        %1090 = vmatmul.mubr.bf16.gmra.mrb[0].mxu0 %v1032
        %v1091 = vpop.f32.mrb[0].mxu0
        %v1092 = vadd.f32 0.0, %v1091
        %v1093 = vpop.f32.mrb[0].mxu0
        %v1094 = vpop.f32.mrb[0].mxu0
        %v1095 = vadd.f32 0.0, %v1094
        %v1096 = vpop.f32.mrb[0].mxu0
        %1097 = vmatprep.mubr.bf16.mxu0 0
        %1098 = vmatmul.mubr.bf16.gmra.mrb[0].mxu0 %v1035
        %v1099 = vpop.f32.mrb[0].mxu0
        %v1100 = vadd.f32 0.0, %v1099
        %v1101 = vpop.f32.mrb[0].mxu0
        %v1102 = vpop.f32.mrb[0].mxu0
        %v1103 = vadd.f32 0.0, %v1102
        %v1104 = vpop.f32.mrb[0].mxu0
        %1105 = vdwg.mxu0
        %v1114 = vunpack.c.l.b16 %v865
        %v1115 = vunpack.c.l.b16 %v866
        %v1116 = vunpack.c.l.b16 %v867
        %v1117 = vunpack.c.l.b16 %v868
        %v1118 = vunpack.c.l.b16 %v869
        %v1119 = vunpack.c.l.b16 %v870
        %v1120 = vunpack.c.l.b16 %v871
        %v1121 = vunpack.c.l.b16 %v872
        %v1122 = vpack.c.b16 %v1115, %v1114
        %v1123 = vpack.c.b16 %v1117, %v1116
        %v1124 = vpack.c.b16 %v1119, %v1118
        %v1125 = vpack.c.b16 %v1121, %v1120
        %v1129 = vunpack.c.l.b16 %v873
        %v1130 = vunpack.c.l.b16 %v874
        %v1131 = vunpack.c.l.b16 %v875
        %v1132 = vpack.c.b16 %v1130, %v1129
        %v1133 = vpack.c.b16 %v1131, %v1131
        %v1136 = vsel %vm1024, %v1122, 0
        %v1139 = vsel %vm1024, %v1123, 0
        %v1142 = vsel %vm1024, %v1124, 0
        %v1145 = vsel %vm1024, %v1125, 0
        %v1148 = vsel %vm1037, %v1133, 0
        %1150 = vmatprep.subr.bf16.mxu0 0
        %1151 = vmatpush1.bf16.msra.mxu0 %v1132
        %1152 = vmatprep.subr.bf16.mxu0 0
        %1153 = vmatpush1.bf16.msra.mxu0 %v1148
        %1154 = vmatprep.subr.bf16.mxu0 0
        %1155 = vmatpush1.bf16.msra.mxu0 0
        %1156 = vmatprep.subr.bf16.mxu0 0
        %1157 = vmatpush1.bf16.msra.mxu0 0
        %1158 = vmatprep.subr.bf16.mxu0 0
        %1159 = vmatpush1.bf16.msra.mxu0 0
        %1160 = vmatprep.subr.bf16.mxu0 0
        %1161 = vmatpush1.bf16.msra.mxu0 0
        %1162 = vmatprep.subr.bf16.mxu0 0
        %1163 = vmatpush1.bf16.msra.mxu0 0
        %1164 = vmatprep.subr.bf16.mxu0 0
        %1165 = vmatpush1.bf16.msra.mxu0 0
        %1166 = vmatprep.subr.bf16.mxu0 0
        %1167 = vmatpush1.bf16.msra.mxu0 0
        %1168 = vmatprep.subr.bf16.mxu0 0
        %1169 = vmatpush1.bf16.msra.mxu0 0
        %1170 = vmatprep.subr.bf16.mxu0 0
        %1171 = vmatpush1.bf16.msra.mxu0 0
        %1172 = vmatprep.subr.bf16.mxu0 0
        %1173 = vmatpush1.bf16.msra.mxu0 0
        %1174 = vmatprep.subr.bf16.mxu0 0
        %1175 = vmatpush1.bf16.msra.mxu0 0
        %1176 = vmatprep.subr.bf16.mxu0 0
        %1177 = vmatpush1.bf16.msra.mxu0 0
        %1178 = vmatprep.subr.bf16.mxu0 0
        %1179 = vmatpush1.bf16.msra.mxu0 0
        %1180 = vmatprep.subr.bf16.mxu0 0
        %1181 = vmatpush1.bf16.msra.mxu0 0
        %1182 = vmatprep.mubr.bf16.mxu0 0
        %1183 = vmatmul.mubr.bf16.gmra.mrb[0].mxu0 %v1136
        %v1184 = vpop.f32.mrb[0].mxu0
        %v1185 = vadd.f32 %v1076, %v1184
        %v1186 = vpop.f32.mrb[0].mxu0
        %v1187 = vpop.f32.mrb[0].mxu0
        %v1188 = vadd.f32 %v1079, %v1187
        %v1189 = vpop.f32.mrb[0].mxu0
        %1190 = vmatprep.mubr.bf16.mxu0 0
        %1191 = vmatmul.mubr.bf16.gmra.mrb[0].mxu0 %v1139
        %v1192 = vpop.f32.mrb[0].mxu0
        %v1193 = vadd.f32 %v1084, %v1192
        %v1194 = vpop.f32.mrb[0].mxu0
        %v1195 = vpop.f32.mrb[0].mxu0
        %v1196 = vadd.f32 %v1087, %v1195
        %v1197 = vpop.f32.mrb[0].mxu0
        %1198 = vmatprep.mubr.bf16.mxu0 0
        %1199 = vmatmul.mubr.bf16.gmra.mrb[0].mxu0 %v1142
        %v1200 = vpop.f32.mrb[0].mxu0
        %v1201 = vadd.f32 %v1092, %v1200
        %v1202 = vpop.f32.mrb[0].mxu0
        %v1203 = vpop.f32.mrb[0].mxu0
        %v1204 = vadd.f32 %v1095, %v1203
        %v1205 = vpop.f32.mrb[0].mxu0
        %1206 = vmatprep.mubr.bf16.mxu0 0
        %1207 = vmatmul.mubr.bf16.gmra.mrb[0].mxu0 %v1145
        %v1208 = vpop.f32.mrb[0].mxu0
        %v1209 = vadd.f32 %v1100, %v1208
        %v1210 = vpop.f32.mrb[0].mxu0
        %v1211 = vpop.f32.mrb[0].mxu0
        %v1212 = vadd.f32 %v1103, %v1211
        %v1213 = vpop.f32.mrb[0].mxu0
        %1214 = vdwg.mxu0
        %v1215 = vld [vmem:[#allocation2] sm:$0xe]
        %v1216 = vld [vmem:[#allocation2 + $0x8] sm:$0xe]
        %v1217 = vld [vmem:[#allocation2 + $0x10] sm:$0xe]
        %v1218 = vld [vmem:[#allocation2 + $0x18] sm:$0xe]
        %v1219 = vld [vmem:[#allocation2 + $0x20] sm:$0xe]
        %v1220 = vld [vmem:[#allocation2 + $0x28] sm:$0xe]
        %v1221 = vld [vmem:[#allocation2 + $0x30] sm:$0xe]
        %v1222 = vld [vmem:[#allocation2 + $0x38] sm:$0xe]
        %vm1239 = vcmask 1042432
        %vm1240 = vcmask 1046532
        %vm1241 = vmor %vm1239, %vm1240
        %v1242 = vrot.slane %v1215, 5
        %v1243 = vrot.slane %v1242, 4
        %v1244 = vrot.slane %v876, 5
        %v1245 = vsel %vm1241, %v1243, %v1244
        %v1246 = vrot.slane %v1216, 5
        %v1247 = vrot.slane %v1246, 4
        %v1248 = vrot.slane %v877, 5
        %v1249 = vsel %vm1241, %v1247, %v1248
        %v1250 = vrot.slane %v1217, 5
        %v1251 = vrot.slane %v1250, 4
        %v1252 = vrot.slane %v878, 5
        %v1253 = vsel %vm1241, %v1251, %v1252
        %v1254 = vrot.slane %v1218, 5
        %v1255 = vrot.slane %v1254, 4
        %v1256 = vrot.slane %v879, 5
        %v1257 = vsel %vm1241, %v1255, %v1256
        %v1258 = vrot.slane %v1219, 5
        %v1259 = vrot.slane %v1258, 4
        %v1260 = vrot.slane %v880, 5
        %v1261 = vsel %vm1241, %v1259, %v1260
        %v1262 = vrot.slane %v1220, 5
        %v1263 = vrot.slane %v1262, 4
        %v1264 = vrot.slane %v881, 5
        %v1265 = vsel %vm1241, %v1263, %v1264
        %v1266 = vrot.slane %v1221, 5
        %v1267 = vrot.slane %v1266, 4
        %v1268 = vrot.slane %v882, 5
        %v1269 = vsel %vm1241, %v1267, %v1268
        %v1270 = vrot.slane %v1222, 5
        %v1271 = vrot.slane %v1270, 4
        %v1272 = vrot.slane %v883, 5
        %v1273 = vsel %vm1241, %v1271, %v1272
        %s1274 = scalar_lea.vmem %s3, 24
        %v1275 = vld [vmem:[%s1274] sm:$0xf]
        %v1276 = vld [vmem:[%s1274 + $0x4] sm:$0xf]
        %v1277 = vld [vmem:[%s1274 + $0x8] sm:$0xf]
        %v1278 = vunpack.c.l.b16 %v1245
        %v1279 = vunpack.c.l.b16 %v1249
        %v1280 = vunpack.c.l.b16 %v1253
        %v1281 = vunpack.c.l.b16 %v1257
        %v1282 = vunpack.c.l.b16 %v1261
        %v1283 = vunpack.c.l.b16 %v1265
        %v1284 = vunpack.c.l.b16 %v1269
        %v1285 = vunpack.c.l.b16 %v1273
        %v1286 = vpack.c.b16 %v1279, %v1278
        %v1287 = vpack.c.b16 %v1281, %v1280
        %v1288 = vpack.c.b16 %v1283, %v1282
        %v1289 = vpack.c.b16 %v1285, %v1284
        %v1293 = vunpack.c.l.b16 %v1275
        %v1294 = vunpack.c.l.b16 %v1276
        %v1295 = vunpack.c.l.b16 %v1277
        %v1296 = vpack.c.b16 %v1294, %v1293
        %v1297 = vpack.c.b16 %v1295, %v1295
        %v1300 = vsel %vm1024, %v1286, 0
        %v1303 = vsel %vm1024, %v1287, 0
        %v1306 = vsel %vm1024, %v1288, 0
        %v1309 = vsel %vm1024, %v1289, 0
        %v1312 = vsel %vm1037, %v1297, 0
        %1314 = vmatprep.subr.bf16.mxu0 0
        %1315 = vmatpush1.bf16.msra.mxu0 %v1296
        %1316 = vmatprep.subr.bf16.mxu0 0
        %1317 = vmatpush1.bf16.msra.mxu0 %v1312
        %1318 = vmatprep.subr.bf16.mxu0 0
        %1319 = vmatpush1.bf16.msra.mxu0 0
        %1320 = vmatprep.subr.bf16.mxu0 0
        %1321 = vmatpush1.bf16.msra.mxu0 0
        %1322 = vmatprep.subr.bf16.mxu0 0
        %1323 = vmatpush1.bf16.msra.mxu0 0
        %1324 = vmatprep.subr.bf16.mxu0 0
        %1325 = vmatpush1.bf16.msra.mxu0 0
        %1326 = vmatprep.subr.bf16.mxu0 0
        %1327 = vmatpush1.bf16.msra.mxu0 0
        %1328 = vmatprep.subr.bf16.mxu0 0
        %1329 = vmatpush1.bf16.msra.mxu0 0
        %1330 = vmatprep.subr.bf16.mxu0 0
        %1331 = vmatpush1.bf16.msra.mxu0 0
        %1332 = vmatprep.subr.bf16.mxu0 0
        %1333 = vmatpush1.bf16.msra.mxu0 0
        %1334 = vmatprep.subr.bf16.mxu0 0
        %1335 = vmatpush1.bf16.msra.mxu0 0
        %1336 = vmatprep.subr.bf16.mxu0 0
        %1337 = vmatpush1.bf16.msra.mxu0 0
        %1338 = vmatprep.subr.bf16.mxu0 0
        %1339 = vmatpush1.bf16.msra.mxu0 0
        %1340 = vmatprep.subr.bf16.mxu0 0
        %1341 = vmatpush1.bf16.msra.mxu0 0
        %1342 = vmatprep.subr.bf16.mxu0 0
        %1343 = vmatpush1.bf16.msra.mxu0 0
        %1344 = vmatprep.subr.bf16.mxu0 0
        %1345 = vmatpush1.bf16.msra.mxu0 0
        %1346 = vmatprep.mubr.bf16.mxu0 0
        %1347 = vmatmul.mubr.bf16.gmra.mrb[0].mxu0 %v1300
        %v1348 = vpop.f32.mrb[0].mxu0
        %v1349 = vadd.f32 0.0, %v1348
        %v1350 = vpop.f32.mrb[0].mxu0
        %v1351 = vpop.f32.mrb[0].mxu0
        %v1352 = vadd.f32 0.0, %v1351
        %v1353 = vpop.f32.mrb[0].mxu0
        %1354 = vmatprep.mubr.bf16.mxu0 0
        %1355 = vmatmul.mubr.bf16.gmra.mrb[0].mxu0 %v1303
        %v1356 = vpop.f32.mrb[0].mxu0
        %v1357 = vadd.f32 0.0, %v1356
        %v1358 = vpop.f32.mrb[0].mxu0
        %v1359 = vpop.f32.mrb[0].mxu0
        %v1360 = vadd.f32 0.0, %v1359
        %v1361 = vpop.f32.mrb[0].mxu0
        %1362 = vmatprep.mubr.bf16.mxu0 0
        %1363 = vmatmul.mubr.bf16.gmra.mrb[0].mxu0 %v1306
        %v1364 = vpop.f32.mrb[0].mxu0
        %v1365 = vadd.f32 0.0, %v1364
        %v1366 = vpop.f32.mrb[0].mxu0
        %v1367 = vpop.f32.mrb[0].mxu0
        %v1368 = vadd.f32 0.0, %v1367
        %v1369 = vpop.f32.mrb[0].mxu0
        %1370 = vmatprep.mubr.bf16.mxu0 0
        %1371 = vmatmul.mubr.bf16.gmra.mrb[0].mxu0 %v1309
        %v1372 = vpop.f32.mrb[0].mxu0
        %v1373 = vadd.f32 0.0, %v1372
        %v1374 = vpop.f32.mrb[0].mxu0
        %v1375 = vpop.f32.mrb[0].mxu0
        %v1376 = vadd.f32 0.0, %v1375
        %v1377 = vpop.f32.mrb[0].mxu0
        %1378 = vdwg.mxu0
        %v1379 = vadd.f32 %v1185, %v1349
        %v1380 = vadd.f32 %v1188, %v1352
        %v1381 = vadd.f32 %v1193, %v1357
        %v1382 = vadd.f32 %v1196, %v1360
        %v1383 = vadd.f32 %v1201, %v1365
        %v1384 = vadd.f32 %v1204, %v1368
        %v1385 = vadd.f32 %v1209, %v1373
        %v1386 = vadd.f32 %v1212, %v1376
        %v1387 = vld [vmem:[#allocation2 + $0x4] sm:$0x3]
        %v1388 = vld [vmem:[#allocation2 + $0xc] sm:$0x3]
        %v1389 = vld [vmem:[#allocation2 + $0x14] sm:$0x3]
        %v1390 = vld [vmem:[#allocation2 + $0x1c] sm:$0x3]
        %v1391 = vld [vmem:[#allocation2 + $0x24] sm:$0x3]
        %v1392 = vld [vmem:[#allocation2 + $0x2c] sm:$0x3]
        %v1393 = vld [vmem:[#allocation2 + $0x34] sm:$0x3]
        %v1394 = vld [vmem:[#allocation2 + $0x3c] sm:$0x3]
        %vm1395 = vsmask.f32 2304
        %vm1396 = vsmask.f32 6416
        %vm1397 = vmor %vm1395, %vm1396
        %v1399 = vshrl.u32 %v1215, 16
        %v1401 = vrot.slane %v1399, 5
        %v1402 = vshll.u32 %v1215, 16
        %v1404 = vrot.slane %v1402, 6
        %v1405 = vor.u32 %v1401, %v1404
        %v1406 = vrot.slane %v1405, 4
        %v1408 = vshrl.u32 %v1387, 16
        %v1410 = vrot.slane %v1408, 5
        %v1411 = vshll.u32 %v1387, 16
        %v1413 = vrot.slane %v1411, 6
        %v1414 = vor.u32 %v1410, %v1413
        %v1415 = vsel %vm1397, %v1406, %v1414
        %v1417 = vshrl.u32 %v1216, 16
        %v1419 = vrot.slane %v1417, 5
        %v1420 = vshll.u32 %v1216, 16
        %v1422 = vrot.slane %v1420, 6
        %v1423 = vor.u32 %v1419, %v1422
        %v1424 = vrot.slane %v1423, 4
        %v1426 = vshrl.u32 %v1388, 16
        %v1428 = vrot.slane %v1426, 5
        %v1429 = vshll.u32 %v1388, 16
        %v1431 = vrot.slane %v1429, 6
        %v1432 = vor.u32 %v1428, %v1431
        %v1433 = vsel %vm1397, %v1424, %v1432
        %v1435 = vshrl.u32 %v1217, 16
        %v1437 = vrot.slane %v1435, 5
        %v1438 = vshll.u32 %v1217, 16
        %v1440 = vrot.slane %v1438, 6
        %v1441 = vor.u32 %v1437, %v1440
        %v1442 = vrot.slane %v1441, 4
        %v1444 = vshrl.u32 %v1389, 16
        %v1446 = vrot.slane %v1444, 5
        %v1447 = vshll.u32 %v1389, 16
        %v1449 = vrot.slane %v1447, 6
        %v1450 = vor.u32 %v1446, %v1449
        %v1451 = vsel %vm1397, %v1442, %v1450
        %v1453 = vshrl.u32 %v1218, 16
        %v1455 = vrot.slane %v1453, 5
        %v1456 = vshll.u32 %v1218, 16
        %v1458 = vrot.slane %v1456, 6
        %v1459 = vor.u32 %v1455, %v1458
        %v1460 = vrot.slane %v1459, 4
        %v1462 = vshrl.u32 %v1390, 16
        %v1464 = vrot.slane %v1462, 5
        %v1465 = vshll.u32 %v1390, 16
        %v1467 = vrot.slane %v1465, 6
        %v1468 = vor.u32 %v1464, %v1467
        %v1469 = vsel %vm1397, %v1460, %v1468
        %v1471 = vshrl.u32 %v1219, 16
        %v1473 = vrot.slane %v1471, 5
        %v1474 = vshll.u32 %v1219, 16
        %v1476 = vrot.slane %v1474, 6
        %v1477 = vor.u32 %v1473, %v1476
        %v1478 = vrot.slane %v1477, 4
        %v1480 = vshrl.u32 %v1391, 16
        %v1482 = vrot.slane %v1480, 5
        %v1483 = vshll.u32 %v1391, 16
        %v1485 = vrot.slane %v1483, 6
        %v1486 = vor.u32 %v1482, %v1485
        %v1487 = vsel %vm1397, %v1478, %v1486
        %v1489 = vshrl.u32 %v1220, 16
        %v1491 = vrot.slane %v1489, 5
        %v1492 = vshll.u32 %v1220, 16
        %v1494 = vrot.slane %v1492, 6
        %v1495 = vor.u32 %v1491, %v1494
        %v1496 = vrot.slane %v1495, 4
        %v1498 = vshrl.u32 %v1392, 16
        %v1500 = vrot.slane %v1498, 5
        %v1501 = vshll.u32 %v1392, 16
        %v1503 = vrot.slane %v1501, 6
        %v1504 = vor.u32 %v1500, %v1503
        %v1505 = vsel %vm1397, %v1496, %v1504
        %v1507 = vshrl.u32 %v1221, 16
        %v1509 = vrot.slane %v1507, 5
        %v1510 = vshll.u32 %v1221, 16
        %v1512 = vrot.slane %v1510, 6
        %v1513 = vor.u32 %v1509, %v1512
        %v1514 = vrot.slane %v1513, 4
        %v1516 = vshrl.u32 %v1393, 16
        %v1518 = vrot.slane %v1516, 5
        %v1519 = vshll.u32 %v1393, 16
        %v1521 = vrot.slane %v1519, 6
        %v1522 = vor.u32 %v1518, %v1521
        %v1523 = vsel %vm1397, %v1514, %v1522
        %v1525 = vshrl.u32 %v1222, 16
        %v1527 = vrot.slane %v1525, 5
        %v1528 = vshll.u32 %v1222, 16
        %v1530 = vrot.slane %v1528, 6
        %v1531 = vor.u32 %v1527, %v1530
        %v1532 = vrot.slane %v1531, 4
        %v1534 = vshrl.u32 %v1394, 16
        %v1536 = vrot.slane %v1534, 5
        %v1537 = vshll.u32 %v1394, 16
        %v1539 = vrot.slane %v1537, 6
        %v1540 = vor.u32 %v1536, %v1539
        %v1541 = vsel %vm1397, %v1532, %v1540
        %s1542 = scalar_lea.vmem %s3, 36
        %v1543 = vld [vmem:[%s1542] sm:$0xf]
        %v1544 = vld [vmem:[%s1542 + $0x4] sm:$0xf]
        %v1545 = vld [vmem:[%s1542 + $0x8] sm:$0xf]
        %v1546 = vunpack.c.l.b16 %v1415
        %v1547 = vunpack.c.l.b16 %v1433
        %v1548 = vunpack.c.l.b16 %v1451
        %v1549 = vunpack.c.l.b16 %v1469
        %v1550 = vunpack.c.l.b16 %v1487
        %v1551 = vunpack.c.l.b16 %v1505
        %v1552 = vunpack.c.l.b16 %v1523
        %v1553 = vunpack.c.l.b16 %v1541
        %v1554 = vpack.c.b16 %v1547, %v1546
        %v1555 = vpack.c.b16 %v1549, %v1548
        %v1556 = vpack.c.b16 %v1551, %v1550
        %v1557 = vpack.c.b16 %v1553, %v1552
        %v1561 = vunpack.c.l.b16 %v1543
        %v1562 = vunpack.c.l.b16 %v1544
        %v1563 = vunpack.c.l.b16 %v1545
        %v1564 = vpack.c.b16 %v1562, %v1561
        %v1565 = vpack.c.b16 %v1563, %v1563
        %v1568 = vsel %vm1024, %v1554, 0
        %v1571 = vsel %vm1024, %v1555, 0
        %v1574 = vsel %vm1024, %v1556, 0
        %v1577 = vsel %vm1024, %v1557, 0
        %v1580 = vsel %vm1037, %v1565, 0
        %1582 = vmatprep.subr.bf16.mxu0 0
        %1583 = vmatpush1.bf16.msra.mxu0 %v1564
        %1584 = vmatprep.subr.bf16.mxu0 0
        %1585 = vmatpush1.bf16.msra.mxu0 %v1580
        %1586 = vmatprep.subr.bf16.mxu0 0
        %1587 = vmatpush1.bf16.msra.mxu0 0
        %1588 = vmatprep.subr.bf16.mxu0 0
        %1589 = vmatpush1.bf16.msra.mxu0 0
        %1590 = vmatprep.subr.bf16.mxu0 0
        %1591 = vmatpush1.bf16.msra.mxu0 0
        %1592 = vmatprep.subr.bf16.mxu0 0
        %1593 = vmatpush1.bf16.msra.mxu0 0
        %1594 = vmatprep.subr.bf16.mxu0 0
        %1595 = vmatpush1.bf16.msra.mxu0 0
        %1596 = vmatprep.subr.bf16.mxu0 0
        %1597 = vmatpush1.bf16.msra.mxu0 0
        %1598 = vmatprep.subr.bf16.mxu0 0
        %1599 = vmatpush1.bf16.msra.mxu0 0
        %1600 = vmatprep.subr.bf16.mxu0 0
        %1601 = vmatpush1.bf16.msra.mxu0 0
        %1602 = vmatprep.subr.bf16.mxu0 0
        %1603 = vmatpush1.bf16.msra.mxu0 0
        %1604 = vmatprep.subr.bf16.mxu0 0
        %1605 = vmatpush1.bf16.msra.mxu0 0
        %1606 = vmatprep.subr.bf16.mxu0 0
        %1607 = vmatpush1.bf16.msra.mxu0 0
        %1608 = vmatprep.subr.bf16.mxu0 0
        %1609 = vmatpush1.bf16.msra.mxu0 0
        %1610 = vmatprep.subr.bf16.mxu0 0
        %1611 = vmatpush1.bf16.msra.mxu0 0
        %1612 = vmatprep.subr.bf16.mxu0 0
        %1613 = vmatpush1.bf16.msra.mxu0 0
        %1614 = vmatprep.mubr.bf16.mxu0 0
        %1615 = vmatmul.mubr.bf16.gmra.mrb[0].mxu0 %v1568
        %v1616 = vpop.f32.mrb[0].mxu0
        %v1617 = vadd.f32 0.0, %v1616
        %v1618 = vpop.f32.mrb[0].mxu0
        %v1619 = vpop.f32.mrb[0].mxu0
        %v1620 = vadd.f32 0.0, %v1619
        %v1621 = vpop.f32.mrb[0].mxu0
        %1622 = vmatprep.mubr.bf16.mxu0 0
        %1623 = vmatmul.mubr.bf16.gmra.mrb[0].mxu0 %v1571
        %v1624 = vpop.f32.mrb[0].mxu0
        %v1625 = vadd.f32 0.0, %v1624
        %v1626 = vpop.f32.mrb[0].mxu0
        %v1627 = vpop.f32.mrb[0].mxu0
        %v1628 = vadd.f32 0.0, %v1627
        %v1629 = vpop.f32.mrb[0].mxu0
        %1630 = vmatprep.mubr.bf16.mxu0 0
        %1631 = vmatmul.mubr.bf16.gmra.mrb[0].mxu0 %v1574
        %v1632 = vpop.f32.mrb[0].mxu0
        %v1633 = vadd.f32 0.0, %v1632
        %v1634 = vpop.f32.mrb[0].mxu0
        %v1635 = vpop.f32.mrb[0].mxu0
        %v1636 = vadd.f32 0.0, %v1635
        %v1637 = vpop.f32.mrb[0].mxu0
        %1638 = vmatprep.mubr.bf16.mxu0 0
        %1639 = vmatmul.mubr.bf16.gmra.mrb[0].mxu0 %v1577
        %v1640 = vpop.f32.mrb[0].mxu0
        %v1641 = vadd.f32 0.0, %v1640
        %v1642 = vpop.f32.mrb[0].mxu0
        %v1643 = vpop.f32.mrb[0].mxu0
        %v1644 = vadd.f32 0.0, %v1643
        %v1645 = vpop.f32.mrb[0].mxu0
        %1646 = vdwg.mxu0
        %v1647 = vadd.f32 %v1379, %v1617
        %v1648 = vadd.f32 %v1380, %v1620
        %v1649 = vadd.f32 %v1381, %v1625
        %v1650 = vadd.f32 %v1382, %v1628
        %v1651 = vadd.f32 %v1383, %v1633
        %v1652 = vadd.f32 %v1384, %v1636
        %v1653 = vadd.f32 %v1385, %v1641
        %v1654 = vadd.f32 %v1386, %v1644
        %v1655 = vld [vmem:[#allocation2] sm:$0xc]
        %v1656 = vld [vmem:[#allocation2 + $0x8] sm:$0xc]
        %v1657 = vld [vmem:[#allocation2 + $0x10] sm:$0xc]
        %v1658 = vld [vmem:[#allocation2 + $0x18] sm:$0xc]
        %v1659 = vld [vmem:[#allocation2 + $0x20] sm:$0xc]
        %v1660 = vld [vmem:[#allocation2 + $0x28] sm:$0xc]
        %v1661 = vld [vmem:[#allocation2 + $0x30] sm:$0xc]
        %v1662 = vld [vmem:[#allocation2 + $0x38] sm:$0xc]
        %vm1679 = vcmask 1041408
        %vm1680 = vcmask 1045508
        %vm1681 = vmor %vm1679, %vm1680
        %v1682 = vrot.slane %v1655, 6
        %v1683 = vrot.slane %v1682, 4
        %v1684 = vrot.slane %v1387, 6
        %v1685 = vsel %vm1681, %v1683, %v1684
        %v1686 = vrot.slane %v1656, 6
        %v1687 = vrot.slane %v1686, 4
        %v1688 = vrot.slane %v1388, 6
        %v1689 = vsel %vm1681, %v1687, %v1688
        %v1690 = vrot.slane %v1657, 6
        %v1691 = vrot.slane %v1690, 4
        %v1692 = vrot.slane %v1389, 6
        %v1693 = vsel %vm1681, %v1691, %v1692
        %v1694 = vrot.slane %v1658, 6
        %v1695 = vrot.slane %v1694, 4
        %v1696 = vrot.slane %v1390, 6
        %v1697 = vsel %vm1681, %v1695, %v1696
        %v1698 = vrot.slane %v1659, 6
        %v1699 = vrot.slane %v1698, 4
        %v1700 = vrot.slane %v1391, 6
        %v1701 = vsel %vm1681, %v1699, %v1700
        %v1702 = vrot.slane %v1660, 6
        %v1703 = vrot.slane %v1702, 4
        %v1704 = vrot.slane %v1392, 6
        %v1705 = vsel %vm1681, %v1703, %v1704
        %v1706 = vrot.slane %v1661, 6
        %v1707 = vrot.slane %v1706, 4
        %v1708 = vrot.slane %v1393, 6
        %v1709 = vsel %vm1681, %v1707, %v1708
        %v1710 = vrot.slane %v1662, 6
        %v1711 = vrot.slane %v1710, 4
        %v1712 = vrot.slane %v1394, 6
        %v1713 = vsel %vm1681, %v1711, %v1712
        %s1714 = scalar_lea.vmem %s3, 48
        %v1715 = vld [vmem:[%s1714] sm:$0xf]
        %v1716 = vld [vmem:[%s1714 + $0x4] sm:$0xf]
        %v1717 = vld [vmem:[%s1714 + $0x8] sm:$0xf]
        %v1718 = vunpack.c.l.b16 %v1685
        %v1719 = vunpack.c.l.b16 %v1689
        %v1720 = vunpack.c.l.b16 %v1693
        %v1721 = vunpack.c.l.b16 %v1697
        %v1722 = vunpack.c.l.b16 %v1701
        %v1723 = vunpack.c.l.b16 %v1705
        %v1724 = vunpack.c.l.b16 %v1709
        %v1725 = vunpack.c.l.b16 %v1713
        %v1726 = vpack.c.b16 %v1719, %v1718
        %v1727 = vpack.c.b16 %v1721, %v1720
        %v1728 = vpack.c.b16 %v1723, %v1722
        %v1729 = vpack.c.b16 %v1725, %v1724
        %v1733 = vunpack.c.l.b16 %v1715
        %v1734 = vunpack.c.l.b16 %v1716
        %v1735 = vunpack.c.l.b16 %v1717
        %v1736 = vpack.c.b16 %v1734, %v1733
        %v1737 = vpack.c.b16 %v1735, %v1735
        %v1740 = vsel %vm1024, %v1726, 0
        %v1743 = vsel %vm1024, %v1727, 0
        %v1746 = vsel %vm1024, %v1728, 0
        %v1749 = vsel %vm1024, %v1729, 0
        %v1752 = vsel %vm1037, %v1737, 0
        %1754 = vmatprep.subr.bf16.mxu0 0
        %1755 = vmatpush1.bf16.msra.mxu0 %v1736
        %1756 = vmatprep.subr.bf16.mxu0 0
        %1757 = vmatpush1.bf16.msra.mxu0 %v1752
        %1758 = vmatprep.subr.bf16.mxu0 0
        %1759 = vmatpush1.bf16.msra.mxu0 0
        %1760 = vmatprep.subr.bf16.mxu0 0
        %1761 = vmatpush1.bf16.msra.mxu0 0
        %1762 = vmatprep.subr.bf16.mxu0 0
        %1763 = vmatpush1.bf16.msra.mxu0 0
        %1764 = vmatprep.subr.bf16.mxu0 0
        %1765 = vmatpush1.bf16.msra.mxu0 0
        %1766 = vmatprep.subr.bf16.mxu0 0
        %1767 = vmatpush1.bf16.msra.mxu0 0
        %1768 = vmatprep.subr.bf16.mxu0 0
        %1769 = vmatpush1.bf16.msra.mxu0 0
        %1770 = vmatprep.subr.bf16.mxu0 0
        %1771 = vmatpush1.bf16.msra.mxu0 0
        %1772 = vmatprep.subr.bf16.mxu0 0
        %1773 = vmatpush1.bf16.msra.mxu0 0
        %1774 = vmatprep.subr.bf16.mxu0 0
        %1775 = vmatpush1.bf16.msra.mxu0 0
        %1776 = vmatprep.subr.bf16.mxu0 0
        %1777 = vmatpush1.bf16.msra.mxu0 0
        %1778 = vmatprep.subr.bf16.mxu0 0
        %1779 = vmatpush1.bf16.msra.mxu0 0
        %1780 = vmatprep.subr.bf16.mxu0 0
        %1781 = vmatpush1.bf16.msra.mxu0 0
        %1782 = vmatprep.subr.bf16.mxu0 0
        %1783 = vmatpush1.bf16.msra.mxu0 0
        %1784 = vmatprep.subr.bf16.mxu0 0
        %1785 = vmatpush1.bf16.msra.mxu0 0
        %1786 = vmatprep.mubr.bf16.mxu0 0
        %1787 = vmatmul.mubr.bf16.gmra.mrb[0].mxu0 %v1740
        %v1788 = vpop.f32.mrb[0].mxu0
        %v1789 = vadd.f32 0.0, %v1788
        %v1790 = vpop.f32.mrb[0].mxu0
        %v1791 = vpop.f32.mrb[0].mxu0
        %v1792 = vadd.f32 0.0, %v1791
        %v1793 = vpop.f32.mrb[0].mxu0
        %1794 = vmatprep.mubr.bf16.mxu0 0
        %1795 = vmatmul.mubr.bf16.gmra.mrb[0].mxu0 %v1743
        %v1796 = vpop.f32.mrb[0].mxu0
        %v1797 = vadd.f32 0.0, %v1796
        %v1798 = vpop.f32.mrb[0].mxu0
        %v1799 = vpop.f32.mrb[0].mxu0
        %v1800 = vadd.f32 0.0, %v1799
        %v1801 = vpop.f32.mrb[0].mxu0
        %1802 = vmatprep.mubr.bf16.mxu0 0
        %1803 = vmatmul.mubr.bf16.gmra.mrb[0].mxu0 %v1746
        %v1804 = vpop.f32.mrb[0].mxu0
        %v1805 = vadd.f32 0.0, %v1804
        %v1806 = vpop.f32.mrb[0].mxu0
        %v1807 = vpop.f32.mrb[0].mxu0
        %v1808 = vadd.f32 0.0, %v1807
        %v1809 = vpop.f32.mrb[0].mxu0
        %1810 = vmatprep.mubr.bf16.mxu0 0
        %1811 = vmatmul.mubr.bf16.gmra.mrb[0].mxu0 %v1749
        %v1812 = vpop.f32.mrb[0].mxu0
        %v1813 = vadd.f32 0.0, %v1812
        %v1814 = vpop.f32.mrb[0].mxu0
        %v1815 = vpop.f32.mrb[0].mxu0
        %v1816 = vadd.f32 0.0, %v1815
        %v1817 = vpop.f32.mrb[0].mxu0
        %1818 = vdwg.mxu0
        %v1819 = vadd.f32 %v1647, %v1789
        %v1820 = vadd.f32 %v1648, %v1792
        %v1821 = vadd.f32 %v1649, %v1797
        %v1822 = vadd.f32 %v1650, %v1800
        %v1823 = vadd.f32 %v1651, %v1805
        %v1824 = vadd.f32 %v1652, %v1808
        %v1825 = vadd.f32 %v1653, %v1813
        %v1826 = vadd.f32 %v1654, %v1816
        %s1827 = scalar_lea.vmem [#allocation2], 8
        %v1828 = vld [vmem:[%s1827] sm:$0xf]
        %v1829 = vld [vmem:[%s1827 + $0x8] sm:$0xf]
        %v1830 = vld [vmem:[%s1827 + $0x10] sm:$0xf]
        %v1831 = vld [vmem:[%s1827 + $0x18] sm:$0xf]
        %v1832 = vld [vmem:[%s1827 + $0x20] sm:$0xf]
        %v1833 = vld [vmem:[%s1827 + $0x28] sm:$0xf]
        %v1834 = vld [vmem:[%s1827 + $0x30] sm:$0xf]
        %v1835 = vld [vmem:[%s1827 + $0x38] sm:$0xf]
        %s1836 = scalar_lea.vmem %s3, 60
        %v1837 = vld [vmem:[%s1836] sm:$0xf]
        %v1838 = vld [vmem:[%s1836 + $0x4] sm:$0xf]
        %v1839 = vld [vmem:[%s1836 + $0x8] sm:$0xf]
        %v1848 = vunpack.c.l.b16 %v1828
        %v1849 = vunpack.c.l.b16 %v1829
        %v1850 = vunpack.c.l.b16 %v1830
        %v1851 = vunpack.c.l.b16 %v1831
        %v1852 = vunpack.c.l.b16 %v1832
        %v1853 = vunpack.c.l.b16 %v1833
        %v1854 = vunpack.c.l.b16 %v1834
        %v1855 = vunpack.c.l.b16 %v1835
        %v1856 = vpack.c.b16 %v1849, %v1848
        %v1857 = vpack.c.b16 %v1851, %v1850
        %v1858 = vpack.c.b16 %v1853, %v1852
        %v1859 = vpack.c.b16 %v1855, %v1854
        %v1863 = vunpack.c.l.b16 %v1837
        %v1864 = vunpack.c.l.b16 %v1838
        %v1865 = vunpack.c.l.b16 %v1839
        %v1866 = vpack.c.b16 %v1864, %v1863
        %v1867 = vpack.c.b16 %v1865, %v1865
        %v1870 = vsel %vm1024, %v1856, 0
        %v1873 = vsel %vm1024, %v1857, 0
        %v1876 = vsel %vm1024, %v1858, 0
        %v1879 = vsel %vm1024, %v1859, 0
        %v1882 = vsel %vm1037, %v1867, 0
        %1884 = vmatprep.subr.bf16.mxu0 0
        %1885 = vmatpush1.bf16.msra.mxu0 %v1866
        %1886 = vmatprep.subr.bf16.mxu0 0
        %1887 = vmatpush1.bf16.msra.mxu0 %v1882
        %1888 = vmatprep.subr.bf16.mxu0 0
        %1889 = vmatpush1.bf16.msra.mxu0 0
        %1890 = vmatprep.subr.bf16.mxu0 0
        %1891 = vmatpush1.bf16.msra.mxu0 0
        %1892 = vmatprep.subr.bf16.mxu0 0
        %1893 = vmatpush1.bf16.msra.mxu0 0
        %1894 = vmatprep.subr.bf16.mxu0 0
        %1895 = vmatpush1.bf16.msra.mxu0 0
        %1896 = vmatprep.subr.bf16.mxu0 0
        %1897 = vmatpush1.bf16.msra.mxu0 0
        %1898 = vmatprep.subr.bf16.mxu0 0
        %1899 = vmatpush1.bf16.msra.mxu0 0
        %1900 = vmatprep.subr.bf16.mxu0 0
        %1901 = vmatpush1.bf16.msra.mxu0 0
        %1902 = vmatprep.subr.bf16.mxu0 0
        %1903 = vmatpush1.bf16.msra.mxu0 0
        %1904 = vmatprep.subr.bf16.mxu0 0
        %1905 = vmatpush1.bf16.msra.mxu0 0
        %1906 = vmatprep.subr.bf16.mxu0 0
        %1907 = vmatpush1.bf16.msra.mxu0 0
        %1908 = vmatprep.subr.bf16.mxu0 0
        %1909 = vmatpush1.bf16.msra.mxu0 0
        %1910 = vmatprep.subr.bf16.mxu0 0
        %1911 = vmatpush1.bf16.msra.mxu0 0
        %1912 = vmatprep.subr.bf16.mxu0 0
        %1913 = vmatpush1.bf16.msra.mxu0 0
        %1914 = vmatprep.subr.bf16.mxu0 0
        %1915 = vmatpush1.bf16.msra.mxu0 0
        %1916 = vmatprep.mubr.bf16.mxu0 0
        %1917 = vmatmul.mubr.bf16.gmra.mrb[0].mxu0 %v1870
        %v1918 = vpop.f32.mrb[0].mxu0
        %v1919 = vadd.f32 0.0, %v1918
        %v1920 = vpop.f32.mrb[0].mxu0
        %v1921 = vpop.f32.mrb[0].mxu0
        %v1922 = vadd.f32 0.0, %v1921
        %v1923 = vpop.f32.mrb[0].mxu0
        %1924 = vmatprep.mubr.bf16.mxu0 0
        %1925 = vmatmul.mubr.bf16.gmra.mrb[0].mxu0 %v1873
        %v1926 = vpop.f32.mrb[0].mxu0
        %v1927 = vadd.f32 0.0, %v1926
        %v1928 = vpop.f32.mrb[0].mxu0
        %v1929 = vpop.f32.mrb[0].mxu0
        %v1930 = vadd.f32 0.0, %v1929
        %v1931 = vpop.f32.mrb[0].mxu0
        %1932 = vmatprep.mubr.bf16.mxu0 0
        %1933 = vmatmul.mubr.bf16.gmra.mrb[0].mxu0 %v1876
        %v1934 = vpop.f32.mrb[0].mxu0
        %v1935 = vadd.f32 0.0, %v1934
        %v1936 = vpop.f32.mrb[0].mxu0
        %v1937 = vpop.f32.mrb[0].mxu0
        %v1938 = vadd.f32 0.0, %v1937
        %v1939 = vpop.f32.mrb[0].mxu0
        %1940 = vmatprep.mubr.bf16.mxu0 0
        %1941 = vmatmul.mubr.bf16.gmra.mrb[0].mxu0 %v1879
        %v1942 = vpop.f32.mrb[0].mxu0
        %v1943 = vadd.f32 0.0, %v1942
        %v1944 = vpop.f32.mrb[0].mxu0
        %v1945 = vpop.f32.mrb[0].mxu0
        %v1946 = vadd.f32 0.0, %v1945
        %v1947 = vpop.f32.mrb[0].mxu0
        %1948 = vdwg.mxu0
        %v1949 = vadd.f32 %v1819, %v1919
        %v1950 = vadd.f32 %v1820, %v1922
        %v1951 = vadd.f32 %v1821, %v1927
        %v1952 = vadd.f32 %v1822, %v1930
        %v1953 = vadd.f32 %v1823, %v1935
        %v1954 = vadd.f32 %v1824, %v1938
        %v1955 = vadd.f32 %v1825, %v1943
        %v1956 = vadd.f32 %v1826, %v1946
        %v1957 = vld [vmem:[%s1827] sm:$0xf]
        %v1958 = vld [vmem:[%s1827 + $0x4] sm:$0x1]
        %v1959 = vld [vmem:[%s1827 + $0x8] sm:$0xf]
        %v1960 = vld [vmem:[%s1827 + $0xc] sm:$0x1]
        %v1961 = vld [vmem:[%s1827 + $0x10] sm:$0xf]
        %v1962 = vld [vmem:[%s1827 + $0x14] sm:$0x1]
        %v1963 = vld [vmem:[%s1827 + $0x18] sm:$0xf]
        %v1964 = vld [vmem:[%s1827 + $0x1c] sm:$0x1]
        %v1965 = vld [vmem:[%s1827 + $0x20] sm:$0xf]
        %v1966 = vld [vmem:[%s1827 + $0x24] sm:$0x1]
        %v1967 = vld [vmem:[%s1827 + $0x28] sm:$0xf]
        %v1968 = vld [vmem:[%s1827 + $0x2c] sm:$0x1]
        %v1969 = vld [vmem:[%s1827 + $0x30] sm:$0xf]
        %v1970 = vld [vmem:[%s1827 + $0x34] sm:$0x1]
        %v1971 = vld [vmem:[%s1827 + $0x38] sm:$0xf]
        %v1972 = vld [vmem:[%s1827 + $0x3c] sm:$0x1]
        %v1974 = vshrl.u32 %v1957, 16
        %v1976 = vrot.slane %v1974, 4
        %v1977 = vshll.u32 %v1957, 16
        %v1979 = vrot.slane %v1977, 5
        %v1980 = vor.u32 %v1976, %v1979
        %v1981 = vrot.slane %v1980, 4
        %v1983 = vshll.u32 %v1958, 16
        %v1985 = vrot.slane %v1983, 5
        %v1986 = vsel %vm886, %v1981, %v1985
        %v1988 = vshrl.u32 %v1959, 16
        %v1990 = vrot.slane %v1988, 4
        %v1991 = vshll.u32 %v1959, 16
        %v1993 = vrot.slane %v1991, 5
        %v1994 = vor.u32 %v1990, %v1993
        %v1995 = vrot.slane %v1994, 4
        %v1997 = vshll.u32 %v1960, 16
        %v1999 = vrot.slane %v1997, 5
        %v2000 = vsel %vm886, %v1995, %v1999
        %v2002 = vshrl.u32 %v1961, 16
        %v2004 = vrot.slane %v2002, 4
        %v2005 = vshll.u32 %v1961, 16
        %v2007 = vrot.slane %v2005, 5
        %v2008 = vor.u32 %v2004, %v2007
        %v2009 = vrot.slane %v2008, 4
        %v2011 = vshll.u32 %v1962, 16
        %v2013 = vrot.slane %v2011, 5
        %v2014 = vsel %vm886, %v2009, %v2013
        %v2016 = vshrl.u32 %v1963, 16
        %v2018 = vrot.slane %v2016, 4
        %v2019 = vshll.u32 %v1963, 16
        %v2021 = vrot.slane %v2019, 5
        %v2022 = vor.u32 %v2018, %v2021
        %v2023 = vrot.slane %v2022, 4
        %v2025 = vshll.u32 %v1964, 16
        %v2027 = vrot.slane %v2025, 5
        %v2028 = vsel %vm886, %v2023, %v2027
        %v2030 = vshrl.u32 %v1965, 16
        %v2032 = vrot.slane %v2030, 4
        %v2033 = vshll.u32 %v1965, 16
        %v2035 = vrot.slane %v2033, 5
        %v2036 = vor.u32 %v2032, %v2035
        %v2037 = vrot.slane %v2036, 4
        %v2039 = vshll.u32 %v1966, 16
        %v2041 = vrot.slane %v2039, 5
        %v2042 = vsel %vm886, %v2037, %v2041
        %v2044 = vshrl.u32 %v1967, 16
        %v2046 = vrot.slane %v2044, 4
        %v2047 = vshll.u32 %v1967, 16
        %v2049 = vrot.slane %v2047, 5
        %v2050 = vor.u32 %v2046, %v2049
        %v2051 = vrot.slane %v2050, 4
        %v2053 = vshll.u32 %v1968, 16
        %v2055 = vrot.slane %v2053, 5
        %v2056 = vsel %vm886, %v2051, %v2055
        %v2058 = vshrl.u32 %v1969, 16
        %v2060 = vrot.slane %v2058, 4
        %v2061 = vshll.u32 %v1969, 16
        %v2063 = vrot.slane %v2061, 5
        %v2064 = vor.u32 %v2060, %v2063
        %v2065 = vrot.slane %v2064, 4
        %v2067 = vshll.u32 %v1970, 16
        %v2069 = vrot.slane %v2067, 5
        %v2070 = vsel %vm886, %v2065, %v2069
        %v2072 = vshrl.u32 %v1971, 16
        %v2074 = vrot.slane %v2072, 4
        %v2075 = vshll.u32 %v1971, 16
        %v2077 = vrot.slane %v2075, 5
        %v2078 = vor.u32 %v2074, %v2077
        %v2079 = vrot.slane %v2078, 4
        %v2081 = vshll.u32 %v1972, 16
        %v2083 = vrot.slane %v2081, 5
        %v2084 = vsel %vm886, %v2079, %v2083
        %s2085 = scalar_lea.vmem %s3, 72
        %v2086 = vld [vmem:[%s2085] sm:$0xf]
        %v2087 = vld [vmem:[%s2085 + $0x4] sm:$0xf]
        %v2088 = vld [vmem:[%s2085 + $0x8] sm:$0xf]
        %v2089 = vunpack.c.l.b16 %v1986
        %v2090 = vunpack.c.l.b16 %v2000
        %v2091 = vunpack.c.l.b16 %v2014
        %v2092 = vunpack.c.l.b16 %v2028
        %v2093 = vunpack.c.l.b16 %v2042
        %v2094 = vunpack.c.l.b16 %v2056
        %v2095 = vunpack.c.l.b16 %v2070
        %v2096 = vunpack.c.l.b16 %v2084
        %v2097 = vpack.c.b16 %v2090, %v2089
        %v2098 = vpack.c.b16 %v2092, %v2091
        %v2099 = vpack.c.b16 %v2094, %v2093
        %v2100 = vpack.c.b16 %v2096, %v2095
        %v2104 = vunpack.c.l.b16 %v2086
        %v2105 = vunpack.c.l.b16 %v2087
        %v2106 = vunpack.c.l.b16 %v2088
        %v2107 = vpack.c.b16 %v2105, %v2104
        %v2108 = vpack.c.b16 %v2106, %v2106
        %v2111 = vsel %vm1024, %v2097, 0
        %v2114 = vsel %vm1024, %v2098, 0
        %v2117 = vsel %vm1024, %v2099, 0
        %v2120 = vsel %vm1024, %v2100, 0
        %v2123 = vsel %vm1037, %v2108, 0
        %2125 = vmatprep.subr.bf16.mxu0 0
        %2126 = vmatpush1.bf16.msra.mxu0 %v2107
        %2127 = vmatprep.subr.bf16.mxu0 0
        %2128 = vmatpush1.bf16.msra.mxu0 %v2123
        %2129 = vmatprep.subr.bf16.mxu0 0
        %2130 = vmatpush1.bf16.msra.mxu0 0
        %2131 = vmatprep.subr.bf16.mxu0 0
        %2132 = vmatpush1.bf16.msra.mxu0 0
        %2133 = vmatprep.subr.bf16.mxu0 0
        %2134 = vmatpush1.bf16.msra.mxu0 0
        %2135 = vmatprep.subr.bf16.mxu0 0
        %2136 = vmatpush1.bf16.msra.mxu0 0
        %2137 = vmatprep.subr.bf16.mxu0 0
        %2138 = vmatpush1.bf16.msra.mxu0 0
        %2139 = vmatprep.subr.bf16.mxu0 0
        %2140 = vmatpush1.bf16.msra.mxu0 0
        %2141 = vmatprep.subr.bf16.mxu0 0
        %2142 = vmatpush1.bf16.msra.mxu0 0
        %2143 = vmatprep.subr.bf16.mxu0 0
        %2144 = vmatpush1.bf16.msra.mxu0 0
        %2145 = vmatprep.subr.bf16.mxu0 0
        %2146 = vmatpush1.bf16.msra.mxu0 0
        %2147 = vmatprep.subr.bf16.mxu0 0
        %2148 = vmatpush1.bf16.msra.mxu0 0
        %2149 = vmatprep.subr.bf16.mxu0 0
        %2150 = vmatpush1.bf16.msra.mxu0 0
        %2151 = vmatprep.subr.bf16.mxu0 0
        %2152 = vmatpush1.bf16.msra.mxu0 0
        %2153 = vmatprep.subr.bf16.mxu0 0
        %2154 = vmatpush1.bf16.msra.mxu0 0
        %2155 = vmatprep.subr.bf16.mxu0 0
        %2156 = vmatpush1.bf16.msra.mxu0 0
        %2157 = vmatprep.mubr.bf16.mxu0 0
        %2158 = vmatmul.mubr.bf16.gmra.mrb[0].mxu0 %v2111
        %v2159 = vpop.f32.mrb[0].mxu0
        %v2160 = vadd.f32 0.0, %v2159
        %v2161 = vpop.f32.mrb[0].mxu0
        %v2162 = vpop.f32.mrb[0].mxu0
        %v2163 = vadd.f32 0.0, %v2162
        %v2164 = vpop.f32.mrb[0].mxu0
        %2165 = vmatprep.mubr.bf16.mxu0 0
        %2166 = vmatmul.mubr.bf16.gmra.mrb[0].mxu0 %v2114
        %v2167 = vpop.f32.mrb[0].mxu0
        %v2168 = vadd.f32 0.0, %v2167
        %v2169 = vpop.f32.mrb[0].mxu0
        %v2170 = vpop.f32.mrb[0].mxu0
        %v2171 = vadd.f32 0.0, %v2170
        %v2172 = vpop.f32.mrb[0].mxu0
        %2173 = vmatprep.mubr.bf16.mxu0 0
        %2174 = vmatmul.mubr.bf16.gmra.mrb[0].mxu0 %v2117
        %v2175 = vpop.f32.mrb[0].mxu0
        %v2176 = vadd.f32 0.0, %v2175
        %v2177 = vpop.f32.mrb[0].mxu0
        %v2178 = vpop.f32.mrb[0].mxu0
        %v2179 = vadd.f32 0.0, %v2178
        %v2180 = vpop.f32.mrb[0].mxu0
        %2181 = vmatprep.mubr.bf16.mxu0 0
        %2182 = vmatmul.mubr.bf16.gmra.mrb[0].mxu0 %v2120
        %v2183 = vpop.f32.mrb[0].mxu0
        %v2184 = vadd.f32 0.0, %v2183
        %v2185 = vpop.f32.mrb[0].mxu0
        %v2186 = vpop.f32.mrb[0].mxu0
        %v2187 = vadd.f32 0.0, %v2186
        %v2188 = vpop.f32.mrb[0].mxu0
        %2189 = vdwg.mxu0
        %v2190 = vadd.f32 %v1949, %v2160
        %v2191 = vadd.f32 %v1950, %v2163
        %v2192 = vadd.f32 %v1951, %v2168
        %v2193 = vadd.f32 %v1952, %v2171
        %v2194 = vadd.f32 %v1953, %v2176
        %v2195 = vadd.f32 %v1954, %v2179
        %v2196 = vadd.f32 %v1955, %v2184
        %v2197 = vadd.f32 %v1956, %v2187
        %v2198 = vld [vmem:[%s1827] sm:$0xe]
        %v2199 = vld [vmem:[%s1827 + $0x8] sm:$0xe]
        %v2200 = vld [vmem:[%s1827 + $0x10] sm:$0xe]
        %v2201 = vld [vmem:[%s1827 + $0x18] sm:$0xe]
        %v2202 = vld [vmem:[%s1827 + $0x20] sm:$0xe]
        %v2203 = vld [vmem:[%s1827 + $0x28] sm:$0xe]
        %v2204 = vld [vmem:[%s1827 + $0x30] sm:$0xe]
        %v2205 = vld [vmem:[%s1827 + $0x38] sm:$0xe]
        %v2222 = vrot.slane %v2198, 5
        %v2223 = vrot.slane %v2222, 4
        %v2224 = vrot.slane %v1958, 5
        %v2225 = vsel %vm1241, %v2223, %v2224
        %v2226 = vrot.slane %v2199, 5
        %v2227 = vrot.slane %v2226, 4
        %v2228 = vrot.slane %v1960, 5
        %v2229 = vsel %vm1241, %v2227, %v2228
        %v2230 = vrot.slane %v2200, 5
        %v2231 = vrot.slane %v2230, 4
        %v2232 = vrot.slane %v1962, 5
        %v2233 = vsel %vm1241, %v2231, %v2232
        %v2234 = vrot.slane %v2201, 5
        %v2235 = vrot.slane %v2234, 4
        %v2236 = vrot.slane %v1964, 5
        %v2237 = vsel %vm1241, %v2235, %v2236
        %v2238 = vrot.slane %v2202, 5
        %v2239 = vrot.slane %v2238, 4
        %v2240 = vrot.slane %v1966, 5
        %v2241 = vsel %vm1241, %v2239, %v2240
        %v2242 = vrot.slane %v2203, 5
        %v2243 = vrot.slane %v2242, 4
        %v2244 = vrot.slane %v1968, 5
        %v2245 = vsel %vm1241, %v2243, %v2244
        %v2246 = vrot.slane %v2204, 5
        %v2247 = vrot.slane %v2246, 4
        %v2248 = vrot.slane %v1970, 5
        %v2249 = vsel %vm1241, %v2247, %v2248
        %v2250 = vrot.slane %v2205, 5
        %v2251 = vrot.slane %v2250, 4
        %v2252 = vrot.slane %v1972, 5
        %v2253 = vsel %vm1241, %v2251, %v2252
        %s2254 = scalar_lea.vmem %s3, 84
        %v2255 = vld [vmem:[%s2254] sm:$0xf]
        %v2256 = vld [vmem:[%s2254 + $0x4] sm:$0xf]
        %v2257 = vld [vmem:[%s2254 + $0x8] sm:$0xf]
        %v2258 = vunpack.c.l.b16 %v2225
        %v2259 = vunpack.c.l.b16 %v2229
        %v2260 = vunpack.c.l.b16 %v2233
        %v2261 = vunpack.c.l.b16 %v2237
        %v2262 = vunpack.c.l.b16 %v2241
        %v2263 = vunpack.c.l.b16 %v2245
        %v2264 = vunpack.c.l.b16 %v2249
        %v2265 = vunpack.c.l.b16 %v2253
        %v2266 = vpack.c.b16 %v2259, %v2258
        %v2267 = vpack.c.b16 %v2261, %v2260
        %v2268 = vpack.c.b16 %v2263, %v2262
        %v2269 = vpack.c.b16 %v2265, %v2264
        %v2273 = vunpack.c.l.b16 %v2255
        %v2274 = vunpack.c.l.b16 %v2256
        %v2275 = vunpack.c.l.b16 %v2257
        %v2276 = vpack.c.b16 %v2274, %v2273
        %v2277 = vpack.c.b16 %v2275, %v2275
        %v2280 = vsel %vm1024, %v2266, 0
        %v2283 = vsel %vm1024, %v2267, 0
        %v2286 = vsel %vm1024, %v2268, 0
        %v2289 = vsel %vm1024, %v2269, 0
        %v2292 = vsel %vm1037, %v2277, 0
        %2294 = vmatprep.subr.bf16.mxu0 0
        %2295 = vmatpush1.bf16.msra.mxu0 %v2276
        %2296 = vmatprep.subr.bf16.mxu0 0
        %2297 = vmatpush1.bf16.msra.mxu0 %v2292
        %2298 = vmatprep.subr.bf16.mxu0 0
        %2299 = vmatpush1.bf16.msra.mxu0 0
        %2300 = vmatprep.subr.bf16.mxu0 0
        %2301 = vmatpush1.bf16.msra.mxu0 0
        %2302 = vmatprep.subr.bf16.mxu0 0
        %2303 = vmatpush1.bf16.msra.mxu0 0
        %2304 = vmatprep.subr.bf16.mxu0 0
        %2305 = vmatpush1.bf16.msra.mxu0 0
        %2306 = vmatprep.subr.bf16.mxu0 0
        %2307 = vmatpush1.bf16.msra.mxu0 0
        %2308 = vmatprep.subr.bf16.mxu0 0
        %2309 = vmatpush1.bf16.msra.mxu0 0
        %2310 = vmatprep.subr.bf16.mxu0 0
        %2311 = vmatpush1.bf16.msra.mxu0 0
        %2312 = vmatprep.subr.bf16.mxu0 0
        %2313 = vmatpush1.bf16.msra.mxu0 0
        %2314 = vmatprep.subr.bf16.mxu0 0
        %2315 = vmatpush1.bf16.msra.mxu0 0
        %2316 = vmatprep.subr.bf16.mxu0 0
        %2317 = vmatpush1.bf16.msra.mxu0 0
        %2318 = vmatprep.subr.bf16.mxu0 0
        %2319 = vmatpush1.bf16.msra.mxu0 0
        %2320 = vmatprep.subr.bf16.mxu0 0
        %2321 = vmatpush1.bf16.msra.mxu0 0
        %2322 = vmatprep.subr.bf16.mxu0 0
        %2323 = vmatpush1.bf16.msra.mxu0 0
        %2324 = vmatprep.subr.bf16.mxu0 0
        %2325 = vmatpush1.bf16.msra.mxu0 0
        %2326 = vmatprep.mubr.bf16.mxu0 0
        %2327 = vmatmul.mubr.bf16.gmra.mrb[0].mxu0 %v2280
        %v2328 = vpop.f32.mrb[0].mxu0
        %v2329 = vadd.f32 0.0, %v2328
        %v2330 = vpop.f32.mrb[0].mxu0
        %v2331 = vpop.f32.mrb[0].mxu0
        %v2332 = vadd.f32 0.0, %v2331
        %v2333 = vpop.f32.mrb[0].mxu0
        %2334 = vmatprep.mubr.bf16.mxu0 0
        %2335 = vmatmul.mubr.bf16.gmra.mrb[0].mxu0 %v2283
        %v2336 = vpop.f32.mrb[0].mxu0
        %v2337 = vadd.f32 0.0, %v2336
        %v2338 = vpop.f32.mrb[0].mxu0
        %v2339 = vpop.f32.mrb[0].mxu0
        %v2340 = vadd.f32 0.0, %v2339
        %v2341 = vpop.f32.mrb[0].mxu0
        %2342 = vmatprep.mubr.bf16.mxu0 0
        %2343 = vmatmul.mubr.bf16.gmra.mrb[0].mxu0 %v2286
        %v2344 = vpop.f32.mrb[0].mxu0
        %v2345 = vadd.f32 0.0, %v2344
        %v2346 = vpop.f32.mrb[0].mxu0
        %v2347 = vpop.f32.mrb[0].mxu0
        %v2348 = vadd.f32 0.0, %v2347
        %v2349 = vpop.f32.mrb[0].mxu0
        %2350 = vmatprep.mubr.bf16.mxu0 0
        %2351 = vmatmul.mubr.bf16.gmra.mrb[0].mxu0 %v2289
        %v2352 = vpop.f32.mrb[0].mxu0
        %v2353 = vadd.f32 0.0, %v2352
        %v2354 = vpop.f32.mrb[0].mxu0
        %v2355 = vpop.f32.mrb[0].mxu0
        %v2356 = vadd.f32 0.0, %v2355
        %v2357 = vpop.f32.mrb[0].mxu0
        %2358 = vdwg.mxu0
        %v2359 = vadd.f32 %v2190, %v2329
        %v2360 = vadd.f32 %v2191, %v2332
        %v2361 = vadd.f32 %v2192, %v2337
        %v2362 = vadd.f32 %v2193, %v2340
        %v2363 = vadd.f32 %v2194, %v2345
        %v2364 = vadd.f32 %v2195, %v2348
        %v2365 = vadd.f32 %v2196, %v2353
        %v2366 = vadd.f32 %v2197, %v2356
        %v2367 = vld [vmem:[%s1827 + $0x4] sm:$0x3]
        %v2368 = vld [vmem:[%s1827 + $0xc] sm:$0x3]
        %v2369 = vld [vmem:[%s1827 + $0x14] sm:$0x3]
        %v2370 = vld [vmem:[%s1827 + $0x1c] sm:$0x3]
        %v2371 = vld [vmem:[%s1827 + $0x24] sm:$0x3]
        %v2372 = vld [vmem:[%s1827 + $0x2c] sm:$0x3]
        %v2373 = vld [vmem:[%s1827 + $0x34] sm:$0x3]
        %v2374 = vld [vmem:[%s1827 + $0x3c] sm:$0x3]
        %v2376 = vshrl.u32 %v2198, 16
        %v2378 = vrot.slane %v2376, 5
        %v2379 = vshll.u32 %v2198, 16
        %v2381 = vrot.slane %v2379, 6
        %v2382 = vor.u32 %v2378, %v2381
        %v2383 = vrot.slane %v2382, 4
        %v2385 = vshrl.u32 %v2367, 16
        %v2387 = vrot.slane %v2385, 5
        %v2388 = vshll.u32 %v2367, 16
        %v2390 = vrot.slane %v2388, 6
        %v2391 = vor.u32 %v2387, %v2390
        %v2392 = vsel %vm1397, %v2383, %v2391
        %v2394 = vshrl.u32 %v2199, 16
        %v2396 = vrot.slane %v2394, 5
        %v2397 = vshll.u32 %v2199, 16
        %v2399 = vrot.slane %v2397, 6
        %v2400 = vor.u32 %v2396, %v2399
        %v2401 = vrot.slane %v2400, 4
        %v2403 = vshrl.u32 %v2368, 16
        %v2405 = vrot.slane %v2403, 5
        %v2406 = vshll.u32 %v2368, 16
        %v2408 = vrot.slane %v2406, 6
        %v2409 = vor.u32 %v2405, %v2408
        %v2410 = vsel %vm1397, %v2401, %v2409
        %v2412 = vshrl.u32 %v2200, 16
        %v2414 = vrot.slane %v2412, 5
        %v2415 = vshll.u32 %v2200, 16
        %v2417 = vrot.slane %v2415, 6
        %v2418 = vor.u32 %v2414, %v2417
        %v2419 = vrot.slane %v2418, 4
        %v2421 = vshrl.u32 %v2369, 16
        %v2423 = vrot.slane %v2421, 5
        %v2424 = vshll.u32 %v2369, 16
        %v2426 = vrot.slane %v2424, 6
        %v2427 = vor.u32 %v2423, %v2426
        %v2428 = vsel %vm1397, %v2419, %v2427
        %v2430 = vshrl.u32 %v2201, 16
        %v2432 = vrot.slane %v2430, 5
        %v2433 = vshll.u32 %v2201, 16
        %v2435 = vrot.slane %v2433, 6
        %v2436 = vor.u32 %v2432, %v2435
        %v2437 = vrot.slane %v2436, 4
        %v2439 = vshrl.u32 %v2370, 16
        %v2441 = vrot.slane %v2439, 5
        %v2442 = vshll.u32 %v2370, 16
        %v2444 = vrot.slane %v2442, 6
        %v2445 = vor.u32 %v2441, %v2444
        %v2446 = vsel %vm1397, %v2437, %v2445
        %v2448 = vshrl.u32 %v2202, 16
        %v2450 = vrot.slane %v2448, 5
        %v2451 = vshll.u32 %v2202, 16
        %v2453 = vrot.slane %v2451, 6
        %v2454 = vor.u32 %v2450, %v2453
        %v2455 = vrot.slane %v2454, 4
        %v2457 = vshrl.u32 %v2371, 16
        %v2459 = vrot.slane %v2457, 5
        %v2460 = vshll.u32 %v2371, 16
        %v2462 = vrot.slane %v2460, 6
        %v2463 = vor.u32 %v2459, %v2462
        %v2464 = vsel %vm1397, %v2455, %v2463
        %v2466 = vshrl.u32 %v2203, 16
        %v2468 = vrot.slane %v2466, 5
        %v2469 = vshll.u32 %v2203, 16
        %v2471 = vrot.slane %v2469, 6
        %v2472 = vor.u32 %v2468, %v2471
        %v2473 = vrot.slane %v2472, 4
        %v2475 = vshrl.u32 %v2372, 16
        %v2477 = vrot.slane %v2475, 5
        %v2478 = vshll.u32 %v2372, 16
        %v2480 = vrot.slane %v2478, 6
        %v2481 = vor.u32 %v2477, %v2480
        %v2482 = vsel %vm1397, %v2473, %v2481
        %v2484 = vshrl.u32 %v2204, 16
        %v2486 = vrot.slane %v2484, 5
        %v2487 = vshll.u32 %v2204, 16
        %v2489 = vrot.slane %v2487, 6
        %v2490 = vor.u32 %v2486, %v2489
        %v2491 = vrot.slane %v2490, 4
        %v2493 = vshrl.u32 %v2373, 16
        %v2495 = vrot.slane %v2493, 5
        %v2496 = vshll.u32 %v2373, 16
        %v2498 = vrot.slane %v2496, 6
        %v2499 = vor.u32 %v2495, %v2498
        %v2500 = vsel %vm1397, %v2491, %v2499
        %v2502 = vshrl.u32 %v2205, 16
        %v2504 = vrot.slane %v2502, 5
        %v2505 = vshll.u32 %v2205, 16
        %v2507 = vrot.slane %v2505, 6
        %v2508 = vor.u32 %v2504, %v2507
        %v2509 = vrot.slane %v2508, 4
        %v2511 = vshrl.u32 %v2374, 16
        %v2513 = vrot.slane %v2511, 5
        %v2514 = vshll.u32 %v2374, 16
        %v2516 = vrot.slane %v2514, 6
        %v2517 = vor.u32 %v2513, %v2516
        %v2518 = vsel %vm1397, %v2509, %v2517
        %s2519 = scalar_lea.vmem %s3, 96
        %v2520 = vld [vmem:[%s2519] sm:$0xf]
        %v2521 = vld [vmem:[%s2519 + $0x4] sm:$0xf]
        %v2522 = vld [vmem:[%s2519 + $0x8] sm:$0xf]
        %v2523 = vunpack.c.l.b16 %v2392
        %v2524 = vunpack.c.l.b16 %v2410
        %v2525 = vunpack.c.l.b16 %v2428
        %v2526 = vunpack.c.l.b16 %v2446
        %v2527 = vunpack.c.l.b16 %v2464
        %v2528 = vunpack.c.l.b16 %v2482
        %v2529 = vunpack.c.l.b16 %v2500
        %v2530 = vunpack.c.l.b16 %v2518
        %v2531 = vpack.c.b16 %v2524, %v2523
        %v2532 = vpack.c.b16 %v2526, %v2525
        %v2533 = vpack.c.b16 %v2528, %v2527
        %v2534 = vpack.c.b16 %v2530, %v2529
        %v2538 = vunpack.c.l.b16 %v2520
        %v2539 = vunpack.c.l.b16 %v2521
        %v2540 = vunpack.c.l.b16 %v2522
        %v2541 = vpack.c.b16 %v2539, %v2538
        %v2542 = vpack.c.b16 %v2540, %v2540
        %v2545 = vsel %vm1024, %v2531, 0
        %v2548 = vsel %vm1024, %v2532, 0
        %v2551 = vsel %vm1024, %v2533, 0
        %v2554 = vsel %vm1024, %v2534, 0
        %v2557 = vsel %vm1037, %v2542, 0
        %2559 = vmatprep.subr.bf16.mxu0 0
        %2560 = vmatpush1.bf16.msra.mxu0 %v2541
        %2561 = vmatprep.subr.bf16.mxu0 0
        %2562 = vmatpush1.bf16.msra.mxu0 %v2557
        %2563 = vmatprep.subr.bf16.mxu0 0
        %2564 = vmatpush1.bf16.msra.mxu0 0
        %2565 = vmatprep.subr.bf16.mxu0 0
        %2566 = vmatpush1.bf16.msra.mxu0 0
        %2567 = vmatprep.subr.bf16.mxu0 0
        %2568 = vmatpush1.bf16.msra.mxu0 0
        %2569 = vmatprep.subr.bf16.mxu0 0
        %2570 = vmatpush1.bf16.msra.mxu0 0
        %2571 = vmatprep.subr.bf16.mxu0 0
        %2572 = vmatpush1.bf16.msra.mxu0 0
        %2573 = vmatprep.subr.bf16.mxu0 0
        %2574 = vmatpush1.bf16.msra.mxu0 0
        %2575 = vmatprep.subr.bf16.mxu0 0
        %2576 = vmatpush1.bf16.msra.mxu0 0
        %2577 = vmatprep.subr.bf16.mxu0 0
        %2578 = vmatpush1.bf16.msra.mxu0 0
        %2579 = vmatprep.subr.bf16.mxu0 0
        %2580 = vmatpush1.bf16.msra.mxu0 0
        %2581 = vmatprep.subr.bf16.mxu0 0
        %2582 = vmatpush1.bf16.msra.mxu0 0
        %2583 = vmatprep.subr.bf16.mxu0 0
        %2584 = vmatpush1.bf16.msra.mxu0 0
        %2585 = vmatprep.subr.bf16.mxu0 0
        %2586 = vmatpush1.bf16.msra.mxu0 0
        %2587 = vmatprep.subr.bf16.mxu0 0
        %2588 = vmatpush1.bf16.msra.mxu0 0
        %2589 = vmatprep.subr.bf16.mxu0 0
        %2590 = vmatpush1.bf16.msra.mxu0 0
        %2591 = vmatprep.mubr.bf16.mxu0 0
        %2592 = vmatmul.mubr.bf16.gmra.mrb[0].mxu0 %v2545
        %v2593 = vpop.f32.mrb[0].mxu0
        %v2594 = vadd.f32 0.0, %v2593
        %v2595 = vpop.f32.mrb[0].mxu0
        %v2596 = vpop.f32.mrb[0].mxu0
        %v2597 = vadd.f32 0.0, %v2596
        %v2598 = vpop.f32.mrb[0].mxu0
        %2599 = vmatprep.mubr.bf16.mxu0 0
        %2600 = vmatmul.mubr.bf16.gmra.mrb[0].mxu0 %v2548
        %v2601 = vpop.f32.mrb[0].mxu0
        %v2602 = vadd.f32 0.0, %v2601
        %v2603 = vpop.f32.mrb[0].mxu0
        %v2604 = vpop.f32.mrb[0].mxu0
        %v2605 = vadd.f32 0.0, %v2604
        %v2606 = vpop.f32.mrb[0].mxu0
        %2607 = vmatprep.mubr.bf16.mxu0 0
        %2608 = vmatmul.mubr.bf16.gmra.mrb[0].mxu0 %v2551
        %v2609 = vpop.f32.mrb[0].mxu0
        %v2610 = vadd.f32 0.0, %v2609
        %v2611 = vpop.f32.mrb[0].mxu0
        %v2612 = vpop.f32.mrb[0].mxu0
        %v2613 = vadd.f32 0.0, %v2612
        %v2614 = vpop.f32.mrb[0].mxu0
        %2615 = vmatprep.mubr.bf16.mxu0 0
        %2616 = vmatmul.mubr.bf16.gmra.mrb[0].mxu0 %v2554
        %v2617 = vpop.f32.mrb[0].mxu0
        %v2618 = vadd.f32 0.0, %v2617
        %v2619 = vpop.f32.mrb[0].mxu0
        %v2620 = vpop.f32.mrb[0].mxu0
        %v2621 = vadd.f32 0.0, %v2620
        %v2622 = vpop.f32.mrb[0].mxu0
        %2623 = vdwg.mxu0
        %v2624 = vadd.f32 %v2359, %v2594
        %v2625 = vadd.f32 %v2360, %v2597
        %v2626 = vadd.f32 %v2361, %v2602
        %v2627 = vadd.f32 %v2362, %v2605
        %v2628 = vadd.f32 %v2363, %v2610
        %v2629 = vadd.f32 %v2364, %v2613
        %v2630 = vadd.f32 %v2365, %v2618
        %v2631 = vadd.f32 %v2366, %v2621
        %v2632 = vld [vmem:[%s1827] sm:$0xc]
        %v2633 = vld [vmem:[%s1827 + $0x8] sm:$0xc]
        %v2634 = vld [vmem:[%s1827 + $0x10] sm:$0xc]
        %v2635 = vld [vmem:[%s1827 + $0x18] sm:$0xc]
        %v2636 = vld [vmem:[%s1827 + $0x20] sm:$0xc]
        %v2637 = vld [vmem:[%s1827 + $0x28] sm:$0xc]
        %v2638 = vld [vmem:[%s1827 + $0x30] sm:$0xc]
        %v2639 = vld [vmem:[%s1827 + $0x38] sm:$0xc]
        %v2656 = vrot.slane %v2632, 6
        %v2657 = vrot.slane %v2656, 4
        %v2658 = vrot.slane %v2367, 6
        %v2659 = vsel %vm1681, %v2657, %v2658
        %v2660 = vrot.slane %v2633, 6
        %v2661 = vrot.slane %v2660, 4
        %v2662 = vrot.slane %v2368, 6
        %v2663 = vsel %vm1681, %v2661, %v2662
        %v2664 = vrot.slane %v2634, 6
        %v2665 = vrot.slane %v2664, 4
        %v2666 = vrot.slane %v2369, 6
        %v2667 = vsel %vm1681, %v2665, %v2666
        %v2668 = vrot.slane %v2635, 6
        %v2669 = vrot.slane %v2668, 4
        %v2670 = vrot.slane %v2370, 6
        %v2671 = vsel %vm1681, %v2669, %v2670
        %v2672 = vrot.slane %v2636, 6
        %v2673 = vrot.slane %v2672, 4
        %v2674 = vrot.slane %v2371, 6
        %v2675 = vsel %vm1681, %v2673, %v2674
        %v2676 = vrot.slane %v2637, 6
        %v2677 = vrot.slane %v2676, 4
        %v2678 = vrot.slane %v2372, 6
        %v2679 = vsel %vm1681, %v2677, %v2678
        %v2680 = vrot.slane %v2638, 6
        %v2681 = vrot.slane %v2680, 4
        %v2682 = vrot.slane %v2373, 6
        %v2683 = vsel %vm1681, %v2681, %v2682
        %v2684 = vrot.slane %v2639, 6
        %v2685 = vrot.slane %v2684, 4
        %v2686 = vrot.slane %v2374, 6
        %v2687 = vsel %vm1681, %v2685, %v2686
        %s2688 = scalar_lea.vmem %s3, 108
        %v2689 = vld [vmem:[%s2688] sm:$0xf]
        %v2690 = vld [vmem:[%s2688 + $0x4] sm:$0xf]
        %v2691 = vld [vmem:[%s2688 + $0x8] sm:$0xf]
        %v2692 = vunpack.c.l.b16 %v2659
        %v2693 = vunpack.c.l.b16 %v2663
        %v2694 = vunpack.c.l.b16 %v2667
        %v2695 = vunpack.c.l.b16 %v2671
        %v2696 = vunpack.c.l.b16 %v2675
        %v2697 = vunpack.c.l.b16 %v2679
        %v2698 = vunpack.c.l.b16 %v2683
        %v2699 = vunpack.c.l.b16 %v2687
        %v2700 = vpack.c.b16 %v2693, %v2692
        %v2701 = vpack.c.b16 %v2695, %v2694
        %v2702 = vpack.c.b16 %v2697, %v2696
        %v2703 = vpack.c.b16 %v2699, %v2698
        %v2707 = vunpack.c.l.b16 %v2689
        %v2708 = vunpack.c.l.b16 %v2690
        %v2709 = vunpack.c.l.b16 %v2691
        %v2710 = vpack.c.b16 %v2708, %v2707
        %v2711 = vpack.c.b16 %v2709, %v2709
        %v2714 = vsel %vm1024, %v2700, 0
        %v2717 = vsel %vm1024, %v2701, 0
        %v2720 = vsel %vm1024, %v2702, 0
        %v2723 = vsel %vm1024, %v2703, 0
        %v2726 = vsel %vm1037, %v2711, 0
        %2728 = vmatprep.subr.bf16.mxu0 0
        %2729 = vmatpush1.bf16.msra.mxu0 %v2710
        %2730 = vmatprep.subr.bf16.mxu0 0
        %2731 = vmatpush1.bf16.msra.mxu0 %v2726
        %2732 = vmatprep.subr.bf16.mxu0 0
        %2733 = vmatpush1.bf16.msra.mxu0 0
        %2734 = vmatprep.subr.bf16.mxu0 0
        %2735 = vmatpush1.bf16.msra.mxu0 0
        %2736 = vmatprep.subr.bf16.mxu0 0
        %2737 = vmatpush1.bf16.msra.mxu0 0
        %2738 = vmatprep.subr.bf16.mxu0 0
        %2739 = vmatpush1.bf16.msra.mxu0 0
        %2740 = vmatprep.subr.bf16.mxu0 0
        %2741 = vmatpush1.bf16.msra.mxu0 0
        %2742 = vmatprep.subr.bf16.mxu0 0
        %2743 = vmatpush1.bf16.msra.mxu0 0
        %2744 = vmatprep.subr.bf16.mxu0 0
        %2745 = vmatpush1.bf16.msra.mxu0 0
        %2746 = vmatprep.subr.bf16.mxu0 0
        %2747 = vmatpush1.bf16.msra.mxu0 0
        %2748 = vmatprep.subr.bf16.mxu0 0
        %2749 = vmatpush1.bf16.msra.mxu0 0
        %2750 = vmatprep.subr.bf16.mxu0 0
        %2751 = vmatpush1.bf16.msra.mxu0 0
        %2752 = vmatprep.subr.bf16.mxu0 0
        %2753 = vmatpush1.bf16.msra.mxu0 0
        %2754 = vmatprep.subr.bf16.mxu0 0
        %2755 = vmatpush1.bf16.msra.mxu0 0
        %2756 = vmatprep.subr.bf16.mxu0 0
        %2757 = vmatpush1.bf16.msra.mxu0 0
        %2758 = vmatprep.subr.bf16.mxu0 0
        %2759 = vmatpush1.bf16.msra.mxu0 0
        %2760 = vmatprep.mubr.bf16.mxu0 0
        %2761 = vmatmul.mubr.bf16.gmra.mrb[0].mxu0 %v2714
        %v2762 = vpop.f32.mrb[0].mxu0
        %v2763 = vadd.f32 0.0, %v2762
        %v2764 = vpop.f32.mrb[0].mxu0
        %v2765 = vpop.f32.mrb[0].mxu0
        %v2766 = vadd.f32 0.0, %v2765
        %v2767 = vpop.f32.mrb[0].mxu0
        %2768 = vmatprep.mubr.bf16.mxu0 0
        %2769 = vmatmul.mubr.bf16.gmra.mrb[0].mxu0 %v2717
        %v2770 = vpop.f32.mrb[0].mxu0
        %v2771 = vadd.f32 0.0, %v2770
        %v2772 = vpop.f32.mrb[0].mxu0
        %v2773 = vpop.f32.mrb[0].mxu0
        %v2774 = vadd.f32 0.0, %v2773
        %v2775 = vpop.f32.mrb[0].mxu0
        %2776 = vmatprep.mubr.bf16.mxu0 0
        %2777 = vmatmul.mubr.bf16.gmra.mrb[0].mxu0 %v2720
        %v2778 = vpop.f32.mrb[0].mxu0
        %v2779 = vadd.f32 0.0, %v2778
        %v2780 = vpop.f32.mrb[0].mxu0
        %v2781 = vpop.f32.mrb[0].mxu0
        %v2782 = vadd.f32 0.0, %v2781
        %v2783 = vpop.f32.mrb[0].mxu0
        %2784 = vmatprep.mubr.bf16.mxu0 0
        %2785 = vmatmul.mubr.bf16.gmra.mrb[0].mxu0 %v2723
        %v2786 = vpop.f32.mrb[0].mxu0
        %v2787 = vadd.f32 0.0, %v2786
        %v2788 = vpop.f32.mrb[0].mxu0
        %v2789 = vpop.f32.mrb[0].mxu0
        %v2790 = vadd.f32 0.0, %v2789
        %v2791 = vpop.f32.mrb[0].mxu0
        %2792 = vdwg.mxu0
        %v2793 = vadd.f32 %v2624, %v2763
        %v2794 = vadd.f32 %v2625, %v2766
        %v2795 = vadd.f32 %v2626, %v2771
        %v2796 = vadd.f32 %v2627, %v2774
        %v2797 = vadd.f32 %v2628, %v2779
        %v2798 = vadd.f32 %v2629, %v2782
        %v2799 = vadd.f32 %v2630, %v2787
        %v2800 = vadd.f32 %v2631, %v2790
        %s2801 = scalar_lea.vmem [#allocation2], 16
        %v2802 = vld [vmem:[%s2801] sm:$0xf]
        %v2803 = vld [vmem:[%s2801 + $0x8] sm:$0xf]
        %v2804 = vld [vmem:[%s2801 + $0x10] sm:$0xf]
        %v2805 = vld [vmem:[%s2801 + $0x18] sm:$0xf]
        %v2806 = vld [vmem:[%s2801 + $0x20] sm:$0xf]
        %v2807 = vld [vmem:[%s2801 + $0x28] sm:$0xf]
        %v2808 = vld [vmem:[%s2801 + $0x30] sm:$0xf]
        %v2809 = vld [vmem:[%s2801 + $0x38] sm:$0xf]
        %s2810 = scalar_lea.vmem %s3, 120
        %v2811 = vld [vmem:[%s2810] sm:$0xf]
        %v2812 = vld [vmem:[%s2810 + $0x4] sm:$0xf]
        %v2813 = vld [vmem:[%s2810 + $0x8] sm:$0xf]
        %v2822 = vunpack.c.l.b16 %v2802
        %v2823 = vunpack.c.l.b16 %v2803
        %v2824 = vunpack.c.l.b16 %v2804
        %v2825 = vunpack.c.l.b16 %v2805
        %v2826 = vunpack.c.l.b16 %v2806
        %v2827 = vunpack.c.l.b16 %v2807
        %v2828 = vunpack.c.l.b16 %v2808
        %v2829 = vunpack.c.l.b16 %v2809
        %v2830 = vpack.c.b16 %v2823, %v2822
        %v2831 = vpack.c.b16 %v2825, %v2824
        %v2832 = vpack.c.b16 %v2827, %v2826
        %v2833 = vpack.c.b16 %v2829, %v2828
        %v2837 = vunpack.c.l.b16 %v2811
        %v2838 = vunpack.c.l.b16 %v2812
        %v2839 = vunpack.c.l.b16 %v2813
        %v2840 = vpack.c.b16 %v2838, %v2837
        %v2841 = vpack.c.b16 %v2839, %v2839
        %v2844 = vsel %vm1024, %v2830, 0
        %v2847 = vsel %vm1024, %v2831, 0
        %v2850 = vsel %vm1024, %v2832, 0
        %v2853 = vsel %vm1024, %v2833, 0
        %v2856 = vsel %vm1037, %v2841, 0
        %2858 = vmatprep.subr.bf16.mxu0 0
        %2859 = vmatpush1.bf16.msra.mxu0 %v2840
        %2860 = vmatprep.subr.bf16.mxu0 0
        %2861 = vmatpush1.bf16.msra.mxu0 %v2856
        %2862 = vmatprep.subr.bf16.mxu0 0
        %2863 = vmatpush1.bf16.msra.mxu0 0
        %2864 = vmatprep.subr.bf16.mxu0 0
        %2865 = vmatpush1.bf16.msra.mxu0 0
        %2866 = vmatprep.subr.bf16.mxu0 0
        %2867 = vmatpush1.bf16.msra.mxu0 0
        %2868 = vmatprep.subr.bf16.mxu0 0
        %2869 = vmatpush1.bf16.msra.mxu0 0
        %2870 = vmatprep.subr.bf16.mxu0 0
        %2871 = vmatpush1.bf16.msra.mxu0 0
        %2872 = vmatprep.subr.bf16.mxu0 0
        %2873 = vmatpush1.bf16.msra.mxu0 0
        %2874 = vmatprep.subr.bf16.mxu0 0
        %2875 = vmatpush1.bf16.msra.mxu0 0
        %2876 = vmatprep.subr.bf16.mxu0 0
        %2877 = vmatpush1.bf16.msra.mxu0 0
        %2878 = vmatprep.subr.bf16.mxu0 0
        %2879 = vmatpush1.bf16.msra.mxu0 0
        %2880 = vmatprep.subr.bf16.mxu0 0
        %2881 = vmatpush1.bf16.msra.mxu0 0
        %2882 = vmatprep.subr.bf16.mxu0 0
        %2883 = vmatpush1.bf16.msra.mxu0 0
        %2884 = vmatprep.subr.bf16.mxu0 0
        %2885 = vmatpush1.bf16.msra.mxu0 0
        %2886 = vmatprep.subr.bf16.mxu0 0
        %2887 = vmatpush1.bf16.msra.mxu0 0
        %2888 = vmatprep.subr.bf16.mxu0 0
        %2889 = vmatpush1.bf16.msra.mxu0 0
        %2890 = vmatprep.mubr.bf16.mxu0 0
        %2891 = vmatmul.mubr.bf16.gmra.mrb[0].mxu0 %v2844
        %v2892 = vpop.f32.mrb[0].mxu0
        %v2893 = vadd.f32 0.0, %v2892
        %v2894 = vpop.f32.mrb[0].mxu0
        %v2895 = vpop.f32.mrb[0].mxu0
        %v2896 = vadd.f32 0.0, %v2895
        %v2897 = vpop.f32.mrb[0].mxu0
        %2898 = vmatprep.mubr.bf16.mxu0 0
        %2899 = vmatmul.mubr.bf16.gmra.mrb[0].mxu0 %v2847
        %v2900 = vpop.f32.mrb[0].mxu0
        %v2901 = vadd.f32 0.0, %v2900
        %v2902 = vpop.f32.mrb[0].mxu0
        %v2903 = vpop.f32.mrb[0].mxu0
        %v2904 = vadd.f32 0.0, %v2903
        %v2905 = vpop.f32.mrb[0].mxu0
        %2906 = vmatprep.mubr.bf16.mxu0 0
        %2907 = vmatmul.mubr.bf16.gmra.mrb[0].mxu0 %v2850
        %v2908 = vpop.f32.mrb[0].mxu0
        %v2909 = vadd.f32 0.0, %v2908
        %v2910 = vpop.f32.mrb[0].mxu0
        %v2911 = vpop.f32.mrb[0].mxu0
        %v2912 = vadd.f32 0.0, %v2911
        %v2913 = vpop.f32.mrb[0].mxu0
        %2914 = vmatprep.mubr.bf16.mxu0 0
        %2915 = vmatmul.mubr.bf16.gmra.mrb[0].mxu0 %v2853
        %v2916 = vpop.f32.mrb[0].mxu0
        %v2917 = vadd.f32 0.0, %v2916
        %v2918 = vpop.f32.mrb[0].mxu0
        %v2919 = vpop.f32.mrb[0].mxu0
        %v2920 = vadd.f32 0.0, %v2919
        %v2921 = vpop.f32.mrb[0].mxu0
        %2922 = vdwg.mxu0
        %v2923 = vadd.f32 %v2793, %v2893
        %v2924 = vadd.f32 %v2794, %v2896
        %v2925 = vadd.f32 %v2795, %v2901
        %v2926 = vadd.f32 %v2796, %v2904
        %v2927 = vadd.f32 %v2797, %v2909
        %v2928 = vadd.f32 %v2798, %v2912
        %v2929 = vadd.f32 %v2799, %v2917
        %v2930 = vadd.f32 %v2800, %v2920
        %v2931 = vld [vmem:[%s2801] sm:$0xf]
        %v2932 = vld [vmem:[%s2801 + $0x4] sm:$0x1]
        %v2933 = vld [vmem:[%s2801 + $0x8] sm:$0xf]
        %v2934 = vld [vmem:[%s2801 + $0xc] sm:$0x1]
        %v2935 = vld [vmem:[%s2801 + $0x10] sm:$0xf]
        %v2936 = vld [vmem:[%s2801 + $0x14] sm:$0x1]
        %v2937 = vld [vmem:[%s2801 + $0x18] sm:$0xf]
        %v2938 = vld [vmem:[%s2801 + $0x1c] sm:$0x1]
        %v2939 = vld [vmem:[%s2801 + $0x20] sm:$0xf]
        %v2940 = vld [vmem:[%s2801 + $0x24] sm:$0x1]
        %v2941 = vld [vmem:[%s2801 + $0x28] sm:$0xf]
        %v2942 = vld [vmem:[%s2801 + $0x2c] sm:$0x1]
        %v2943 = vld [vmem:[%s2801 + $0x30] sm:$0xf]
        %v2944 = vld [vmem:[%s2801 + $0x34] sm:$0x1]
        %v2945 = vld [vmem:[%s2801 + $0x38] sm:$0xf]
        %v2946 = vld [vmem:[%s2801 + $0x3c] sm:$0x1]
        %v2948 = vshrl.u32 %v2931, 16
        %v2950 = vrot.slane %v2948, 4
        %v2951 = vshll.u32 %v2931, 16
        %v2953 = vrot.slane %v2951, 5
        %v2954 = vor.u32 %v2950, %v2953
        %v2955 = vrot.slane %v2954, 4
        %v2957 = vshll.u32 %v2932, 16
        %v2959 = vrot.slane %v2957, 5
        %v2960 = vsel %vm886, %v2955, %v2959
        %v2962 = vshrl.u32 %v2933, 16
        %v2964 = vrot.slane %v2962, 4
        %v2965 = vshll.u32 %v2933, 16
        %v2967 = vrot.slane %v2965, 5
        %v2968 = vor.u32 %v2964, %v2967
        %v2969 = vrot.slane %v2968, 4
        %v2971 = vshll.u32 %v2934, 16
        %v2973 = vrot.slane %v2971, 5
        %v2974 = vsel %vm886, %v2969, %v2973
        %v2976 = vshrl.u32 %v2935, 16
        %v2978 = vrot.slane %v2976, 4
        %v2979 = vshll.u32 %v2935, 16
        %v2981 = vrot.slane %v2979, 5
        %v2982 = vor.u32 %v2978, %v2981
        %v2983 = vrot.slane %v2982, 4
        %v2985 = vshll.u32 %v2936, 16
        %v2987 = vrot.slane %v2985, 5
        %v2988 = vsel %vm886, %v2983, %v2987
        %v2990 = vshrl.u32 %v2937, 16
        %v2992 = vrot.slane %v2990, 4
        %v2993 = vshll.u32 %v2937, 16
        %v2995 = vrot.slane %v2993, 5
        %v2996 = vor.u32 %v2992, %v2995
        %v2997 = vrot.slane %v2996, 4
        %v2999 = vshll.u32 %v2938, 16
        %v3001 = vrot.slane %v2999, 5
        %v3002 = vsel %vm886, %v2997, %v3001
        %v3004 = vshrl.u32 %v2939, 16
        %v3006 = vrot.slane %v3004, 4
        %v3007 = vshll.u32 %v2939, 16
        %v3009 = vrot.slane %v3007, 5
        %v3010 = vor.u32 %v3006, %v3009
        %v3011 = vrot.slane %v3010, 4
        %v3013 = vshll.u32 %v2940, 16
        %v3015 = vrot.slane %v3013, 5
        %v3016 = vsel %vm886, %v3011, %v3015
        %v3018 = vshrl.u32 %v2941, 16
        %v3020 = vrot.slane %v3018, 4
        %v3021 = vshll.u32 %v2941, 16
        %v3023 = vrot.slane %v3021, 5
        %v3024 = vor.u32 %v3020, %v3023
        %v3025 = vrot.slane %v3024, 4
        %v3027 = vshll.u32 %v2942, 16
        %v3029 = vrot.slane %v3027, 5
        %v3030 = vsel %vm886, %v3025, %v3029
        %v3032 = vshrl.u32 %v2943, 16
        %v3034 = vrot.slane %v3032, 4
        %v3035 = vshll.u32 %v2943, 16
        %v3037 = vrot.slane %v3035, 5
        %v3038 = vor.u32 %v3034, %v3037
        %v3039 = vrot.slane %v3038, 4
        %v3041 = vshll.u32 %v2944, 16
        %v3043 = vrot.slane %v3041, 5
        %v3044 = vsel %vm886, %v3039, %v3043
        %v3046 = vshrl.u32 %v2945, 16
        %v3048 = vrot.slane %v3046, 4
        %v3049 = vshll.u32 %v2945, 16
        %v3051 = vrot.slane %v3049, 5
        %v3052 = vor.u32 %v3048, %v3051
        %v3053 = vrot.slane %v3052, 4
        %v3055 = vshll.u32 %v2946, 16
        %v3057 = vrot.slane %v3055, 5
        %v3058 = vsel %vm886, %v3053, %v3057
        %s3059 = scalar_lea.vmem %s3, 132
        %v3060 = vld [vmem:[%s3059] sm:$0xf]
        %v3061 = vld [vmem:[%s3059 + $0x4] sm:$0xf]
        %v3062 = vld [vmem:[%s3059 + $0x8] sm:$0xf]
        %v3063 = vunpack.c.l.b16 %v2960
        %v3064 = vunpack.c.l.b16 %v2974
        %v3065 = vunpack.c.l.b16 %v2988
        %v3066 = vunpack.c.l.b16 %v3002
        %v3067 = vunpack.c.l.b16 %v3016
        %v3068 = vunpack.c.l.b16 %v3030
        %v3069 = vunpack.c.l.b16 %v3044
        %v3070 = vunpack.c.l.b16 %v3058
        %v3071 = vpack.c.b16 %v3064, %v3063
        %v3072 = vpack.c.b16 %v3066, %v3065
        %v3073 = vpack.c.b16 %v3068, %v3067
        %v3074 = vpack.c.b16 %v3070, %v3069
        %v3078 = vunpack.c.l.b16 %v3060
        %v3079 = vunpack.c.l.b16 %v3061
        %v3080 = vunpack.c.l.b16 %v3062
        %v3081 = vpack.c.b16 %v3079, %v3078
        %v3082 = vpack.c.b16 %v3080, %v3080
        %v3085 = vsel %vm1024, %v3071, 0
        %v3088 = vsel %vm1024, %v3072, 0
        %v3091 = vsel %vm1024, %v3073, 0
        %v3094 = vsel %vm1024, %v3074, 0
        %v3097 = vsel %vm1037, %v3082, 0
        %3099 = vmatprep.subr.bf16.mxu0 0
        %3100 = vmatpush1.bf16.msra.mxu0 %v3081
        %3101 = vmatprep.subr.bf16.mxu0 0
        %3102 = vmatpush1.bf16.msra.mxu0 %v3097
        %3103 = vmatprep.subr.bf16.mxu0 0
        %3104 = vmatpush1.bf16.msra.mxu0 0
        %3105 = vmatprep.subr.bf16.mxu0 0
        %3106 = vmatpush1.bf16.msra.mxu0 0
        %3107 = vmatprep.subr.bf16.mxu0 0
        %3108 = vmatpush1.bf16.msra.mxu0 0
        %3109 = vmatprep.subr.bf16.mxu0 0
        %3110 = vmatpush1.bf16.msra.mxu0 0
        %3111 = vmatprep.subr.bf16.mxu0 0
        %3112 = vmatpush1.bf16.msra.mxu0 0
        %3113 = vmatprep.subr.bf16.mxu0 0
        %3114 = vmatpush1.bf16.msra.mxu0 0
        %3115 = vmatprep.subr.bf16.mxu0 0
        %3116 = vmatpush1.bf16.msra.mxu0 0
        %3117 = vmatprep.subr.bf16.mxu0 0
        %3118 = vmatpush1.bf16.msra.mxu0 0
        %3119 = vmatprep.subr.bf16.mxu0 0
        %3120 = vmatpush1.bf16.msra.mxu0 0
        %3121 = vmatprep.subr.bf16.mxu0 0
        %3122 = vmatpush1.bf16.msra.mxu0 0
        %3123 = vmatprep.subr.bf16.mxu0 0
        %3124 = vmatpush1.bf16.msra.mxu0 0
        %3125 = vmatprep.subr.bf16.mxu0 0
        %3126 = vmatpush1.bf16.msra.mxu0 0
        %3127 = vmatprep.subr.bf16.mxu0 0
        %3128 = vmatpush1.bf16.msra.mxu0 0
        %3129 = vmatprep.subr.bf16.mxu0 0
        %3130 = vmatpush1.bf16.msra.mxu0 0
        %3131 = vmatprep.mubr.bf16.mxu0 0
        %3132 = vmatmul.mubr.bf16.gmra.mrb[0].mxu0 %v3085
        %v3133 = vpop.f32.mrb[0].mxu0
        %v3134 = vadd.f32 0.0, %v3133
        %v3135 = vpop.f32.mrb[0].mxu0
        %v3136 = vpop.f32.mrb[0].mxu0
        %v3137 = vadd.f32 0.0, %v3136
        %v3138 = vpop.f32.mrb[0].mxu0
        %3139 = vmatprep.mubr.bf16.mxu0 0
        %3140 = vmatmul.mubr.bf16.gmra.mrb[0].mxu0 %v3088
        %v3141 = vpop.f32.mrb[0].mxu0
        %v3142 = vadd.f32 0.0, %v3141
        %v3143 = vpop.f32.mrb[0].mxu0
        %v3144 = vpop.f32.mrb[0].mxu0
        %v3145 = vadd.f32 0.0, %v3144
        %v3146 = vpop.f32.mrb[0].mxu0
        %3147 = vmatprep.mubr.bf16.mxu0 0
        %3148 = vmatmul.mubr.bf16.gmra.mrb[0].mxu0 %v3091
        %v3149 = vpop.f32.mrb[0].mxu0
        %v3150 = vadd.f32 0.0, %v3149
        %v3151 = vpop.f32.mrb[0].mxu0
        %v3152 = vpop.f32.mrb[0].mxu0
        %v3153 = vadd.f32 0.0, %v3152
        %v3154 = vpop.f32.mrb[0].mxu0
        %3155 = vmatprep.mubr.bf16.mxu0 0
        %3156 = vmatmul.mubr.bf16.gmra.mrb[0].mxu0 %v3094
        %v3157 = vpop.f32.mrb[0].mxu0
        %v3158 = vadd.f32 0.0, %v3157
        %v3159 = vpop.f32.mrb[0].mxu0
        %v3160 = vpop.f32.mrb[0].mxu0
        %v3161 = vadd.f32 0.0, %v3160
        %v3162 = vpop.f32.mrb[0].mxu0
        %3163 = vdwg.mxu0
        %v3164 = vadd.f32 %v2923, %v3134
        %v3165 = vadd.f32 %v2924, %v3137
        %v3166 = vadd.f32 %v2925, %v3142
        %v3167 = vadd.f32 %v2926, %v3145
        %v3168 = vadd.f32 %v2927, %v3150
        %v3169 = vadd.f32 %v2928, %v3153
        %v3170 = vadd.f32 %v2929, %v3158
        %v3171 = vadd.f32 %v2930, %v3161
        %v3172 = vld [vmem:[%s2801] sm:$0xe]
        %v3173 = vld [vmem:[%s2801 + $0x8] sm:$0xe]
        %v3174 = vld [vmem:[%s2801 + $0x10] sm:$0xe]
        %v3175 = vld [vmem:[%s2801 + $0x18] sm:$0xe]
        %v3176 = vld [vmem:[%s2801 + $0x20] sm:$0xe]
        %v3177 = vld [vmem:[%s2801 + $0x28] sm:$0xe]
        %v3178 = vld [vmem:[%s2801 + $0x30] sm:$0xe]
        %v3179 = vld [vmem:[%s2801 + $0x38] sm:$0xe]
        %v3196 = vrot.slane %v3172, 5
        %v3197 = vrot.slane %v3196, 4
        %v3198 = vrot.slane %v2932, 5
        %v3199 = vsel %vm1241, %v3197, %v3198
        %v3200 = vrot.slane %v3173, 5
        %v3201 = vrot.slane %v3200, 4
        %v3202 = vrot.slane %v2934, 5
        %v3203 = vsel %vm1241, %v3201, %v3202
        %v3204 = vrot.slane %v3174, 5
        %v3205 = vrot.slane %v3204, 4
        %v3206 = vrot.slane %v2936, 5
        %v3207 = vsel %vm1241, %v3205, %v3206
        %v3208 = vrot.slane %v3175, 5
        %v3209 = vrot.slane %v3208, 4
        %v3210 = vrot.slane %v2938, 5
        %v3211 = vsel %vm1241, %v3209, %v3210
        %v3212 = vrot.slane %v3176, 5
        %v3213 = vrot.slane %v3212, 4
        %v3214 = vrot.slane %v2940, 5
        %v3215 = vsel %vm1241, %v3213, %v3214
        %v3216 = vrot.slane %v3177, 5
        %v3217 = vrot.slane %v3216, 4
        %v3218 = vrot.slane %v2942, 5
        %v3219 = vsel %vm1241, %v3217, %v3218
        %v3220 = vrot.slane %v3178, 5
        %v3221 = vrot.slane %v3220, 4
        %v3222 = vrot.slane %v2944, 5
        %v3223 = vsel %vm1241, %v3221, %v3222
        %v3224 = vrot.slane %v3179, 5
        %v3225 = vrot.slane %v3224, 4
        %v3226 = vrot.slane %v2946, 5
        %v3227 = vsel %vm1241, %v3225, %v3226
        %s3228 = scalar_lea.vmem %s3, 144
        %v3229 = vld [vmem:[%s3228] sm:$0xf]
        %v3230 = vld [vmem:[%s3228 + $0x4] sm:$0xf]
        %v3231 = vld [vmem:[%s3228 + $0x8] sm:$0xf]
        %v3232 = vunpack.c.l.b16 %v3199
        %v3233 = vunpack.c.l.b16 %v3203
        %v3234 = vunpack.c.l.b16 %v3207
        %v3235 = vunpack.c.l.b16 %v3211
        %v3236 = vunpack.c.l.b16 %v3215
        %v3237 = vunpack.c.l.b16 %v3219
        %v3238 = vunpack.c.l.b16 %v3223
        %v3239 = vunpack.c.l.b16 %v3227
        %v3240 = vpack.c.b16 %v3233, %v3232
        %v3241 = vpack.c.b16 %v3235, %v3234
        %v3242 = vpack.c.b16 %v3237, %v3236
        %v3243 = vpack.c.b16 %v3239, %v3238
        %v3247 = vunpack.c.l.b16 %v3229
        %v3248 = vunpack.c.l.b16 %v3230
        %v3249 = vunpack.c.l.b16 %v3231
        %v3250 = vpack.c.b16 %v3248, %v3247
        %v3251 = vpack.c.b16 %v3249, %v3249
        %v3254 = vsel %vm1024, %v3240, 0
        %v3257 = vsel %vm1024, %v3241, 0
        %v3260 = vsel %vm1024, %v3242, 0
        %v3263 = vsel %vm1024, %v3243, 0
        %v3266 = vsel %vm1037, %v3251, 0
        %3268 = vmatprep.subr.bf16.mxu0 0
        %3269 = vmatpush1.bf16.msra.mxu0 %v3250
        %3270 = vmatprep.subr.bf16.mxu0 0
        %3271 = vmatpush1.bf16.msra.mxu0 %v3266
        %3272 = vmatprep.subr.bf16.mxu0 0
        %3273 = vmatpush1.bf16.msra.mxu0 0
        %3274 = vmatprep.subr.bf16.mxu0 0
        %3275 = vmatpush1.bf16.msra.mxu0 0
        %3276 = vmatprep.subr.bf16.mxu0 0
        %3277 = vmatpush1.bf16.msra.mxu0 0
        %3278 = vmatprep.subr.bf16.mxu0 0
        %3279 = vmatpush1.bf16.msra.mxu0 0
        %3280 = vmatprep.subr.bf16.mxu0 0
        %3281 = vmatpush1.bf16.msra.mxu0 0
        %3282 = vmatprep.subr.bf16.mxu0 0
        %3283 = vmatpush1.bf16.msra.mxu0 0
        %3284 = vmatprep.subr.bf16.mxu0 0
        %3285 = vmatpush1.bf16.msra.mxu0 0
        %3286 = vmatprep.subr.bf16.mxu0 0
        %3287 = vmatpush1.bf16.msra.mxu0 0
        %3288 = vmatprep.subr.bf16.mxu0 0
        %3289 = vmatpush1.bf16.msra.mxu0 0
        %3290 = vmatprep.subr.bf16.mxu0 0
        %3291 = vmatpush1.bf16.msra.mxu0 0
        %3292 = vmatprep.subr.bf16.mxu0 0
        %3293 = vmatpush1.bf16.msra.mxu0 0
        %3294 = vmatprep.subr.bf16.mxu0 0
        %3295 = vmatpush1.bf16.msra.mxu0 0
        %3296 = vmatprep.subr.bf16.mxu0 0
        %3297 = vmatpush1.bf16.msra.mxu0 0
        %3298 = vmatprep.subr.bf16.mxu0 0
        %3299 = vmatpush1.bf16.msra.mxu0 0
        %3300 = vmatprep.mubr.bf16.mxu0 0
        %3301 = vmatmul.mubr.bf16.gmra.mrb[0].mxu0 %v3254
        %v3302 = vpop.f32.mrb[0].mxu0
        %v3303 = vadd.f32 0.0, %v3302
        %v3304 = vpop.f32.mrb[0].mxu0
        %v3305 = vpop.f32.mrb[0].mxu0
        %v3306 = vadd.f32 0.0, %v3305
        %v3307 = vpop.f32.mrb[0].mxu0
        %3308 = vmatprep.mubr.bf16.mxu0 0
        %3309 = vmatmul.mubr.bf16.gmra.mrb[0].mxu0 %v3257
        %v3310 = vpop.f32.mrb[0].mxu0
        %v3311 = vadd.f32 0.0, %v3310
        %v3312 = vpop.f32.mrb[0].mxu0
        %v3313 = vpop.f32.mrb[0].mxu0
        %v3314 = vadd.f32 0.0, %v3313
        %v3315 = vpop.f32.mrb[0].mxu0
        %3316 = vmatprep.mubr.bf16.mxu0 0
        %3317 = vmatmul.mubr.bf16.gmra.mrb[0].mxu0 %v3260
        %v3318 = vpop.f32.mrb[0].mxu0
        %v3319 = vadd.f32 0.0, %v3318
        %v3320 = vpop.f32.mrb[0].mxu0
        %v3321 = vpop.f32.mrb[0].mxu0
        %v3322 = vadd.f32 0.0, %v3321
        %v3323 = vpop.f32.mrb[0].mxu0
        %3324 = vmatprep.mubr.bf16.mxu0 0
        %3325 = vmatmul.mubr.bf16.gmra.mrb[0].mxu0 %v3263
        %v3326 = vpop.f32.mrb[0].mxu0
        %v3327 = vadd.f32 0.0, %v3326
        %v3328 = vpop.f32.mrb[0].mxu0
        %v3329 = vpop.f32.mrb[0].mxu0
        %v3330 = vadd.f32 0.0, %v3329
        %v3331 = vpop.f32.mrb[0].mxu0
        %3332 = vdwg.mxu0
        %v3333 = vadd.f32 %v3164, %v3303
        %v3334 = vadd.f32 %v3165, %v3306
        %v3335 = vadd.f32 %v3166, %v3311
        %v3336 = vadd.f32 %v3167, %v3314
        %v3337 = vadd.f32 %v3168, %v3319
        %v3338 = vadd.f32 %v3169, %v3322
        %v3339 = vadd.f32 %v3170, %v3327
        %v3340 = vadd.f32 %v3171, %v3330
        %v3341 = vld [vmem:[%s2801 + $0x4] sm:$0x3]
        %v3342 = vld [vmem:[%s2801 + $0xc] sm:$0x3]
        %v3343 = vld [vmem:[%s2801 + $0x14] sm:$0x3]
        %v3344 = vld [vmem:[%s2801 + $0x1c] sm:$0x3]
        %v3345 = vld [vmem:[%s2801 + $0x24] sm:$0x3]
        %v3346 = vld [vmem:[%s2801 + $0x2c] sm:$0x3]
        %v3347 = vld [vmem:[%s2801 + $0x34] sm:$0x3]
        %v3348 = vld [vmem:[%s2801 + $0x3c] sm:$0x3]
        %v3350 = vshrl.u32 %v3172, 16
        %v3352 = vrot.slane %v3350, 5
        %v3353 = vshll.u32 %v3172, 16
        %v3355 = vrot.slane %v3353, 6
        %v3356 = vor.u32 %v3352, %v3355
        %v3357 = vrot.slane %v3356, 4
        %v3359 = vshrl.u32 %v3341, 16
        %v3361 = vrot.slane %v3359, 5
        %v3362 = vshll.u32 %v3341, 16
        %v3364 = vrot.slane %v3362, 6
        %v3365 = vor.u32 %v3361, %v3364
        %v3366 = vsel %vm1397, %v3357, %v3365
        %v3368 = vshrl.u32 %v3173, 16
        %v3370 = vrot.slane %v3368, 5
        %v3371 = vshll.u32 %v3173, 16
        %v3373 = vrot.slane %v3371, 6
        %v3374 = vor.u32 %v3370, %v3373
        %v3375 = vrot.slane %v3374, 4
        %v3377 = vshrl.u32 %v3342, 16
        %v3379 = vrot.slane %v3377, 5
        %v3380 = vshll.u32 %v3342, 16
        %v3382 = vrot.slane %v3380, 6
        %v3383 = vor.u32 %v3379, %v3382
        %v3384 = vsel %vm1397, %v3375, %v3383
        %v3386 = vshrl.u32 %v3174, 16
        %v3388 = vrot.slane %v3386, 5
        %v3389 = vshll.u32 %v3174, 16
        %v3391 = vrot.slane %v3389, 6
        %v3392 = vor.u32 %v3388, %v3391
        %v3393 = vrot.slane %v3392, 4
        %v3395 = vshrl.u32 %v3343, 16
        %v3397 = vrot.slane %v3395, 5
        %v3398 = vshll.u32 %v3343, 16
        %v3400 = vrot.slane %v3398, 6
        %v3401 = vor.u32 %v3397, %v3400
        %v3402 = vsel %vm1397, %v3393, %v3401
        %v3404 = vshrl.u32 %v3175, 16
        %v3406 = vrot.slane %v3404, 5
        %v3407 = vshll.u32 %v3175, 16
        %v3409 = vrot.slane %v3407, 6
        %v3410 = vor.u32 %v3406, %v3409
        %v3411 = vrot.slane %v3410, 4
        %v3413 = vshrl.u32 %v3344, 16
        %v3415 = vrot.slane %v3413, 5
        %v3416 = vshll.u32 %v3344, 16
        %v3418 = vrot.slane %v3416, 6
        %v3419 = vor.u32 %v3415, %v3418
        %v3420 = vsel %vm1397, %v3411, %v3419
        %v3422 = vshrl.u32 %v3176, 16
        %v3424 = vrot.slane %v3422, 5
        %v3425 = vshll.u32 %v3176, 16
        %v3427 = vrot.slane %v3425, 6
        %v3428 = vor.u32 %v3424, %v3427
        %v3429 = vrot.slane %v3428, 4
        %v3431 = vshrl.u32 %v3345, 16
        %v3433 = vrot.slane %v3431, 5
        %v3434 = vshll.u32 %v3345, 16
        %v3436 = vrot.slane %v3434, 6
        %v3437 = vor.u32 %v3433, %v3436
        %v3438 = vsel %vm1397, %v3429, %v3437
        %v3440 = vshrl.u32 %v3177, 16
        %v3442 = vrot.slane %v3440, 5
        %v3443 = vshll.u32 %v3177, 16
        %v3445 = vrot.slane %v3443, 6
        %v3446 = vor.u32 %v3442, %v3445
        %v3447 = vrot.slane %v3446, 4
        %v3449 = vshrl.u32 %v3346, 16
        %v3451 = vrot.slane %v3449, 5
        %v3452 = vshll.u32 %v3346, 16
        %v3454 = vrot.slane %v3452, 6
        %v3455 = vor.u32 %v3451, %v3454
        %v3456 = vsel %vm1397, %v3447, %v3455
        %v3458 = vshrl.u32 %v3178, 16
        %v3460 = vrot.slane %v3458, 5
        %v3461 = vshll.u32 %v3178, 16
        %v3463 = vrot.slane %v3461, 6
        %v3464 = vor.u32 %v3460, %v3463
        %v3465 = vrot.slane %v3464, 4
        %v3467 = vshrl.u32 %v3347, 16
        %v3469 = vrot.slane %v3467, 5
        %v3470 = vshll.u32 %v3347, 16
        %v3472 = vrot.slane %v3470, 6
        %v3473 = vor.u32 %v3469, %v3472
        %v3474 = vsel %vm1397, %v3465, %v3473
        %v3476 = vshrl.u32 %v3179, 16
        %v3478 = vrot.slane %v3476, 5
        %v3479 = vshll.u32 %v3179, 16
        %v3481 = vrot.slane %v3479, 6
        %v3482 = vor.u32 %v3478, %v3481
        %v3483 = vrot.slane %v3482, 4
        %v3485 = vshrl.u32 %v3348, 16
        %v3487 = vrot.slane %v3485, 5
        %v3488 = vshll.u32 %v3348, 16
        %v3490 = vrot.slane %v3488, 6
        %v3491 = vor.u32 %v3487, %v3490
        %v3492 = vsel %vm1397, %v3483, %v3491
        %s3493 = scalar_lea.vmem %s3, 156
        %v3494 = vld [vmem:[%s3493] sm:$0xf]
        %v3495 = vld [vmem:[%s3493 + $0x4] sm:$0xf]
        %v3496 = vld [vmem:[%s3493 + $0x8] sm:$0xf]
        %v3497 = vunpack.c.l.b16 %v3366
        %v3498 = vunpack.c.l.b16 %v3384
        %v3499 = vunpack.c.l.b16 %v3402
        %v3500 = vunpack.c.l.b16 %v3420
        %v3501 = vunpack.c.l.b16 %v3438
        %v3502 = vunpack.c.l.b16 %v3456
        %v3503 = vunpack.c.l.b16 %v3474
        %v3504 = vunpack.c.l.b16 %v3492
        %v3505 = vpack.c.b16 %v3498, %v3497
        %v3506 = vpack.c.b16 %v3500, %v3499
        %v3507 = vpack.c.b16 %v3502, %v3501
        %v3508 = vpack.c.b16 %v3504, %v3503
        %v3512 = vunpack.c.l.b16 %v3494
        %v3513 = vunpack.c.l.b16 %v3495
        %v3514 = vunpack.c.l.b16 %v3496
        %v3515 = vpack.c.b16 %v3513, %v3512
        %v3516 = vpack.c.b16 %v3514, %v3514
        %v3519 = vsel %vm1024, %v3505, 0
        %v3522 = vsel %vm1024, %v3506, 0
        %v3525 = vsel %vm1024, %v3507, 0
        %v3528 = vsel %vm1024, %v3508, 0
        %v3531 = vsel %vm1037, %v3516, 0
        %3533 = vmatprep.subr.bf16.mxu0 0
        %3534 = vmatpush1.bf16.msra.mxu0 %v3515
        %3535 = vmatprep.subr.bf16.mxu0 0
        %3536 = vmatpush1.bf16.msra.mxu0 %v3531
        %3537 = vmatprep.subr.bf16.mxu0 0
        %3538 = vmatpush1.bf16.msra.mxu0 0
        %3539 = vmatprep.subr.bf16.mxu0 0
        %3540 = vmatpush1.bf16.msra.mxu0 0
        %3541 = vmatprep.subr.bf16.mxu0 0
        %3542 = vmatpush1.bf16.msra.mxu0 0
        %3543 = vmatprep.subr.bf16.mxu0 0
        %3544 = vmatpush1.bf16.msra.mxu0 0
        %3545 = vmatprep.subr.bf16.mxu0 0
        %3546 = vmatpush1.bf16.msra.mxu0 0
        %3547 = vmatprep.subr.bf16.mxu0 0
        %3548 = vmatpush1.bf16.msra.mxu0 0
        %3549 = vmatprep.subr.bf16.mxu0 0
        %3550 = vmatpush1.bf16.msra.mxu0 0
        %3551 = vmatprep.subr.bf16.mxu0 0
        %3552 = vmatpush1.bf16.msra.mxu0 0
        %3553 = vmatprep.subr.bf16.mxu0 0
        %3554 = vmatpush1.bf16.msra.mxu0 0
        %3555 = vmatprep.subr.bf16.mxu0 0
        %3556 = vmatpush1.bf16.msra.mxu0 0
        %3557 = vmatprep.subr.bf16.mxu0 0
        %3558 = vmatpush1.bf16.msra.mxu0 0
        %3559 = vmatprep.subr.bf16.mxu0 0
        %3560 = vmatpush1.bf16.msra.mxu0 0
        %3561 = vmatprep.subr.bf16.mxu0 0
        %3562 = vmatpush1.bf16.msra.mxu0 0
        %3563 = vmatprep.subr.bf16.mxu0 0
        %3564 = vmatpush1.bf16.msra.mxu0 0
        %3565 = vmatprep.mubr.bf16.mxu0 0
        %3566 = vmatmul.mubr.bf16.gmra.mrb[0].mxu0 %v3519
        %v3567 = vpop.f32.mrb[0].mxu0
        %v3568 = vadd.f32 0.0, %v3567
        %v3569 = vpop.f32.mrb[0].mxu0
        %v3570 = vpop.f32.mrb[0].mxu0
        %v3571 = vadd.f32 0.0, %v3570
        %v3572 = vpop.f32.mrb[0].mxu0
        %3573 = vmatprep.mubr.bf16.mxu0 0
        %3574 = vmatmul.mubr.bf16.gmra.mrb[0].mxu0 %v3522
        %v3575 = vpop.f32.mrb[0].mxu0
        %v3576 = vadd.f32 0.0, %v3575
        %v3577 = vpop.f32.mrb[0].mxu0
        %v3578 = vpop.f32.mrb[0].mxu0
        %v3579 = vadd.f32 0.0, %v3578
        %v3580 = vpop.f32.mrb[0].mxu0
        %3581 = vmatprep.mubr.bf16.mxu0 0
        %3582 = vmatmul.mubr.bf16.gmra.mrb[0].mxu0 %v3525
        %v3583 = vpop.f32.mrb[0].mxu0
        %v3584 = vadd.f32 0.0, %v3583
        %v3585 = vpop.f32.mrb[0].mxu0
        %v3586 = vpop.f32.mrb[0].mxu0
        %v3587 = vadd.f32 0.0, %v3586
        %v3588 = vpop.f32.mrb[0].mxu0
        %3589 = vmatprep.mubr.bf16.mxu0 0
        %3590 = vmatmul.mubr.bf16.gmra.mrb[0].mxu0 %v3528
        %v3591 = vpop.f32.mrb[0].mxu0
        %v3592 = vadd.f32 0.0, %v3591
        %v3593 = vpop.f32.mrb[0].mxu0
        %v3594 = vpop.f32.mrb[0].mxu0
        %v3595 = vadd.f32 0.0, %v3594
        %v3596 = vpop.f32.mrb[0].mxu0
        %3597 = vdwg.mxu0
        %v3598 = vadd.f32 %v3333, %v3568
        %v3599 = vadd.f32 %v3334, %v3571
        %v3600 = vadd.f32 %v3335, %v3576
        %v3601 = vadd.f32 %v3336, %v3579
        %v3602 = vadd.f32 %v3337, %v3584
        %v3603 = vadd.f32 %v3338, %v3587
        %v3604 = vadd.f32 %v3339, %v3592
        %v3605 = vadd.f32 %v3340, %v3595
        %v3606 = vld [vmem:[%s2801] sm:$0xc]
        %v3607 = vld [vmem:[%s2801 + $0x8] sm:$0xc]
        %v3608 = vld [vmem:[%s2801 + $0x10] sm:$0xc]
        %v3609 = vld [vmem:[%s2801 + $0x18] sm:$0xc]
        %v3610 = vld [vmem:[%s2801 + $0x20] sm:$0xc]
        %v3611 = vld [vmem:[%s2801 + $0x28] sm:$0xc]
        %v3612 = vld [vmem:[%s2801 + $0x30] sm:$0xc]
        %v3613 = vld [vmem:[%s2801 + $0x38] sm:$0xc]
        %v3630 = vrot.slane %v3606, 6
        %v3631 = vrot.slane %v3630, 4
        %v3632 = vrot.slane %v3341, 6
        %v3633 = vsel %vm1681, %v3631, %v3632
        %v3634 = vrot.slane %v3607, 6
        %v3635 = vrot.slane %v3634, 4
        %v3636 = vrot.slane %v3342, 6
        %v3637 = vsel %vm1681, %v3635, %v3636
        %v3638 = vrot.slane %v3608, 6
        %v3639 = vrot.slane %v3638, 4
        %v3640 = vrot.slane %v3343, 6
        %v3641 = vsel %vm1681, %v3639, %v3640
        %v3642 = vrot.slane %v3609, 6
        %v3643 = vrot.slane %v3642, 4
        %v3644 = vrot.slane %v3344, 6
        %v3645 = vsel %vm1681, %v3643, %v3644
        %v3646 = vrot.slane %v3610, 6
        %v3647 = vrot.slane %v3646, 4
        %v3648 = vrot.slane %v3345, 6
        %v3649 = vsel %vm1681, %v3647, %v3648
        %v3650 = vrot.slane %v3611, 6
        %v3651 = vrot.slane %v3650, 4
        %v3652 = vrot.slane %v3346, 6
        %v3653 = vsel %vm1681, %v3651, %v3652
        %v3654 = vrot.slane %v3612, 6
        %v3655 = vrot.slane %v3654, 4
        %v3656 = vrot.slane %v3347, 6
        %v3657 = vsel %vm1681, %v3655, %v3656
        %v3658 = vrot.slane %v3613, 6
        %v3659 = vrot.slane %v3658, 4
        %v3660 = vrot.slane %v3348, 6
        %v3661 = vsel %vm1681, %v3659, %v3660
        %s3662 = scalar_lea.vmem %s3, 168
        %v3663 = vld [vmem:[%s3662] sm:$0xf]
        %v3664 = vld [vmem:[%s3662 + $0x4] sm:$0xf]
        %v3665 = vld [vmem:[%s3662 + $0x8] sm:$0xf]
        %v3666 = vunpack.c.l.b16 %v3633
        %v3667 = vunpack.c.l.b16 %v3637
        %v3668 = vunpack.c.l.b16 %v3641
        %v3669 = vunpack.c.l.b16 %v3645
        %v3670 = vunpack.c.l.b16 %v3649
        %v3671 = vunpack.c.l.b16 %v3653
        %v3672 = vunpack.c.l.b16 %v3657
        %v3673 = vunpack.c.l.b16 %v3661
        %v3674 = vpack.c.b16 %v3667, %v3666
        %v3675 = vpack.c.b16 %v3669, %v3668
        %v3676 = vpack.c.b16 %v3671, %v3670
        %v3677 = vpack.c.b16 %v3673, %v3672
        %v3681 = vunpack.c.l.b16 %v3663
        %v3682 = vunpack.c.l.b16 %v3664
        %v3683 = vunpack.c.l.b16 %v3665
        %v3684 = vpack.c.b16 %v3682, %v3681
        %v3685 = vpack.c.b16 %v3683, %v3683
        %v3688 = vsel %vm1024, %v3674, 0
        %v3691 = vsel %vm1024, %v3675, 0
        %v3694 = vsel %vm1024, %v3676, 0
        %v3697 = vsel %vm1024, %v3677, 0
        %v3700 = vsel %vm1037, %v3685, 0
        %3702 = vmatprep.subr.bf16.mxu0 0
        %3703 = vmatpush1.bf16.msra.mxu0 %v3684
        %3704 = vmatprep.subr.bf16.mxu0 0
        %3705 = vmatpush1.bf16.msra.mxu0 %v3700
        %3706 = vmatprep.subr.bf16.mxu0 0
        %3707 = vmatpush1.bf16.msra.mxu0 0
        %3708 = vmatprep.subr.bf16.mxu0 0
        %3709 = vmatpush1.bf16.msra.mxu0 0
        %3710 = vmatprep.subr.bf16.mxu0 0
        %3711 = vmatpush1.bf16.msra.mxu0 0
        %3712 = vmatprep.subr.bf16.mxu0 0
        %3713 = vmatpush1.bf16.msra.mxu0 0
        %3714 = vmatprep.subr.bf16.mxu0 0
        %3715 = vmatpush1.bf16.msra.mxu0 0
        %3716 = vmatprep.subr.bf16.mxu0 0
        %3717 = vmatpush1.bf16.msra.mxu0 0
        %3718 = vmatprep.subr.bf16.mxu0 0
        %3719 = vmatpush1.bf16.msra.mxu0 0
        %3720 = vmatprep.subr.bf16.mxu0 0
        %3721 = vmatpush1.bf16.msra.mxu0 0
        %3722 = vmatprep.subr.bf16.mxu0 0
        %3723 = vmatpush1.bf16.msra.mxu0 0
        %3724 = vmatprep.subr.bf16.mxu0 0
        %3725 = vmatpush1.bf16.msra.mxu0 0
        %3726 = vmatprep.subr.bf16.mxu0 0
        %3727 = vmatpush1.bf16.msra.mxu0 0
        %3728 = vmatprep.subr.bf16.mxu0 0
        %3729 = vmatpush1.bf16.msra.mxu0 0
        %3730 = vmatprep.subr.bf16.mxu0 0
        %3731 = vmatpush1.bf16.msra.mxu0 0
        %3732 = vmatprep.subr.bf16.mxu0 0
        %3733 = vmatpush1.bf16.msra.mxu0 0
        %3734 = vmatprep.mubr.bf16.mxu0 0
        %3735 = vmatmul.mubr.bf16.gmra.mrb[0].mxu0 %v3688
        %v3736 = vpop.f32.mrb[0].mxu0
        %v3737 = vadd.f32 0.0, %v3736
        %v3738 = vpop.f32.mrb[0].mxu0
        %v3739 = vpop.f32.mrb[0].mxu0
        %v3740 = vadd.f32 0.0, %v3739
        %v3741 = vpop.f32.mrb[0].mxu0
        %3742 = vmatprep.mubr.bf16.mxu0 0
        %3743 = vmatmul.mubr.bf16.gmra.mrb[0].mxu0 %v3691
        %v3744 = vpop.f32.mrb[0].mxu0
        %v3745 = vadd.f32 0.0, %v3744
        %v3746 = vpop.f32.mrb[0].mxu0
        %v3747 = vpop.f32.mrb[0].mxu0
        %v3748 = vadd.f32 0.0, %v3747
        %v3749 = vpop.f32.mrb[0].mxu0
        %3750 = vmatprep.mubr.bf16.mxu0 0
        %3751 = vmatmul.mubr.bf16.gmra.mrb[0].mxu0 %v3694
        %v3752 = vpop.f32.mrb[0].mxu0
        %v3753 = vadd.f32 0.0, %v3752
        %v3754 = vpop.f32.mrb[0].mxu0
        %v3755 = vpop.f32.mrb[0].mxu0
        %v3756 = vadd.f32 0.0, %v3755
        %v3757 = vpop.f32.mrb[0].mxu0
        %3758 = vmatprep.mubr.bf16.mxu0 0
        %3759 = vmatmul.mubr.bf16.gmra.mrb[0].mxu0 %v3697
        %v3760 = vpop.f32.mrb[0].mxu0
        %v3761 = vadd.f32 0.0, %v3760
        %v3762 = vpop.f32.mrb[0].mxu0
        %v3763 = vpop.f32.mrb[0].mxu0
        %v3764 = vadd.f32 0.0, %v3763
        %v3765 = vpop.f32.mrb[0].mxu0
        %3766 = vdwg.mxu0
        %v3767 = vadd.f32 %v3598, %v3737
        %v3768 = vadd.f32 %v3599, %v3740
        %v3769 = vadd.f32 %v3600, %v3745
        %v3770 = vadd.f32 %v3601, %v3748
        %v3771 = vadd.f32 %v3602, %v3753
        %v3772 = vadd.f32 %v3603, %v3756
        %v3773 = vadd.f32 %v3604, %v3761
        %v3774 = vadd.f32 %v3605, %v3764
        %s3775 = scalar_lea.vmem [#allocation2], 24
        %v3776 = vld [vmem:[%s3775] sm:$0xf]
        %v3777 = vld [vmem:[%s3775 + $0x8] sm:$0xf]
        %v3778 = vld [vmem:[%s3775 + $0x10] sm:$0xf]
        %v3779 = vld [vmem:[%s3775 + $0x18] sm:$0xf]
        %v3780 = vld [vmem:[%s3775 + $0x20] sm:$0xf]
        %v3781 = vld [vmem:[%s3775 + $0x28] sm:$0xf]
        %v3782 = vld [vmem:[%s3775 + $0x30] sm:$0xf]
        %v3783 = vld [vmem:[%s3775 + $0x38] sm:$0xf]
        %s3784 = scalar_lea.vmem %s3, 180
        %v3785 = vld [vmem:[%s3784] sm:$0xf]
        %v3786 = vld [vmem:[%s3784 + $0x4] sm:$0xf]
        %v3787 = vld [vmem:[%s3784 + $0x8] sm:$0xf]
        %v3796 = vunpack.c.l.b16 %v3776
        %v3797 = vunpack.c.l.b16 %v3777
        %v3798 = vunpack.c.l.b16 %v3778
        %v3799 = vunpack.c.l.b16 %v3779
        %v3800 = vunpack.c.l.b16 %v3780
        %v3801 = vunpack.c.l.b16 %v3781
        %v3802 = vunpack.c.l.b16 %v3782
        %v3803 = vunpack.c.l.b16 %v3783
        %v3804 = vpack.c.b16 %v3797, %v3796
        %v3805 = vpack.c.b16 %v3799, %v3798
        %v3806 = vpack.c.b16 %v3801, %v3800
        %v3807 = vpack.c.b16 %v3803, %v3802
        %v3811 = vunpack.c.l.b16 %v3785
        %v3812 = vunpack.c.l.b16 %v3786
        %v3813 = vunpack.c.l.b16 %v3787
        %v3814 = vpack.c.b16 %v3812, %v3811
        %v3815 = vpack.c.b16 %v3813, %v3813
        %v3818 = vsel %vm1024, %v3804, 0
        %v3821 = vsel %vm1024, %v3805, 0
        %v3824 = vsel %vm1024, %v3806, 0
        %v3827 = vsel %vm1024, %v3807, 0
        %v3830 = vsel %vm1037, %v3815, 0
        %3832 = vmatprep.subr.bf16.mxu0 0
        %3833 = vmatpush1.bf16.msra.mxu0 %v3814
        %3834 = vmatprep.subr.bf16.mxu0 0
        %3835 = vmatpush1.bf16.msra.mxu0 %v3830
        %3836 = vmatprep.subr.bf16.mxu0 0
        %3837 = vmatpush1.bf16.msra.mxu0 0
        %3838 = vmatprep.subr.bf16.mxu0 0
        %3839 = vmatpush1.bf16.msra.mxu0 0
        %3840 = vmatprep.subr.bf16.mxu0 0
        %3841 = vmatpush1.bf16.msra.mxu0 0
        %3842 = vmatprep.subr.bf16.mxu0 0
        %3843 = vmatpush1.bf16.msra.mxu0 0
        %3844 = vmatprep.subr.bf16.mxu0 0
        %3845 = vmatpush1.bf16.msra.mxu0 0
        %3846 = vmatprep.subr.bf16.mxu0 0
        %3847 = vmatpush1.bf16.msra.mxu0 0
        %3848 = vmatprep.subr.bf16.mxu0 0
        %3849 = vmatpush1.bf16.msra.mxu0 0
        %3850 = vmatprep.subr.bf16.mxu0 0
        %3851 = vmatpush1.bf16.msra.mxu0 0
        %3852 = vmatprep.subr.bf16.mxu0 0
        %3853 = vmatpush1.bf16.msra.mxu0 0
        %3854 = vmatprep.subr.bf16.mxu0 0
        %3855 = vmatpush1.bf16.msra.mxu0 0
        %3856 = vmatprep.subr.bf16.mxu0 0
        %3857 = vmatpush1.bf16.msra.mxu0 0
        %3858 = vmatprep.subr.bf16.mxu0 0
        %3859 = vmatpush1.bf16.msra.mxu0 0
        %3860 = vmatprep.subr.bf16.mxu0 0
        %3861 = vmatpush1.bf16.msra.mxu0 0
        %3862 = vmatprep.subr.bf16.mxu0 0
        %3863 = vmatpush1.bf16.msra.mxu0 0
        %3864 = vmatprep.mubr.bf16.mxu0 0
        %3865 = vmatmul.mubr.bf16.gmra.mrb[0].mxu0 %v3818
        %v3866 = vpop.f32.mrb[0].mxu0
        %v3867 = vadd.f32 0.0, %v3866
        %v3868 = vpop.f32.mrb[0].mxu0
        %v3869 = vpop.f32.mrb[0].mxu0
        %v3870 = vadd.f32 0.0, %v3869
        %v3871 = vpop.f32.mrb[0].mxu0
        %3872 = vmatprep.mubr.bf16.mxu0 0
        %3873 = vmatmul.mubr.bf16.gmra.mrb[0].mxu0 %v3821
        %v3874 = vpop.f32.mrb[0].mxu0
        %v3875 = vadd.f32 0.0, %v3874
        %v3876 = vpop.f32.mrb[0].mxu0
        %v3877 = vpop.f32.mrb[0].mxu0
        %v3878 = vadd.f32 0.0, %v3877
        %v3879 = vpop.f32.mrb[0].mxu0
        %3880 = vmatprep.mubr.bf16.mxu0 0
        %3881 = vmatmul.mubr.bf16.gmra.mrb[0].mxu0 %v3824
        %v3882 = vpop.f32.mrb[0].mxu0
        %v3883 = vadd.f32 0.0, %v3882
        %v3884 = vpop.f32.mrb[0].mxu0
        %v3885 = vpop.f32.mrb[0].mxu0
        %v3886 = vadd.f32 0.0, %v3885
        %v3887 = vpop.f32.mrb[0].mxu0
        %3888 = vmatprep.mubr.bf16.mxu0 0
        %3889 = vmatmul.mubr.bf16.gmra.mrb[0].mxu0 %v3827
        %v3890 = vpop.f32.mrb[0].mxu0
        %v3891 = vadd.f32 0.0, %v3890
        %v3892 = vpop.f32.mrb[0].mxu0
        %v3893 = vpop.f32.mrb[0].mxu0
        %v3894 = vadd.f32 0.0, %v3893
        %v3895 = vpop.f32.mrb[0].mxu0
        %3896 = vdwg.mxu0
        %v3897 = vadd.f32 %v3767, %v3867
        %v3898 = vadd.f32 %v3768, %v3870
        %v3899 = vadd.f32 %v3769, %v3875
        %v3900 = vadd.f32 %v3770, %v3878
        %v3901 = vadd.f32 %v3771, %v3883
        %v3902 = vadd.f32 %v3772, %v3886
        %v3903 = vadd.f32 %v3773, %v3891
        %v3904 = vadd.f32 %v3774, %v3894
        %v3905 = vld [vmem:[%s3775] sm:$0xf]
        %v3906 = vld [vmem:[%s3775 + $0x4] sm:$0x1]
        %v3907 = vld [vmem:[%s3775 + $0x8] sm:$0xf]
        %v3908 = vld [vmem:[%s3775 + $0xc] sm:$0x1]
        %v3909 = vld [vmem:[%s3775 + $0x10] sm:$0xf]
        %v3910 = vld [vmem:[%s3775 + $0x14] sm:$0x1]
        %v3911 = vld [vmem:[%s3775 + $0x18] sm:$0xf]
        %v3912 = vld [vmem:[%s3775 + $0x1c] sm:$0x1]
        %v3913 = vld [vmem:[%s3775 + $0x20] sm:$0xf]
        %v3914 = vld [vmem:[%s3775 + $0x24] sm:$0x1]
        %v3915 = vld [vmem:[%s3775 + $0x28] sm:$0xf]
        %v3916 = vld [vmem:[%s3775 + $0x2c] sm:$0x1]
        %v3917 = vld [vmem:[%s3775 + $0x30] sm:$0xf]
        %v3918 = vld [vmem:[%s3775 + $0x34] sm:$0x1]
        %v3919 = vld [vmem:[%s3775 + $0x38] sm:$0xf]
        %v3920 = vld [vmem:[%s3775 + $0x3c] sm:$0x1]
        %v3922 = vshrl.u32 %v3905, 16
        %v3924 = vrot.slane %v3922, 4
        %v3925 = vshll.u32 %v3905, 16
        %v3927 = vrot.slane %v3925, 5
        %v3928 = vor.u32 %v3924, %v3927
        %v3929 = vrot.slane %v3928, 4
        %v3931 = vshll.u32 %v3906, 16
        %v3933 = vrot.slane %v3931, 5
        %v3934 = vsel %vm886, %v3929, %v3933
        %v3936 = vshrl.u32 %v3907, 16
        %v3938 = vrot.slane %v3936, 4
        %v3939 = vshll.u32 %v3907, 16
        %v3941 = vrot.slane %v3939, 5
        %v3942 = vor.u32 %v3938, %v3941
        %v3943 = vrot.slane %v3942, 4
        %v3945 = vshll.u32 %v3908, 16
        %v3947 = vrot.slane %v3945, 5
        %v3948 = vsel %vm886, %v3943, %v3947
        %v3950 = vshrl.u32 %v3909, 16
        %v3952 = vrot.slane %v3950, 4
        %v3953 = vshll.u32 %v3909, 16
        %v3955 = vrot.slane %v3953, 5
        %v3956 = vor.u32 %v3952, %v3955
        %v3957 = vrot.slane %v3956, 4
        %v3959 = vshll.u32 %v3910, 16
        %v3961 = vrot.slane %v3959, 5
        %v3962 = vsel %vm886, %v3957, %v3961
        %v3964 = vshrl.u32 %v3911, 16
        %v3966 = vrot.slane %v3964, 4
        %v3967 = vshll.u32 %v3911, 16
        %v3969 = vrot.slane %v3967, 5
        %v3970 = vor.u32 %v3966, %v3969
        %v3971 = vrot.slane %v3970, 4
        %v3973 = vshll.u32 %v3912, 16
        %v3975 = vrot.slane %v3973, 5
        %v3976 = vsel %vm886, %v3971, %v3975
        %v3978 = vshrl.u32 %v3913, 16
        %v3980 = vrot.slane %v3978, 4
        %v3981 = vshll.u32 %v3913, 16
        %v3983 = vrot.slane %v3981, 5
        %v3984 = vor.u32 %v3980, %v3983
        %v3985 = vrot.slane %v3984, 4
        %v3987 = vshll.u32 %v3914, 16
        %v3989 = vrot.slane %v3987, 5
        %v3990 = vsel %vm886, %v3985, %v3989
        %v3992 = vshrl.u32 %v3915, 16
        %v3994 = vrot.slane %v3992, 4
        %v3995 = vshll.u32 %v3915, 16
        %v3997 = vrot.slane %v3995, 5
        %v3998 = vor.u32 %v3994, %v3997
        %v3999 = vrot.slane %v3998, 4
        %v4001 = vshll.u32 %v3916, 16
        %v4003 = vrot.slane %v4001, 5
        %v4004 = vsel %vm886, %v3999, %v4003
        %v4006 = vshrl.u32 %v3917, 16
        %v4008 = vrot.slane %v4006, 4
        %v4009 = vshll.u32 %v3917, 16
        %v4011 = vrot.slane %v4009, 5
        %v4012 = vor.u32 %v4008, %v4011
        %v4013 = vrot.slane %v4012, 4
        %v4015 = vshll.u32 %v3918, 16
        %v4017 = vrot.slane %v4015, 5
        %v4018 = vsel %vm886, %v4013, %v4017
        %v4020 = vshrl.u32 %v3919, 16
        %v4022 = vrot.slane %v4020, 4
        %v4023 = vshll.u32 %v3919, 16
        %v4025 = vrot.slane %v4023, 5
        %v4026 = vor.u32 %v4022, %v4025
        %v4027 = vrot.slane %v4026, 4
        %v4029 = vshll.u32 %v3920, 16
        %v4031 = vrot.slane %v4029, 5
        %v4032 = vsel %vm886, %v4027, %v4031
        %s4033 = scalar_lea.vmem %s3, 192
        %v4034 = vld [vmem:[%s4033] sm:$0xf]
        %v4035 = vld [vmem:[%s4033 + $0x4] sm:$0xf]
        %v4036 = vld [vmem:[%s4033 + $0x8] sm:$0xf]
        %v4037 = vunpack.c.l.b16 %v3934
        %v4038 = vunpack.c.l.b16 %v3948
        %v4039 = vunpack.c.l.b16 %v3962
        %v4040 = vunpack.c.l.b16 %v3976
        %v4041 = vunpack.c.l.b16 %v3990
        %v4042 = vunpack.c.l.b16 %v4004
        %v4043 = vunpack.c.l.b16 %v4018
        %v4044 = vunpack.c.l.b16 %v4032
        %v4045 = vpack.c.b16 %v4038, %v4037
        %v4046 = vpack.c.b16 %v4040, %v4039
        %v4047 = vpack.c.b16 %v4042, %v4041
        %v4048 = vpack.c.b16 %v4044, %v4043
        %v4052 = vunpack.c.l.b16 %v4034
        %v4053 = vunpack.c.l.b16 %v4035
        %v4054 = vunpack.c.l.b16 %v4036
        %v4055 = vpack.c.b16 %v4053, %v4052
        %v4056 = vpack.c.b16 %v4054, %v4054
        %v4059 = vsel %vm1024, %v4045, 0
        %v4062 = vsel %vm1024, %v4046, 0
        %v4065 = vsel %vm1024, %v4047, 0
        %v4068 = vsel %vm1024, %v4048, 0
        %v4071 = vsel %vm1037, %v4056, 0
        %4073 = vmatprep.subr.bf16.mxu0 0
        %4074 = vmatpush1.bf16.msra.mxu0 %v4055
        %4075 = vmatprep.subr.bf16.mxu0 0
        %4076 = vmatpush1.bf16.msra.mxu0 %v4071
        %4077 = vmatprep.subr.bf16.mxu0 0
        %4078 = vmatpush1.bf16.msra.mxu0 0
        %4079 = vmatprep.subr.bf16.mxu0 0
        %4080 = vmatpush1.bf16.msra.mxu0 0
        %4081 = vmatprep.subr.bf16.mxu0 0
        %4082 = vmatpush1.bf16.msra.mxu0 0
        %4083 = vmatprep.subr.bf16.mxu0 0
        %4084 = vmatpush1.bf16.msra.mxu0 0
        %4085 = vmatprep.subr.bf16.mxu0 0
        %4086 = vmatpush1.bf16.msra.mxu0 0
        %4087 = vmatprep.subr.bf16.mxu0 0
        %4088 = vmatpush1.bf16.msra.mxu0 0
        %4089 = vmatprep.subr.bf16.mxu0 0
        %4090 = vmatpush1.bf16.msra.mxu0 0
        %4091 = vmatprep.subr.bf16.mxu0 0
        %4092 = vmatpush1.bf16.msra.mxu0 0
        %4093 = vmatprep.subr.bf16.mxu0 0
        %4094 = vmatpush1.bf16.msra.mxu0 0
        %4095 = vmatprep.subr.bf16.mxu0 0
        %4096 = vmatpush1.bf16.msra.mxu0 0
        %4097 = vmatprep.subr.bf16.mxu0 0
        %4098 = vmatpush1.bf16.msra.mxu0 0
        %4099 = vmatprep.subr.bf16.mxu0 0
        %4100 = vmatpush1.bf16.msra.mxu0 0
        %4101 = vmatprep.subr.bf16.mxu0 0
        %4102 = vmatpush1.bf16.msra.mxu0 0
        %4103 = vmatprep.subr.bf16.mxu0 0
        %4104 = vmatpush1.bf16.msra.mxu0 0
        %4105 = vmatprep.mubr.bf16.mxu0 0
        %4106 = vmatmul.mubr.bf16.gmra.mrb[0].mxu0 %v4059
        %v4107 = vpop.f32.mrb[0].mxu0
        %v4108 = vadd.f32 0.0, %v4107
        %v4109 = vpop.f32.mrb[0].mxu0
        %v4110 = vpop.f32.mrb[0].mxu0
        %v4111 = vadd.f32 0.0, %v4110
        %v4112 = vpop.f32.mrb[0].mxu0
        %4113 = vmatprep.mubr.bf16.mxu0 0
        %4114 = vmatmul.mubr.bf16.gmra.mrb[0].mxu0 %v4062
        %v4115 = vpop.f32.mrb[0].mxu0
        %v4116 = vadd.f32 0.0, %v4115
        %v4117 = vpop.f32.mrb[0].mxu0
        %v4118 = vpop.f32.mrb[0].mxu0
        %v4119 = vadd.f32 0.0, %v4118
        %v4120 = vpop.f32.mrb[0].mxu0
        %4121 = vmatprep.mubr.bf16.mxu0 0
        %4122 = vmatmul.mubr.bf16.gmra.mrb[0].mxu0 %v4065
        %v4123 = vpop.f32.mrb[0].mxu0
        %v4124 = vadd.f32 0.0, %v4123
        %v4125 = vpop.f32.mrb[0].mxu0
        %v4126 = vpop.f32.mrb[0].mxu0
        %v4127 = vadd.f32 0.0, %v4126
        %v4128 = vpop.f32.mrb[0].mxu0
        %4129 = vmatprep.mubr.bf16.mxu0 0
        %4130 = vmatmul.mubr.bf16.gmra.mrb[0].mxu0 %v4068
        %v4131 = vpop.f32.mrb[0].mxu0
        %v4132 = vadd.f32 0.0, %v4131
        %v4133 = vpop.f32.mrb[0].mxu0
        %v4134 = vpop.f32.mrb[0].mxu0
        %v4135 = vadd.f32 0.0, %v4134
        %v4136 = vpop.f32.mrb[0].mxu0
        %4137 = vdwg.mxu0
        %v4138 = vadd.f32 %v3897, %v4108
        %v4139 = vadd.f32 %v3898, %v4111
        %v4140 = vadd.f32 %v3899, %v4116
        %v4141 = vadd.f32 %v3900, %v4119
        %v4142 = vadd.f32 %v3901, %v4124
        %v4143 = vadd.f32 %v3902, %v4127
        %v4144 = vadd.f32 %v3903, %v4132
        %v4145 = vadd.f32 %v3904, %v4135
        %v4146 = vld [vmem:[%s3775] sm:$0xe]
        %v4147 = vld [vmem:[%s3775 + $0x8] sm:$0xe]
        %v4148 = vld [vmem:[%s3775 + $0x10] sm:$0xe]
        %v4149 = vld [vmem:[%s3775 + $0x18] sm:$0xe]
        %v4150 = vld [vmem:[%s3775 + $0x20] sm:$0xe]
        %v4151 = vld [vmem:[%s3775 + $0x28] sm:$0xe]
        %v4152 = vld [vmem:[%s3775 + $0x30] sm:$0xe]
        %v4153 = vld [vmem:[%s3775 + $0x38] sm:$0xe]
        %v4170 = vrot.slane %v4146, 5
        %v4171 = vrot.slane %v4170, 4
        %v4172 = vrot.slane %v3906, 5
        %v4173 = vsel %vm1241, %v4171, %v4172
        %v4174 = vrot.slane %v4147, 5
        %v4175 = vrot.slane %v4174, 4
        %v4176 = vrot.slane %v3908, 5
        %v4177 = vsel %vm1241, %v4175, %v4176
        %v4178 = vrot.slane %v4148, 5
        %v4179 = vrot.slane %v4178, 4
        %v4180 = vrot.slane %v3910, 5
        %v4181 = vsel %vm1241, %v4179, %v4180
        %v4182 = vrot.slane %v4149, 5
        %v4183 = vrot.slane %v4182, 4
        %v4184 = vrot.slane %v3912, 5
        %v4185 = vsel %vm1241, %v4183, %v4184
        %v4186 = vrot.slane %v4150, 5
        %v4187 = vrot.slane %v4186, 4
        %v4188 = vrot.slane %v3914, 5
        %v4189 = vsel %vm1241, %v4187, %v4188
        %v4190 = vrot.slane %v4151, 5
        %v4191 = vrot.slane %v4190, 4
        %v4192 = vrot.slane %v3916, 5
        %v4193 = vsel %vm1241, %v4191, %v4192
        %v4194 = vrot.slane %v4152, 5
        %v4195 = vrot.slane %v4194, 4
        %v4196 = vrot.slane %v3918, 5
        %v4197 = vsel %vm1241, %v4195, %v4196
        %v4198 = vrot.slane %v4153, 5
        %v4199 = vrot.slane %v4198, 4
        %v4200 = vrot.slane %v3920, 5
        %v4201 = vsel %vm1241, %v4199, %v4200
        %s4202 = scalar_lea.vmem %s3, 204
        %v4203 = vld [vmem:[%s4202] sm:$0xf]
        %v4204 = vld [vmem:[%s4202 + $0x4] sm:$0xf]
        %v4205 = vld [vmem:[%s4202 + $0x8] sm:$0xf]
        %v4206 = vunpack.c.l.b16 %v4173
        %v4207 = vunpack.c.l.b16 %v4177
        %v4208 = vunpack.c.l.b16 %v4181
        %v4209 = vunpack.c.l.b16 %v4185
        %v4210 = vunpack.c.l.b16 %v4189
        %v4211 = vunpack.c.l.b16 %v4193
        %v4212 = vunpack.c.l.b16 %v4197
        %v4213 = vunpack.c.l.b16 %v4201
        %v4214 = vpack.c.b16 %v4207, %v4206
        %v4215 = vpack.c.b16 %v4209, %v4208
        %v4216 = vpack.c.b16 %v4211, %v4210
        %v4217 = vpack.c.b16 %v4213, %v4212
        %v4221 = vunpack.c.l.b16 %v4203
        %v4222 = vunpack.c.l.b16 %v4204
        %v4223 = vunpack.c.l.b16 %v4205
        %v4224 = vpack.c.b16 %v4222, %v4221
        %v4225 = vpack.c.b16 %v4223, %v4223
        %v4228 = vsel %vm1024, %v4214, 0
        %v4231 = vsel %vm1024, %v4215, 0
        %v4234 = vsel %vm1024, %v4216, 0
        %v4237 = vsel %vm1024, %v4217, 0
        %v4240 = vsel %vm1037, %v4225, 0
        %4242 = vmatprep.subr.bf16.mxu0 0
        %4243 = vmatpush1.bf16.msra.mxu0 %v4224
        %4244 = vmatprep.subr.bf16.mxu0 0
        %4245 = vmatpush1.bf16.msra.mxu0 %v4240
        %4246 = vmatprep.subr.bf16.mxu0 0
        %4247 = vmatpush1.bf16.msra.mxu0 0
        %4248 = vmatprep.subr.bf16.mxu0 0
        %4249 = vmatpush1.bf16.msra.mxu0 0
        %4250 = vmatprep.subr.bf16.mxu0 0
        %4251 = vmatpush1.bf16.msra.mxu0 0
        %4252 = vmatprep.subr.bf16.mxu0 0
        %4253 = vmatpush1.bf16.msra.mxu0 0
        %4254 = vmatprep.subr.bf16.mxu0 0
        %4255 = vmatpush1.bf16.msra.mxu0 0
        %4256 = vmatprep.subr.bf16.mxu0 0
        %4257 = vmatpush1.bf16.msra.mxu0 0
        %4258 = vmatprep.subr.bf16.mxu0 0
        %4259 = vmatpush1.bf16.msra.mxu0 0
        %4260 = vmatprep.subr.bf16.mxu0 0
        %4261 = vmatpush1.bf16.msra.mxu0 0
        %4262 = vmatprep.subr.bf16.mxu0 0
        %4263 = vmatpush1.bf16.msra.mxu0 0
        %4264 = vmatprep.subr.bf16.mxu0 0
        %4265 = vmatpush1.bf16.msra.mxu0 0
        %4266 = vmatprep.subr.bf16.mxu0 0
        %4267 = vmatpush1.bf16.msra.mxu0 0
        %4268 = vmatprep.subr.bf16.mxu0 0
        %4269 = vmatpush1.bf16.msra.mxu0 0
        %4270 = vmatprep.subr.bf16.mxu0 0
        %4271 = vmatpush1.bf16.msra.mxu0 0
        %4272 = vmatprep.subr.bf16.mxu0 0
        %4273 = vmatpush1.bf16.msra.mxu0 0
        %4274 = vmatprep.mubr.bf16.mxu0 0
        %4275 = vmatmul.mubr.bf16.gmra.mrb[0].mxu0 %v4228
        %v4276 = vpop.f32.mrb[0].mxu0
        %v4277 = vadd.f32 0.0, %v4276
        %v4278 = vpop.f32.mrb[0].mxu0
        %v4279 = vpop.f32.mrb[0].mxu0
        %v4280 = vadd.f32 0.0, %v4279
        %v4281 = vpop.f32.mrb[0].mxu0
        %4282 = vmatprep.mubr.bf16.mxu0 0
        %4283 = vmatmul.mubr.bf16.gmra.mrb[0].mxu0 %v4231
        %v4284 = vpop.f32.mrb[0].mxu0
        %v4285 = vadd.f32 0.0, %v4284
        %v4286 = vpop.f32.mrb[0].mxu0
        %v4287 = vpop.f32.mrb[0].mxu0
        %v4288 = vadd.f32 0.0, %v4287
        %v4289 = vpop.f32.mrb[0].mxu0
        %4290 = vmatprep.mubr.bf16.mxu0 0
        %4291 = vmatmul.mubr.bf16.gmra.mrb[0].mxu0 %v4234
        %v4292 = vpop.f32.mrb[0].mxu0
        %v4293 = vadd.f32 0.0, %v4292
        %v4294 = vpop.f32.mrb[0].mxu0
        %v4295 = vpop.f32.mrb[0].mxu0
        %v4296 = vadd.f32 0.0, %v4295
        %v4297 = vpop.f32.mrb[0].mxu0
        %4298 = vmatprep.mubr.bf16.mxu0 0
        %4299 = vmatmul.mubr.bf16.gmra.mrb[0].mxu0 %v4237
        %v4300 = vpop.f32.mrb[0].mxu0
        %v4301 = vadd.f32 0.0, %v4300
        %v4302 = vpop.f32.mrb[0].mxu0
        %v4303 = vpop.f32.mrb[0].mxu0
        %v4304 = vadd.f32 0.0, %v4303
        %v4305 = vpop.f32.mrb[0].mxu0
        %4306 = vdwg.mxu0
        %v4307 = vadd.f32 %v4138, %v4277
        %v4308 = vadd.f32 %v4139, %v4280
        %v4309 = vadd.f32 %v4140, %v4285
        %v4310 = vadd.f32 %v4141, %v4288
        %v4311 = vadd.f32 %v4142, %v4293
        %v4312 = vadd.f32 %v4143, %v4296
        %v4313 = vadd.f32 %v4144, %v4301
        %v4314 = vadd.f32 %v4145, %v4304
        %v4315 = vld [vmem:[%s3775 + $0x4] sm:$0x3]
        %v4316 = vld [vmem:[%s3775 + $0xc] sm:$0x3]
        %v4317 = vld [vmem:[%s3775 + $0x14] sm:$0x3]
        %v4318 = vld [vmem:[%s3775 + $0x1c] sm:$0x3]
        %v4319 = vld [vmem:[%s3775 + $0x24] sm:$0x3]
        %v4320 = vld [vmem:[%s3775 + $0x2c] sm:$0x3]
        %v4321 = vld [vmem:[%s3775 + $0x34] sm:$0x3]
        %v4322 = vld [vmem:[%s3775 + $0x3c] sm:$0x3]
        %v4324 = vshrl.u32 %v4146, 16
        %v4326 = vrot.slane %v4324, 5
        %v4327 = vshll.u32 %v4146, 16
        %v4329 = vrot.slane %v4327, 6
        %v4330 = vor.u32 %v4326, %v4329
        %v4331 = vrot.slane %v4330, 4
        %v4333 = vshrl.u32 %v4315, 16
        %v4335 = vrot.slane %v4333, 5
        %v4336 = vshll.u32 %v4315, 16
        %v4338 = vrot.slane %v4336, 6
        %v4339 = vor.u32 %v4335, %v4338
        %v4340 = vsel %vm1397, %v4331, %v4339
        %v4342 = vshrl.u32 %v4147, 16
        %v4344 = vrot.slane %v4342, 5
        %v4345 = vshll.u32 %v4147, 16
        %v4347 = vrot.slane %v4345, 6
        %v4348 = vor.u32 %v4344, %v4347
        %v4349 = vrot.slane %v4348, 4
        %v4351 = vshrl.u32 %v4316, 16
        %v4353 = vrot.slane %v4351, 5
        %v4354 = vshll.u32 %v4316, 16
        %v4356 = vrot.slane %v4354, 6
        %v4357 = vor.u32 %v4353, %v4356
        %v4358 = vsel %vm1397, %v4349, %v4357
        %v4360 = vshrl.u32 %v4148, 16
        %v4362 = vrot.slane %v4360, 5
        %v4363 = vshll.u32 %v4148, 16
        %v4365 = vrot.slane %v4363, 6
        %v4366 = vor.u32 %v4362, %v4365
        %v4367 = vrot.slane %v4366, 4
        %v4369 = vshrl.u32 %v4317, 16
        %v4371 = vrot.slane %v4369, 5
        %v4372 = vshll.u32 %v4317, 16
        %v4374 = vrot.slane %v4372, 6
        %v4375 = vor.u32 %v4371, %v4374
        %v4376 = vsel %vm1397, %v4367, %v4375
        %v4378 = vshrl.u32 %v4149, 16
        %v4380 = vrot.slane %v4378, 5
        %v4381 = vshll.u32 %v4149, 16
        %v4383 = vrot.slane %v4381, 6
        %v4384 = vor.u32 %v4380, %v4383
        %v4385 = vrot.slane %v4384, 4
        %v4387 = vshrl.u32 %v4318, 16
        %v4389 = vrot.slane %v4387, 5
        %v4390 = vshll.u32 %v4318, 16
        %v4392 = vrot.slane %v4390, 6
        %v4393 = vor.u32 %v4389, %v4392
        %v4394 = vsel %vm1397, %v4385, %v4393
        %v4396 = vshrl.u32 %v4150, 16
        %v4398 = vrot.slane %v4396, 5
        %v4399 = vshll.u32 %v4150, 16
        %v4401 = vrot.slane %v4399, 6
        %v4402 = vor.u32 %v4398, %v4401
        %v4403 = vrot.slane %v4402, 4
        %v4405 = vshrl.u32 %v4319, 16
        %v4407 = vrot.slane %v4405, 5
        %v4408 = vshll.u32 %v4319, 16
        %v4410 = vrot.slane %v4408, 6
        %v4411 = vor.u32 %v4407, %v4410
        %v4412 = vsel %vm1397, %v4403, %v4411
        %v4414 = vshrl.u32 %v4151, 16
        %v4416 = vrot.slane %v4414, 5
        %v4417 = vshll.u32 %v4151, 16
        %v4419 = vrot.slane %v4417, 6
        %v4420 = vor.u32 %v4416, %v4419
        %v4421 = vrot.slane %v4420, 4
        %v4423 = vshrl.u32 %v4320, 16
        %v4425 = vrot.slane %v4423, 5
        %v4426 = vshll.u32 %v4320, 16
        %v4428 = vrot.slane %v4426, 6
        %v4429 = vor.u32 %v4425, %v4428
        %v4430 = vsel %vm1397, %v4421, %v4429
        %v4432 = vshrl.u32 %v4152, 16
        %v4434 = vrot.slane %v4432, 5
        %v4435 = vshll.u32 %v4152, 16
        %v4437 = vrot.slane %v4435, 6
        %v4438 = vor.u32 %v4434, %v4437
        %v4439 = vrot.slane %v4438, 4
        %v4441 = vshrl.u32 %v4321, 16
        %v4443 = vrot.slane %v4441, 5
        %v4444 = vshll.u32 %v4321, 16
        %v4446 = vrot.slane %v4444, 6
        %v4447 = vor.u32 %v4443, %v4446
        %v4448 = vsel %vm1397, %v4439, %v4447
        %v4450 = vshrl.u32 %v4153, 16
        %v4452 = vrot.slane %v4450, 5
        %v4453 = vshll.u32 %v4153, 16
        %v4455 = vrot.slane %v4453, 6
        %v4456 = vor.u32 %v4452, %v4455
        %v4457 = vrot.slane %v4456, 4
        %v4459 = vshrl.u32 %v4322, 16
        %v4461 = vrot.slane %v4459, 5
        %v4462 = vshll.u32 %v4322, 16
        %v4464 = vrot.slane %v4462, 6
        %v4465 = vor.u32 %v4461, %v4464
        %v4466 = vsel %vm1397, %v4457, %v4465
        %s4467 = scalar_lea.vmem %s3, 216
        %v4468 = vld [vmem:[%s4467] sm:$0xf]
        %v4469 = vld [vmem:[%s4467 + $0x4] sm:$0xf]
        %v4470 = vld [vmem:[%s4467 + $0x8] sm:$0xf]
        %v4471 = vunpack.c.l.b16 %v4340
        %v4472 = vunpack.c.l.b16 %v4358
        %v4473 = vunpack.c.l.b16 %v4376
        %v4474 = vunpack.c.l.b16 %v4394
        %v4475 = vunpack.c.l.b16 %v4412
        %v4476 = vunpack.c.l.b16 %v4430
        %v4477 = vunpack.c.l.b16 %v4448
        %v4478 = vunpack.c.l.b16 %v4466
        %v4479 = vpack.c.b16 %v4472, %v4471
        %v4480 = vpack.c.b16 %v4474, %v4473
        %v4481 = vpack.c.b16 %v4476, %v4475
        %v4482 = vpack.c.b16 %v4478, %v4477
        %v4486 = vunpack.c.l.b16 %v4468
        %v4487 = vunpack.c.l.b16 %v4469
        %v4488 = vunpack.c.l.b16 %v4470
        %v4489 = vpack.c.b16 %v4487, %v4486
        %v4490 = vpack.c.b16 %v4488, %v4488
        %v4493 = vsel %vm1024, %v4479, 0
        %v4496 = vsel %vm1024, %v4480, 0
        %v4499 = vsel %vm1024, %v4481, 0
        %v4502 = vsel %vm1024, %v4482, 0
        %v4505 = vsel %vm1037, %v4490, 0
        %4507 = vmatprep.subr.bf16.mxu0 0
        %4508 = vmatpush1.bf16.msra.mxu0 %v4489
        %4509 = vmatprep.subr.bf16.mxu0 0
        %4510 = vmatpush1.bf16.msra.mxu0 %v4505
        %4511 = vmatprep.subr.bf16.mxu0 0
        %4512 = vmatpush1.bf16.msra.mxu0 0
        %4513 = vmatprep.subr.bf16.mxu0 0
        %4514 = vmatpush1.bf16.msra.mxu0 0
        %4515 = vmatprep.subr.bf16.mxu0 0
        %4516 = vmatpush1.bf16.msra.mxu0 0
        %4517 = vmatprep.subr.bf16.mxu0 0
        %4518 = vmatpush1.bf16.msra.mxu0 0
        %4519 = vmatprep.subr.bf16.mxu0 0
        %4520 = vmatpush1.bf16.msra.mxu0 0
        %4521 = vmatprep.subr.bf16.mxu0 0
        %4522 = vmatpush1.bf16.msra.mxu0 0
        %4523 = vmatprep.subr.bf16.mxu0 0
        %4524 = vmatpush1.bf16.msra.mxu0 0
        %4525 = vmatprep.subr.bf16.mxu0 0
        %4526 = vmatpush1.bf16.msra.mxu0 0
        %4527 = vmatprep.subr.bf16.mxu0 0
        %4528 = vmatpush1.bf16.msra.mxu0 0
        %4529 = vmatprep.subr.bf16.mxu0 0
        %4530 = vmatpush1.bf16.msra.mxu0 0
        %4531 = vmatprep.subr.bf16.mxu0 0
        %4532 = vmatpush1.bf16.msra.mxu0 0
        %4533 = vmatprep.subr.bf16.mxu0 0
        %4534 = vmatpush1.bf16.msra.mxu0 0
        %4535 = vmatprep.subr.bf16.mxu0 0
        %4536 = vmatpush1.bf16.msra.mxu0 0
        %4537 = vmatprep.subr.bf16.mxu0 0
        %4538 = vmatpush1.bf16.msra.mxu0 0
        %4539 = vmatprep.mubr.bf16.mxu0 0
        %4540 = vmatmul.mubr.bf16.gmra.mrb[0].mxu0 %v4493
        %v4541 = vpop.f32.mrb[0].mxu0
        %v4542 = vadd.f32 0.0, %v4541
        %v4543 = vpop.f32.mrb[0].mxu0
        %v4544 = vpop.f32.mrb[0].mxu0
        %v4545 = vadd.f32 0.0, %v4544
        %v4546 = vpop.f32.mrb[0].mxu0
        %4547 = vmatprep.mubr.bf16.mxu0 0
        %4548 = vmatmul.mubr.bf16.gmra.mrb[0].mxu0 %v4496
        %v4549 = vpop.f32.mrb[0].mxu0
        %v4550 = vadd.f32 0.0, %v4549
        %v4551 = vpop.f32.mrb[0].mxu0
        %v4552 = vpop.f32.mrb[0].mxu0
        %v4553 = vadd.f32 0.0, %v4552
        %v4554 = vpop.f32.mrb[0].mxu0
        %4555 = vmatprep.mubr.bf16.mxu0 0
        %4556 = vmatmul.mubr.bf16.gmra.mrb[0].mxu0 %v4499
        %v4557 = vpop.f32.mrb[0].mxu0
        %v4558 = vadd.f32 0.0, %v4557
        %v4559 = vpop.f32.mrb[0].mxu0
        %v4560 = vpop.f32.mrb[0].mxu0
        %v4561 = vadd.f32 0.0, %v4560
        %v4562 = vpop.f32.mrb[0].mxu0
        %4563 = vmatprep.mubr.bf16.mxu0 0
        %4564 = vmatmul.mubr.bf16.gmra.mrb[0].mxu0 %v4502
        %v4565 = vpop.f32.mrb[0].mxu0
        %v4566 = vadd.f32 0.0, %v4565
        %v4567 = vpop.f32.mrb[0].mxu0
        %v4568 = vpop.f32.mrb[0].mxu0
        %v4569 = vadd.f32 0.0, %v4568
        %v4570 = vpop.f32.mrb[0].mxu0
        %4571 = vdwg.mxu0
        %v4572 = vadd.f32 %v4307, %v4542
        %v4573 = vadd.f32 %v4308, %v4545
        %v4574 = vadd.f32 %v4309, %v4550
        %v4575 = vadd.f32 %v4310, %v4553
        %v4576 = vadd.f32 %v4311, %v4558
        %v4577 = vadd.f32 %v4312, %v4561
        %v4578 = vadd.f32 %v4313, %v4566
        %v4579 = vadd.f32 %v4314, %v4569
        %v4580 = vld [vmem:[%s3775] sm:$0xc]
        %v4581 = vld [vmem:[%s3775 + $0x8] sm:$0xc]
        %v4582 = vld [vmem:[%s3775 + $0x10] sm:$0xc]
        %v4583 = vld [vmem:[%s3775 + $0x18] sm:$0xc]
        %v4584 = vld [vmem:[%s3775 + $0x20] sm:$0xc]
        %v4585 = vld [vmem:[%s3775 + $0x28] sm:$0xc]
        %v4586 = vld [vmem:[%s3775 + $0x30] sm:$0xc]
        %v4587 = vld [vmem:[%s3775 + $0x38] sm:$0xc]
        %v4604 = vrot.slane %v4580, 6
        %v4605 = vrot.slane %v4604, 4
        %v4606 = vrot.slane %v4315, 6
        %v4607 = vsel %vm1681, %v4605, %v4606
        %v4608 = vrot.slane %v4581, 6
        %v4609 = vrot.slane %v4608, 4
        %v4610 = vrot.slane %v4316, 6
        %v4611 = vsel %vm1681, %v4609, %v4610
        %v4612 = vrot.slane %v4582, 6
        %v4613 = vrot.slane %v4612, 4
        %v4614 = vrot.slane %v4317, 6
        %v4615 = vsel %vm1681, %v4613, %v4614
        %v4616 = vrot.slane %v4583, 6
        %v4617 = vrot.slane %v4616, 4
        %v4618 = vrot.slane %v4318, 6
        %v4619 = vsel %vm1681, %v4617, %v4618
        %v4620 = vrot.slane %v4584, 6
        %v4621 = vrot.slane %v4620, 4
        %v4622 = vrot.slane %v4319, 6
        %v4623 = vsel %vm1681, %v4621, %v4622
        %v4624 = vrot.slane %v4585, 6
        %v4625 = vrot.slane %v4624, 4
        %v4626 = vrot.slane %v4320, 6
        %v4627 = vsel %vm1681, %v4625, %v4626
        %v4628 = vrot.slane %v4586, 6
        %v4629 = vrot.slane %v4628, 4
        %v4630 = vrot.slane %v4321, 6
        %v4631 = vsel %vm1681, %v4629, %v4630
        %v4632 = vrot.slane %v4587, 6
        %v4633 = vrot.slane %v4632, 4
        %v4634 = vrot.slane %v4322, 6
        %v4635 = vsel %vm1681, %v4633, %v4634
        %s4636 = scalar_lea.vmem %s3, 228
        %v4637 = vld [vmem:[%s4636] sm:$0xf]
        %v4638 = vld [vmem:[%s4636 + $0x4] sm:$0xf]
        %v4639 = vld [vmem:[%s4636 + $0x8] sm:$0xf]
        %v4640 = vunpack.c.l.b16 %v4607
        %v4641 = vunpack.c.l.b16 %v4611
        %v4642 = vunpack.c.l.b16 %v4615
        %v4643 = vunpack.c.l.b16 %v4619
        %v4644 = vunpack.c.l.b16 %v4623
        %v4645 = vunpack.c.l.b16 %v4627
        %v4646 = vunpack.c.l.b16 %v4631
        %v4647 = vunpack.c.l.b16 %v4635
        %v4648 = vpack.c.b16 %v4641, %v4640
        %v4649 = vpack.c.b16 %v4643, %v4642
        %v4650 = vpack.c.b16 %v4645, %v4644
        %v4651 = vpack.c.b16 %v4647, %v4646
        %v4655 = vunpack.c.l.b16 %v4637
        %v4656 = vunpack.c.l.b16 %v4638
        %v4657 = vunpack.c.l.b16 %v4639
        %v4658 = vpack.c.b16 %v4656, %v4655
        %v4659 = vpack.c.b16 %v4657, %v4657
        %v4662 = vsel %vm1024, %v4648, 0
        %v4665 = vsel %vm1024, %v4649, 0
        %v4668 = vsel %vm1024, %v4650, 0
        %v4671 = vsel %vm1024, %v4651, 0
        %v4674 = vsel %vm1037, %v4659, 0
        %4676 = vmatprep.subr.bf16.mxu0 0
        %4677 = vmatpush1.bf16.msra.mxu0 %v4658
        %4678 = vmatprep.subr.bf16.mxu0 0
        %4679 = vmatpush1.bf16.msra.mxu0 %v4674
        %4680 = vmatprep.subr.bf16.mxu0 0
        %4681 = vmatpush1.bf16.msra.mxu0 0
        %4682 = vmatprep.subr.bf16.mxu0 0
        %4683 = vmatpush1.bf16.msra.mxu0 0
        %4684 = vmatprep.subr.bf16.mxu0 0
        %4685 = vmatpush1.bf16.msra.mxu0 0
        %4686 = vmatprep.subr.bf16.mxu0 0
        %4687 = vmatpush1.bf16.msra.mxu0 0
        %4688 = vmatprep.subr.bf16.mxu0 0
        %4689 = vmatpush1.bf16.msra.mxu0 0
        %4690 = vmatprep.subr.bf16.mxu0 0
        %4691 = vmatpush1.bf16.msra.mxu0 0
        %4692 = vmatprep.subr.bf16.mxu0 0
        %4693 = vmatpush1.bf16.msra.mxu0 0
        %4694 = vmatprep.subr.bf16.mxu0 0
        %4695 = vmatpush1.bf16.msra.mxu0 0
        %4696 = vmatprep.subr.bf16.mxu0 0
        %4697 = vmatpush1.bf16.msra.mxu0 0
        %4698 = vmatprep.subr.bf16.mxu0 0
        %4699 = vmatpush1.bf16.msra.mxu0 0
        %4700 = vmatprep.subr.bf16.mxu0 0
        %4701 = vmatpush1.bf16.msra.mxu0 0
        %4702 = vmatprep.subr.bf16.mxu0 0
        %4703 = vmatpush1.bf16.msra.mxu0 0
        %4704 = vmatprep.subr.bf16.mxu0 0
        %4705 = vmatpush1.bf16.msra.mxu0 0
        %4706 = vmatprep.subr.bf16.mxu0 0
        %4707 = vmatpush1.bf16.msra.mxu0 0
        %4708 = vmatprep.mubr.bf16.mxu0 0
        %4709 = vmatmul.mubr.bf16.gmra.mrb[0].mxu0 %v4662
        %v4710 = vpop.f32.mrb[0].mxu0
        %v4711 = vadd.f32 0.0, %v4710
        %v4712 = vpop.f32.mrb[0].mxu0
        %v4713 = vpop.f32.mrb[0].mxu0
        %v4714 = vadd.f32 0.0, %v4713
        %v4715 = vpop.f32.mrb[0].mxu0
        %4716 = vmatprep.mubr.bf16.mxu0 0
        %4717 = vmatmul.mubr.bf16.gmra.mrb[0].mxu0 %v4665
        %v4718 = vpop.f32.mrb[0].mxu0
        %v4719 = vadd.f32 0.0, %v4718
        %v4720 = vpop.f32.mrb[0].mxu0
        %v4721 = vpop.f32.mrb[0].mxu0
        %v4722 = vadd.f32 0.0, %v4721
        %v4723 = vpop.f32.mrb[0].mxu0
        %4724 = vmatprep.mubr.bf16.mxu0 0
        %4725 = vmatmul.mubr.bf16.gmra.mrb[0].mxu0 %v4668
        %v4726 = vpop.f32.mrb[0].mxu0
        %v4727 = vadd.f32 0.0, %v4726
        %v4728 = vpop.f32.mrb[0].mxu0
        %v4729 = vpop.f32.mrb[0].mxu0
        %v4730 = vadd.f32 0.0, %v4729
        %v4731 = vpop.f32.mrb[0].mxu0
        %4732 = vmatprep.mubr.bf16.mxu0 0
        %4733 = vmatmul.mubr.bf16.gmra.mrb[0].mxu0 %v4671
        %v4734 = vpop.f32.mrb[0].mxu0
        %v4735 = vadd.f32 0.0, %v4734
        %v4736 = vpop.f32.mrb[0].mxu0
        %v4737 = vpop.f32.mrb[0].mxu0
        %v4738 = vadd.f32 0.0, %v4737
        %v4739 = vpop.f32.mrb[0].mxu0
        %4740 = vdwg.mxu0
        %v4741 = vadd.f32 %v4572, %v4711
        %v4742 = vadd.f32 %v4573, %v4714
        %v4743 = vadd.f32 %v4574, %v4719
        %v4744 = vadd.f32 %v4575, %v4722
        %v4745 = vadd.f32 %v4576, %v4727
        %v4746 = vadd.f32 %v4577, %v4730
        %v4747 = vadd.f32 %v4578, %v4735
        %v4748 = vadd.f32 %v4579, %v4738
        %s4749 = scalar_lea.vmem [#allocation2], 32
        %v4750 = vld [vmem:[%s4749] sm:$0xf]
        %v4751 = vld [vmem:[%s4749 + $0x8] sm:$0xf]
        %v4752 = vld [vmem:[%s4749 + $0x10] sm:$0xf]
        %v4753 = vld [vmem:[%s4749 + $0x18] sm:$0xf]
        %v4754 = vld [vmem:[%s4749 + $0x20] sm:$0xf]
        %v4755 = vld [vmem:[%s4749 + $0x28] sm:$0xf]
        %v4756 = vld [vmem:[%s4749 + $0x30] sm:$0xf]
        %v4757 = vld [vmem:[%s4749 + $0x38] sm:$0xf]
        %s4758 = scalar_lea.vmem %s3, 240
        %v4759 = vld [vmem:[%s4758] sm:$0xf]
        %v4760 = vld [vmem:[%s4758 + $0x4] sm:$0xf]
        %v4761 = vld [vmem:[%s4758 + $0x8] sm:$0xf]
        %v4770 = vunpack.c.l.b16 %v4750
        %v4771 = vunpack.c.l.b16 %v4751
        %v4772 = vunpack.c.l.b16 %v4752
        %v4773 = vunpack.c.l.b16 %v4753
        %v4774 = vunpack.c.l.b16 %v4754
        %v4775 = vunpack.c.l.b16 %v4755
        %v4776 = vunpack.c.l.b16 %v4756
        %v4777 = vunpack.c.l.b16 %v4757
        %v4778 = vpack.c.b16 %v4771, %v4770
        %v4779 = vpack.c.b16 %v4773, %v4772
        %v4780 = vpack.c.b16 %v4775, %v4774
        %v4781 = vpack.c.b16 %v4777, %v4776
        %v4785 = vunpack.c.l.b16 %v4759
        %v4786 = vunpack.c.l.b16 %v4760
        %v4787 = vunpack.c.l.b16 %v4761
        %v4788 = vpack.c.b16 %v4786, %v4785
        %v4789 = vpack.c.b16 %v4787, %v4787
        %v4792 = vsel %vm1024, %v4778, 0
        %v4795 = vsel %vm1024, %v4779, 0
        %v4798 = vsel %vm1024, %v4780, 0
        %v4801 = vsel %vm1024, %v4781, 0
        %v4804 = vsel %vm1037, %v4789, 0
        %4806 = vmatprep.subr.bf16.mxu0 0
        %4807 = vmatpush1.bf16.msra.mxu0 %v4788
        %4808 = vmatprep.subr.bf16.mxu0 0
        %4809 = vmatpush1.bf16.msra.mxu0 %v4804
        %4810 = vmatprep.subr.bf16.mxu0 0
        %4811 = vmatpush1.bf16.msra.mxu0 0
        %4812 = vmatprep.subr.bf16.mxu0 0
        %4813 = vmatpush1.bf16.msra.mxu0 0
        %4814 = vmatprep.subr.bf16.mxu0 0
        %4815 = vmatpush1.bf16.msra.mxu0 0
        %4816 = vmatprep.subr.bf16.mxu0 0
        %4817 = vmatpush1.bf16.msra.mxu0 0
        %4818 = vmatprep.subr.bf16.mxu0 0
        %4819 = vmatpush1.bf16.msra.mxu0 0
        %4820 = vmatprep.subr.bf16.mxu0 0
        %4821 = vmatpush1.bf16.msra.mxu0 0
        %4822 = vmatprep.subr.bf16.mxu0 0
        %4823 = vmatpush1.bf16.msra.mxu0 0
        %4824 = vmatprep.subr.bf16.mxu0 0
        %4825 = vmatpush1.bf16.msra.mxu0 0
        %4826 = vmatprep.subr.bf16.mxu0 0
        %4827 = vmatpush1.bf16.msra.mxu0 0
        %4828 = vmatprep.subr.bf16.mxu0 0
        %4829 = vmatpush1.bf16.msra.mxu0 0
        %4830 = vmatprep.subr.bf16.mxu0 0
        %4831 = vmatpush1.bf16.msra.mxu0 0
        %4832 = vmatprep.subr.bf16.mxu0 0
        %4833 = vmatpush1.bf16.msra.mxu0 0
        %4834 = vmatprep.subr.bf16.mxu0 0
        %4835 = vmatpush1.bf16.msra.mxu0 0
        %4836 = vmatprep.subr.bf16.mxu0 0
        %4837 = vmatpush1.bf16.msra.mxu0 0
        %4838 = vmatprep.mubr.bf16.mxu0 0
        %4839 = vmatmul.mubr.bf16.gmra.mrb[0].mxu0 %v4792
        %v4840 = vpop.f32.mrb[0].mxu0
        %v4841 = vadd.f32 0.0, %v4840
        %v4842 = vpop.f32.mrb[0].mxu0
        %v4843 = vpop.f32.mrb[0].mxu0
        %v4844 = vadd.f32 0.0, %v4843
        %v4845 = vpop.f32.mrb[0].mxu0
        %4846 = vmatprep.mubr.bf16.mxu0 0
        %4847 = vmatmul.mubr.bf16.gmra.mrb[0].mxu0 %v4795
        %v4848 = vpop.f32.mrb[0].mxu0
        %v4849 = vadd.f32 0.0, %v4848
        %v4850 = vpop.f32.mrb[0].mxu0
        %v4851 = vpop.f32.mrb[0].mxu0
        %v4852 = vadd.f32 0.0, %v4851
        %v4853 = vpop.f32.mrb[0].mxu0
        %4854 = vmatprep.mubr.bf16.mxu0 0
        %4855 = vmatmul.mubr.bf16.gmra.mrb[0].mxu0 %v4798
        %v4856 = vpop.f32.mrb[0].mxu0
        %v4857 = vadd.f32 0.0, %v4856
        %v4858 = vpop.f32.mrb[0].mxu0
        %v4859 = vpop.f32.mrb[0].mxu0
        %v4860 = vadd.f32 0.0, %v4859
        %v4861 = vpop.f32.mrb[0].mxu0
        %4862 = vmatprep.mubr.bf16.mxu0 0
        %4863 = vmatmul.mubr.bf16.gmra.mrb[0].mxu0 %v4801
        %v4864 = vpop.f32.mrb[0].mxu0
        %v4865 = vadd.f32 0.0, %v4864
        %v4866 = vpop.f32.mrb[0].mxu0
        %v4867 = vpop.f32.mrb[0].mxu0
        %v4868 = vadd.f32 0.0, %v4867
        %v4869 = vpop.f32.mrb[0].mxu0
        %4870 = vdwg.mxu0
        %v4871 = vadd.f32 %v4741, %v4841
        %v4872 = vadd.f32 %v4742, %v4844
        %v4873 = vadd.f32 %v4743, %v4849
        %v4874 = vadd.f32 %v4744, %v4852
        %v4875 = vadd.f32 %v4745, %v4857
        %v4876 = vadd.f32 %v4746, %v4860
        %v4877 = vadd.f32 %v4747, %v4865
        %v4878 = vadd.f32 %v4748, %v4868
        %v4879 = vld [vmem:[%s4749] sm:$0xf]
        %v4880 = vld [vmem:[%s4749 + $0x4] sm:$0x1]
        %v4881 = vld [vmem:[%s4749 + $0x8] sm:$0xf]
        %v4882 = vld [vmem:[%s4749 + $0xc] sm:$0x1]
        %v4883 = vld [vmem:[%s4749 + $0x10] sm:$0xf]
        %v4884 = vld [vmem:[%s4749 + $0x14] sm:$0x1]
        %v4885 = vld [vmem:[%s4749 + $0x18] sm:$0xf]
        %v4886 = vld [vmem:[%s4749 + $0x1c] sm:$0x1]
        %v4887 = vld [vmem:[%s4749 + $0x20] sm:$0xf]
        %v4888 = vld [vmem:[%s4749 + $0x24] sm:$0x1]
        %v4889 = vld [vmem:[%s4749 + $0x28] sm:$0xf]
        %v4890 = vld [vmem:[%s4749 + $0x2c] sm:$0x1]
        %v4891 = vld [vmem:[%s4749 + $0x30] sm:$0xf]
        %v4892 = vld [vmem:[%s4749 + $0x34] sm:$0x1]
        %v4893 = vld [vmem:[%s4749 + $0x38] sm:$0xf]
        %v4894 = vld [vmem:[%s4749 + $0x3c] sm:$0x1]
        %v4896 = vshrl.u32 %v4879, 16
        %v4898 = vrot.slane %v4896, 4
        %v4899 = vshll.u32 %v4879, 16
        %v4901 = vrot.slane %v4899, 5
        %v4902 = vor.u32 %v4898, %v4901
        %v4903 = vrot.slane %v4902, 4
        %v4905 = vshll.u32 %v4880, 16
        %v4907 = vrot.slane %v4905, 5
        %v4908 = vsel %vm886, %v4903, %v4907
        %v4910 = vshrl.u32 %v4881, 16
        %v4912 = vrot.slane %v4910, 4
        %v4913 = vshll.u32 %v4881, 16
        %v4915 = vrot.slane %v4913, 5
        %v4916 = vor.u32 %v4912, %v4915
        %v4917 = vrot.slane %v4916, 4
        %v4919 = vshll.u32 %v4882, 16
        %v4921 = vrot.slane %v4919, 5
        %v4922 = vsel %vm886, %v4917, %v4921
        %v4924 = vshrl.u32 %v4883, 16
        %v4926 = vrot.slane %v4924, 4
        %v4927 = vshll.u32 %v4883, 16
        %v4929 = vrot.slane %v4927, 5
        %v4930 = vor.u32 %v4926, %v4929
        %v4931 = vrot.slane %v4930, 4
        %v4933 = vshll.u32 %v4884, 16
        %v4935 = vrot.slane %v4933, 5
        %v4936 = vsel %vm886, %v4931, %v4935
        %v4938 = vshrl.u32 %v4885, 16
        %v4940 = vrot.slane %v4938, 4
        %v4941 = vshll.u32 %v4885, 16
        %v4943 = vrot.slane %v4941, 5
        %v4944 = vor.u32 %v4940, %v4943
        %v4945 = vrot.slane %v4944, 4
        %v4947 = vshll.u32 %v4886, 16
        %v4949 = vrot.slane %v4947, 5
        %v4950 = vsel %vm886, %v4945, %v4949
        %v4952 = vshrl.u32 %v4887, 16
        %v4954 = vrot.slane %v4952, 4
        %v4955 = vshll.u32 %v4887, 16
        %v4957 = vrot.slane %v4955, 5
        %v4958 = vor.u32 %v4954, %v4957
        %v4959 = vrot.slane %v4958, 4
        %v4961 = vshll.u32 %v4888, 16
        %v4963 = vrot.slane %v4961, 5
        %v4964 = vsel %vm886, %v4959, %v4963
        %v4966 = vshrl.u32 %v4889, 16
        %v4968 = vrot.slane %v4966, 4
        %v4969 = vshll.u32 %v4889, 16
        %v4971 = vrot.slane %v4969, 5
        %v4972 = vor.u32 %v4968, %v4971
        %v4973 = vrot.slane %v4972, 4
        %v4975 = vshll.u32 %v4890, 16
        %v4977 = vrot.slane %v4975, 5
        %v4978 = vsel %vm886, %v4973, %v4977
        %v4980 = vshrl.u32 %v4891, 16
        %v4982 = vrot.slane %v4980, 4
        %v4983 = vshll.u32 %v4891, 16
        %v4985 = vrot.slane %v4983, 5
        %v4986 = vor.u32 %v4982, %v4985
        %v4987 = vrot.slane %v4986, 4
        %v4989 = vshll.u32 %v4892, 16
        %v4991 = vrot.slane %v4989, 5
        %v4992 = vsel %vm886, %v4987, %v4991
        %v4994 = vshrl.u32 %v4893, 16
        %v4996 = vrot.slane %v4994, 4
        %v4997 = vshll.u32 %v4893, 16
        %v4999 = vrot.slane %v4997, 5
        %v5000 = vor.u32 %v4996, %v4999
        %v5001 = vrot.slane %v5000, 4
        %v5003 = vshll.u32 %v4894, 16
        %v5005 = vrot.slane %v5003, 5
        %v5006 = vsel %vm886, %v5001, %v5005
        %s5007 = scalar_lea.vmem %s3, 252
        %v5008 = vld [vmem:[%s5007] sm:$0xf]
        %v5009 = vld [vmem:[%s5007 + $0x4] sm:$0xf]
        %v5010 = vld [vmem:[%s5007 + $0x8] sm:$0xf]
        %v5011 = vunpack.c.l.b16 %v4908
        %v5012 = vunpack.c.l.b16 %v4922
        %v5013 = vunpack.c.l.b16 %v4936
        %v5014 = vunpack.c.l.b16 %v4950
        %v5015 = vunpack.c.l.b16 %v4964
        %v5016 = vunpack.c.l.b16 %v4978
        %v5017 = vunpack.c.l.b16 %v4992
        %v5018 = vunpack.c.l.b16 %v5006
        %v5019 = vpack.c.b16 %v5012, %v5011
        %v5020 = vpack.c.b16 %v5014, %v5013
        %v5021 = vpack.c.b16 %v5016, %v5015
        %v5022 = vpack.c.b16 %v5018, %v5017
        %v5026 = vunpack.c.l.b16 %v5008
        %v5027 = vunpack.c.l.b16 %v5009
        %v5028 = vunpack.c.l.b16 %v5010
        %v5029 = vpack.c.b16 %v5027, %v5026
        %v5030 = vpack.c.b16 %v5028, %v5028
        %v5033 = vsel %vm1024, %v5019, 0
        %v5036 = vsel %vm1024, %v5020, 0
        %v5039 = vsel %vm1024, %v5021, 0
        %v5042 = vsel %vm1024, %v5022, 0
        %v5045 = vsel %vm1037, %v5030, 0
        %5047 = vmatprep.subr.bf16.mxu0 0
        %5048 = vmatpush1.bf16.msra.mxu0 %v5029
        %5049 = vmatprep.subr.bf16.mxu0 0
        %5050 = vmatpush1.bf16.msra.mxu0 %v5045
        %5051 = vmatprep.subr.bf16.mxu0 0
        %5052 = vmatpush1.bf16.msra.mxu0 0
        %5053 = vmatprep.subr.bf16.mxu0 0
        %5054 = vmatpush1.bf16.msra.mxu0 0
        %5055 = vmatprep.subr.bf16.mxu0 0
        %5056 = vmatpush1.bf16.msra.mxu0 0
        %5057 = vmatprep.subr.bf16.mxu0 0
        %5058 = vmatpush1.bf16.msra.mxu0 0
        %5059 = vmatprep.subr.bf16.mxu0 0
        %5060 = vmatpush1.bf16.msra.mxu0 0
        %5061 = vmatprep.subr.bf16.mxu0 0
        %5062 = vmatpush1.bf16.msra.mxu0 0
        %5063 = vmatprep.subr.bf16.mxu0 0
        %5064 = vmatpush1.bf16.msra.mxu0 0
        %5065 = vmatprep.subr.bf16.mxu0 0
        %5066 = vmatpush1.bf16.msra.mxu0 0
        %5067 = vmatprep.subr.bf16.mxu0 0
        %5068 = vmatpush1.bf16.msra.mxu0 0
        %5069 = vmatprep.subr.bf16.mxu0 0
        %5070 = vmatpush1.bf16.msra.mxu0 0
        %5071 = vmatprep.subr.bf16.mxu0 0
        %5072 = vmatpush1.bf16.msra.mxu0 0
        %5073 = vmatprep.subr.bf16.mxu0 0
        %5074 = vmatpush1.bf16.msra.mxu0 0
        %5075 = vmatprep.subr.bf16.mxu0 0
        %5076 = vmatpush1.bf16.msra.mxu0 0
        %5077 = vmatprep.subr.bf16.mxu0 0
        %5078 = vmatpush1.bf16.msra.mxu0 0
        %5079 = vmatprep.mubr.bf16.mxu0 0
        %5080 = vmatmul.mubr.bf16.gmra.mrb[0].mxu0 %v5033
        %v5081 = vpop.f32.mrb[0].mxu0
        %v5082 = vadd.f32 0.0, %v5081
        %v5083 = vpop.f32.mrb[0].mxu0
        %v5084 = vpop.f32.mrb[0].mxu0
        %v5085 = vadd.f32 0.0, %v5084
        %v5086 = vpop.f32.mrb[0].mxu0
        %5087 = vmatprep.mubr.bf16.mxu0 0
        %5088 = vmatmul.mubr.bf16.gmra.mrb[0].mxu0 %v5036
        %v5089 = vpop.f32.mrb[0].mxu0
        %v5090 = vadd.f32 0.0, %v5089
        %v5091 = vpop.f32.mrb[0].mxu0
        %v5092 = vpop.f32.mrb[0].mxu0
        %v5093 = vadd.f32 0.0, %v5092
        %v5094 = vpop.f32.mrb[0].mxu0
        %5095 = vmatprep.mubr.bf16.mxu0 0
        %5096 = vmatmul.mubr.bf16.gmra.mrb[0].mxu0 %v5039
        %v5097 = vpop.f32.mrb[0].mxu0
        %v5098 = vadd.f32 0.0, %v5097
        %v5099 = vpop.f32.mrb[0].mxu0
        %v5100 = vpop.f32.mrb[0].mxu0
        %v5101 = vadd.f32 0.0, %v5100
        %v5102 = vpop.f32.mrb[0].mxu0
        %5103 = vmatprep.mubr.bf16.mxu0 0
        %5104 = vmatmul.mubr.bf16.gmra.mrb[0].mxu0 %v5042
        %v5105 = vpop.f32.mrb[0].mxu0
        %v5106 = vadd.f32 0.0, %v5105
        %v5107 = vpop.f32.mrb[0].mxu0
        %v5108 = vpop.f32.mrb[0].mxu0
        %v5109 = vadd.f32 0.0, %v5108
        %v5110 = vpop.f32.mrb[0].mxu0
        %5111 = vdwg.mxu0
        %v5112 = vadd.f32 %v4871, %v5082
        %v5113 = vadd.f32 %v4872, %v5085
        %v5114 = vadd.f32 %v4873, %v5090
        %v5115 = vadd.f32 %v4874, %v5093
        %v5116 = vadd.f32 %v4875, %v5098
        %v5117 = vadd.f32 %v4876, %v5101
        %v5118 = vadd.f32 %v4877, %v5106
        %v5119 = vadd.f32 %v4878, %v5109
        %v5120 = vld [vmem:[%s4749] sm:$0xe]
        %v5121 = vld [vmem:[%s4749 + $0x8] sm:$0xe]
        %v5122 = vld [vmem:[%s4749 + $0x10] sm:$0xe]
        %v5123 = vld [vmem:[%s4749 + $0x18] sm:$0xe]
        %v5124 = vld [vmem:[%s4749 + $0x20] sm:$0xe]
        %v5125 = vld [vmem:[%s4749 + $0x28] sm:$0xe]
        %v5126 = vld [vmem:[%s4749 + $0x30] sm:$0xe]
        %v5127 = vld [vmem:[%s4749 + $0x38] sm:$0xe]
        %v5144 = vrot.slane %v5120, 5
        %v5145 = vrot.slane %v5144, 4
        %v5146 = vrot.slane %v4880, 5
        %v5147 = vsel %vm1241, %v5145, %v5146
        %v5148 = vrot.slane %v5121, 5
        %v5149 = vrot.slane %v5148, 4
        %v5150 = vrot.slane %v4882, 5
        %v5151 = vsel %vm1241, %v5149, %v5150
        %v5152 = vrot.slane %v5122, 5
        %v5153 = vrot.slane %v5152, 4
        %v5154 = vrot.slane %v4884, 5
        %v5155 = vsel %vm1241, %v5153, %v5154
        %v5156 = vrot.slane %v5123, 5
        %v5157 = vrot.slane %v5156, 4
        %v5158 = vrot.slane %v4886, 5
        %v5159 = vsel %vm1241, %v5157, %v5158
        %v5160 = vrot.slane %v5124, 5
        %v5161 = vrot.slane %v5160, 4
        %v5162 = vrot.slane %v4888, 5
        %v5163 = vsel %vm1241, %v5161, %v5162
        %v5164 = vrot.slane %v5125, 5
        %v5165 = vrot.slane %v5164, 4
        %v5166 = vrot.slane %v4890, 5
        %v5167 = vsel %vm1241, %v5165, %v5166
        %v5168 = vrot.slane %v5126, 5
        %v5169 = vrot.slane %v5168, 4
        %v5170 = vrot.slane %v4892, 5
        %v5171 = vsel %vm1241, %v5169, %v5170
        %v5172 = vrot.slane %v5127, 5
        %v5173 = vrot.slane %v5172, 4
        %v5174 = vrot.slane %v4894, 5
        %v5175 = vsel %vm1241, %v5173, %v5174
        %s5176 = scalar_lea.vmem %s3, 264
        %v5177 = vld [vmem:[%s5176] sm:$0xf]
        %v5178 = vld [vmem:[%s5176 + $0x4] sm:$0xf]
        %v5179 = vld [vmem:[%s5176 + $0x8] sm:$0xf]
        %v5180 = vunpack.c.l.b16 %v5147
        %v5181 = vunpack.c.l.b16 %v5151
        %v5182 = vunpack.c.l.b16 %v5155
        %v5183 = vunpack.c.l.b16 %v5159
        %v5184 = vunpack.c.l.b16 %v5163
        %v5185 = vunpack.c.l.b16 %v5167
        %v5186 = vunpack.c.l.b16 %v5171
        %v5187 = vunpack.c.l.b16 %v5175
        %v5188 = vpack.c.b16 %v5181, %v5180
        %v5189 = vpack.c.b16 %v5183, %v5182
        %v5190 = vpack.c.b16 %v5185, %v5184
        %v5191 = vpack.c.b16 %v5187, %v5186
        %v5195 = vunpack.c.l.b16 %v5177
        %v5196 = vunpack.c.l.b16 %v5178
        %v5197 = vunpack.c.l.b16 %v5179
        %v5198 = vpack.c.b16 %v5196, %v5195
        %v5199 = vpack.c.b16 %v5197, %v5197
        %v5202 = vsel %vm1024, %v5188, 0
        %v5205 = vsel %vm1024, %v5189, 0
        %v5208 = vsel %vm1024, %v5190, 0
        %v5211 = vsel %vm1024, %v5191, 0
        %v5214 = vsel %vm1037, %v5199, 0
        %5216 = vmatprep.subr.bf16.mxu0 0
        %5217 = vmatpush1.bf16.msra.mxu0 %v5198
        %5218 = vmatprep.subr.bf16.mxu0 0
        %5219 = vmatpush1.bf16.msra.mxu0 %v5214
        %5220 = vmatprep.subr.bf16.mxu0 0
        %5221 = vmatpush1.bf16.msra.mxu0 0
        %5222 = vmatprep.subr.bf16.mxu0 0
        %5223 = vmatpush1.bf16.msra.mxu0 0
        %5224 = vmatprep.subr.bf16.mxu0 0
        %5225 = vmatpush1.bf16.msra.mxu0 0
        %5226 = vmatprep.subr.bf16.mxu0 0
        %5227 = vmatpush1.bf16.msra.mxu0 0
        %5228 = vmatprep.subr.bf16.mxu0 0
        %5229 = vmatpush1.bf16.msra.mxu0 0
        %5230 = vmatprep.subr.bf16.mxu0 0
        %5231 = vmatpush1.bf16.msra.mxu0 0
        %5232 = vmatprep.subr.bf16.mxu0 0
        %5233 = vmatpush1.bf16.msra.mxu0 0
        %5234 = vmatprep.subr.bf16.mxu0 0
        %5235 = vmatpush1.bf16.msra.mxu0 0
        %5236 = vmatprep.subr.bf16.mxu0 0
        %5237 = vmatpush1.bf16.msra.mxu0 0
        %5238 = vmatprep.subr.bf16.mxu0 0
        %5239 = vmatpush1.bf16.msra.mxu0 0
        %5240 = vmatprep.subr.bf16.mxu0 0
        %5241 = vmatpush1.bf16.msra.mxu0 0
        %5242 = vmatprep.subr.bf16.mxu0 0
        %5243 = vmatpush1.bf16.msra.mxu0 0
        %5244 = vmatprep.subr.bf16.mxu0 0
        %5245 = vmatpush1.bf16.msra.mxu0 0
        %5246 = vmatprep.subr.bf16.mxu0 0
        %5247 = vmatpush1.bf16.msra.mxu0 0
        %5248 = vmatprep.mubr.bf16.mxu0 0
        %5249 = vmatmul.mubr.bf16.gmra.mrb[0].mxu0 %v5202
        %v5250 = vpop.f32.mrb[0].mxu0
        %v5251 = vadd.f32 0.0, %v5250
        %v5252 = vpop.f32.mrb[0].mxu0
        %v5253 = vpop.f32.mrb[0].mxu0
        %v5254 = vadd.f32 0.0, %v5253
        %v5255 = vpop.f32.mrb[0].mxu0
        %5256 = vmatprep.mubr.bf16.mxu0 0
        %5257 = vmatmul.mubr.bf16.gmra.mrb[0].mxu0 %v5205
        %v5258 = vpop.f32.mrb[0].mxu0
        %v5259 = vadd.f32 0.0, %v5258
        %v5260 = vpop.f32.mrb[0].mxu0
        %v5261 = vpop.f32.mrb[0].mxu0
        %v5262 = vadd.f32 0.0, %v5261
        %v5263 = vpop.f32.mrb[0].mxu0
        %5264 = vmatprep.mubr.bf16.mxu0 0
        %5265 = vmatmul.mubr.bf16.gmra.mrb[0].mxu0 %v5208
        %v5266 = vpop.f32.mrb[0].mxu0
        %v5267 = vadd.f32 0.0, %v5266
        %v5268 = vpop.f32.mrb[0].mxu0
        %v5269 = vpop.f32.mrb[0].mxu0
        %v5270 = vadd.f32 0.0, %v5269
        %v5271 = vpop.f32.mrb[0].mxu0
        %5272 = vmatprep.mubr.bf16.mxu0 0
        %5273 = vmatmul.mubr.bf16.gmra.mrb[0].mxu0 %v5211
        %v5274 = vpop.f32.mrb[0].mxu0
        %v5275 = vadd.f32 0.0, %v5274
        %v5276 = vpop.f32.mrb[0].mxu0
        %v5277 = vpop.f32.mrb[0].mxu0
        %v5278 = vadd.f32 0.0, %v5277
        %v5279 = vpop.f32.mrb[0].mxu0
        %5280 = vdwg.mxu0
        %v5281 = vadd.f32 %v5112, %v5251
        %v5282 = vadd.f32 %v5113, %v5254
        %v5283 = vadd.f32 %v5114, %v5259
        %v5284 = vadd.f32 %v5115, %v5262
        %v5285 = vadd.f32 %v5116, %v5267
        %v5286 = vadd.f32 %v5117, %v5270
        %v5287 = vadd.f32 %v5118, %v5275
        %v5288 = vadd.f32 %v5119, %v5278
        %v5289 = vld [vmem:[%s4749 + $0x4] sm:$0x3]
        %v5290 = vld [vmem:[%s4749 + $0xc] sm:$0x3]
        %v5291 = vld [vmem:[%s4749 + $0x14] sm:$0x3]
        %v5292 = vld [vmem:[%s4749 + $0x1c] sm:$0x3]
        %v5293 = vld [vmem:[%s4749 + $0x24] sm:$0x3]
        %v5294 = vld [vmem:[%s4749 + $0x2c] sm:$0x3]
        %v5295 = vld [vmem:[%s4749 + $0x34] sm:$0x3]
        %v5296 = vld [vmem:[%s4749 + $0x3c] sm:$0x3]
        %v5298 = vshrl.u32 %v5120, 16
        %v5300 = vrot.slane %v5298, 5
        %v5301 = vshll.u32 %v5120, 16
        %v5303 = vrot.slane %v5301, 6
        %v5304 = vor.u32 %v5300, %v5303
        %v5305 = vrot.slane %v5304, 4
        %v5307 = vshrl.u32 %v5289, 16
        %v5309 = vrot.slane %v5307, 5
        %v5310 = vshll.u32 %v5289, 16
        %v5312 = vrot.slane %v5310, 6
        %v5313 = vor.u32 %v5309, %v5312
        %v5314 = vsel %vm1397, %v5305, %v5313
        %v5316 = vshrl.u32 %v5121, 16
        %v5318 = vrot.slane %v5316, 5
        %v5319 = vshll.u32 %v5121, 16
        %v5321 = vrot.slane %v5319, 6
        %v5322 = vor.u32 %v5318, %v5321
        %v5323 = vrot.slane %v5322, 4
        %v5325 = vshrl.u32 %v5290, 16
        %v5327 = vrot.slane %v5325, 5
        %v5328 = vshll.u32 %v5290, 16
        %v5330 = vrot.slane %v5328, 6
        %v5331 = vor.u32 %v5327, %v5330
        %v5332 = vsel %vm1397, %v5323, %v5331
        %v5334 = vshrl.u32 %v5122, 16
        %v5336 = vrot.slane %v5334, 5
        %v5337 = vshll.u32 %v5122, 16
        %v5339 = vrot.slane %v5337, 6
        %v5340 = vor.u32 %v5336, %v5339
        %v5341 = vrot.slane %v5340, 4
        %v5343 = vshrl.u32 %v5291, 16
        %v5345 = vrot.slane %v5343, 5
        %v5346 = vshll.u32 %v5291, 16
        %v5348 = vrot.slane %v5346, 6
        %v5349 = vor.u32 %v5345, %v5348
        %v5350 = vsel %vm1397, %v5341, %v5349
        %v5352 = vshrl.u32 %v5123, 16
        %v5354 = vrot.slane %v5352, 5
        %v5355 = vshll.u32 %v5123, 16
        %v5357 = vrot.slane %v5355, 6
        %v5358 = vor.u32 %v5354, %v5357
        %v5359 = vrot.slane %v5358, 4
        %v5361 = vshrl.u32 %v5292, 16
        %v5363 = vrot.slane %v5361, 5
        %v5364 = vshll.u32 %v5292, 16
        %v5366 = vrot.slane %v5364, 6
        %v5367 = vor.u32 %v5363, %v5366
        %v5368 = vsel %vm1397, %v5359, %v5367
        %v5370 = vshrl.u32 %v5124, 16
        %v5372 = vrot.slane %v5370, 5
        %v5373 = vshll.u32 %v5124, 16
        %v5375 = vrot.slane %v5373, 6
        %v5376 = vor.u32 %v5372, %v5375
        %v5377 = vrot.slane %v5376, 4
        %v5379 = vshrl.u32 %v5293, 16
        %v5381 = vrot.slane %v5379, 5
        %v5382 = vshll.u32 %v5293, 16
        %v5384 = vrot.slane %v5382, 6
        %v5385 = vor.u32 %v5381, %v5384
        %v5386 = vsel %vm1397, %v5377, %v5385
        %v5388 = vshrl.u32 %v5125, 16
        %v5390 = vrot.slane %v5388, 5
        %v5391 = vshll.u32 %v5125, 16
        %v5393 = vrot.slane %v5391, 6
        %v5394 = vor.u32 %v5390, %v5393
        %v5395 = vrot.slane %v5394, 4
        %v5397 = vshrl.u32 %v5294, 16
        %v5399 = vrot.slane %v5397, 5
        %v5400 = vshll.u32 %v5294, 16
        %v5402 = vrot.slane %v5400, 6
        %v5403 = vor.u32 %v5399, %v5402
        %v5404 = vsel %vm1397, %v5395, %v5403
        %v5406 = vshrl.u32 %v5126, 16
        %v5408 = vrot.slane %v5406, 5
        %v5409 = vshll.u32 %v5126, 16
        %v5411 = vrot.slane %v5409, 6
        %v5412 = vor.u32 %v5408, %v5411
        %v5413 = vrot.slane %v5412, 4
        %v5415 = vshrl.u32 %v5295, 16
        %v5417 = vrot.slane %v5415, 5
        %v5418 = vshll.u32 %v5295, 16
        %v5420 = vrot.slane %v5418, 6
        %v5421 = vor.u32 %v5417, %v5420
        %v5422 = vsel %vm1397, %v5413, %v5421
        %v5424 = vshrl.u32 %v5127, 16
        %v5426 = vrot.slane %v5424, 5
        %v5427 = vshll.u32 %v5127, 16
        %v5429 = vrot.slane %v5427, 6
        %v5430 = vor.u32 %v5426, %v5429
        %v5431 = vrot.slane %v5430, 4
        %v5433 = vshrl.u32 %v5296, 16
        %v5435 = vrot.slane %v5433, 5
        %v5436 = vshll.u32 %v5296, 16
        %v5438 = vrot.slane %v5436, 6
        %v5439 = vor.u32 %v5435, %v5438
        %v5440 = vsel %vm1397, %v5431, %v5439
        %s5441 = scalar_lea.vmem %s3, 276
        %v5442 = vld [vmem:[%s5441] sm:$0xf]
        %v5443 = vld [vmem:[%s5441 + $0x4] sm:$0xf]
        %v5444 = vld [vmem:[%s5441 + $0x8] sm:$0xf]
        %v5445 = vunpack.c.l.b16 %v5314
        %v5446 = vunpack.c.l.b16 %v5332
        %v5447 = vunpack.c.l.b16 %v5350
        %v5448 = vunpack.c.l.b16 %v5368
        %v5449 = vunpack.c.l.b16 %v5386
        %v5450 = vunpack.c.l.b16 %v5404
        %v5451 = vunpack.c.l.b16 %v5422
        %v5452 = vunpack.c.l.b16 %v5440
        %v5453 = vpack.c.b16 %v5446, %v5445
        %v5454 = vpack.c.b16 %v5448, %v5447
        %v5455 = vpack.c.b16 %v5450, %v5449
        %v5456 = vpack.c.b16 %v5452, %v5451
        %v5460 = vunpack.c.l.b16 %v5442
        %v5461 = vunpack.c.l.b16 %v5443
        %v5462 = vunpack.c.l.b16 %v5444
        %v5463 = vpack.c.b16 %v5461, %v5460
        %v5464 = vpack.c.b16 %v5462, %v5462
        %v5467 = vsel %vm1024, %v5453, 0
        %v5470 = vsel %vm1024, %v5454, 0
        %v5473 = vsel %vm1024, %v5455, 0
        %v5476 = vsel %vm1024, %v5456, 0
        %v5479 = vsel %vm1037, %v5464, 0
        %5481 = vmatprep.subr.bf16.mxu0 0
        %5482 = vmatpush1.bf16.msra.mxu0 %v5463
        %5483 = vmatprep.subr.bf16.mxu0 0
        %5484 = vmatpush1.bf16.msra.mxu0 %v5479
        %5485 = vmatprep.subr.bf16.mxu0 0
        %5486 = vmatpush1.bf16.msra.mxu0 0
        %5487 = vmatprep.subr.bf16.mxu0 0
        %5488 = vmatpush1.bf16.msra.mxu0 0
        %5489 = vmatprep.subr.bf16.mxu0 0
        %5490 = vmatpush1.bf16.msra.mxu0 0
        %5491 = vmatprep.subr.bf16.mxu0 0
        %5492 = vmatpush1.bf16.msra.mxu0 0
        %5493 = vmatprep.subr.bf16.mxu0 0
        %5494 = vmatpush1.bf16.msra.mxu0 0
        %5495 = vmatprep.subr.bf16.mxu0 0
        %5496 = vmatpush1.bf16.msra.mxu0 0
        %5497 = vmatprep.subr.bf16.mxu0 0
        %5498 = vmatpush1.bf16.msra.mxu0 0
        %5499 = vmatprep.subr.bf16.mxu0 0
        %5500 = vmatpush1.bf16.msra.mxu0 0
        %5501 = vmatprep.subr.bf16.mxu0 0
        %5502 = vmatpush1.bf16.msra.mxu0 0
        %5503 = vmatprep.subr.bf16.mxu0 0
        %5504 = vmatpush1.bf16.msra.mxu0 0
        %5505 = vmatprep.subr.bf16.mxu0 0
        %5506 = vmatpush1.bf16.msra.mxu0 0
        %5507 = vmatprep.subr.bf16.mxu0 0
        %5508 = vmatpush1.bf16.msra.mxu0 0
        %5509 = vmatprep.subr.bf16.mxu0 0
        %5510 = vmatpush1.bf16.msra.mxu0 0
        %5511 = vmatprep.subr.bf16.mxu0 0
        %5512 = vmatpush1.bf16.msra.mxu0 0
        %5513 = vmatprep.mubr.bf16.mxu0 0
        %5514 = vmatmul.mubr.bf16.gmra.mrb[0].mxu0 %v5467
        %v5515 = vpop.f32.mrb[0].mxu0
        %v5516 = vadd.f32 0.0, %v5515
        %v5517 = vpop.f32.mrb[0].mxu0
        %v5518 = vpop.f32.mrb[0].mxu0
        %v5519 = vadd.f32 0.0, %v5518
        %v5520 = vpop.f32.mrb[0].mxu0
        %5521 = vmatprep.mubr.bf16.mxu0 0
        %5522 = vmatmul.mubr.bf16.gmra.mrb[0].mxu0 %v5470
        %v5523 = vpop.f32.mrb[0].mxu0
        %v5524 = vadd.f32 0.0, %v5523
        %v5525 = vpop.f32.mrb[0].mxu0
        %v5526 = vpop.f32.mrb[0].mxu0
        %v5527 = vadd.f32 0.0, %v5526
        %v5528 = vpop.f32.mrb[0].mxu0
        %5529 = vmatprep.mubr.bf16.mxu0 0
        %5530 = vmatmul.mubr.bf16.gmra.mrb[0].mxu0 %v5473
        %v5531 = vpop.f32.mrb[0].mxu0
        %v5532 = vadd.f32 0.0, %v5531
        %v5533 = vpop.f32.mrb[0].mxu0
        %v5534 = vpop.f32.mrb[0].mxu0
        %v5535 = vadd.f32 0.0, %v5534
        %v5536 = vpop.f32.mrb[0].mxu0
        %5537 = vmatprep.mubr.bf16.mxu0 0
        %5538 = vmatmul.mubr.bf16.gmra.mrb[0].mxu0 %v5476
        %v5539 = vpop.f32.mrb[0].mxu0
        %v5540 = vadd.f32 0.0, %v5539
        %v5541 = vpop.f32.mrb[0].mxu0
        %v5542 = vpop.f32.mrb[0].mxu0
        %v5543 = vadd.f32 0.0, %v5542
        %v5544 = vpop.f32.mrb[0].mxu0
        %5545 = vdwg.mxu0
        %v5546 = vadd.f32 %v5281, %v5516
        %v5547 = vadd.f32 %v5282, %v5519
        %v5548 = vadd.f32 %v5283, %v5524
        %v5549 = vadd.f32 %v5284, %v5527
        %v5550 = vadd.f32 %v5285, %v5532
        %v5551 = vadd.f32 %v5286, %v5535
        %v5552 = vadd.f32 %v5287, %v5540
        %v5553 = vadd.f32 %v5288, %v5543
        %v5554 = vld [vmem:[%s4749] sm:$0xc]
        %v5555 = vld [vmem:[%s4749 + $0x8] sm:$0xc]
        %v5556 = vld [vmem:[%s4749 + $0x10] sm:$0xc]
        %v5557 = vld [vmem:[%s4749 + $0x18] sm:$0xc]
        %v5558 = vld [vmem:[%s4749 + $0x20] sm:$0xc]
        %v5559 = vld [vmem:[%s4749 + $0x28] sm:$0xc]
        %v5560 = vld [vmem:[%s4749 + $0x30] sm:$0xc]
        %v5561 = vld [vmem:[%s4749 + $0x38] sm:$0xc]
        %v5578 = vrot.slane %v5554, 6
        %v5579 = vrot.slane %v5578, 4
        %v5580 = vrot.slane %v5289, 6
        %v5581 = vsel %vm1681, %v5579, %v5580
        %v5582 = vrot.slane %v5555, 6
        %v5583 = vrot.slane %v5582, 4
        %v5584 = vrot.slane %v5290, 6
        %v5585 = vsel %vm1681, %v5583, %v5584
        %v5586 = vrot.slane %v5556, 6
        %v5587 = vrot.slane %v5586, 4
        %v5588 = vrot.slane %v5291, 6
        %v5589 = vsel %vm1681, %v5587, %v5588
        %v5590 = vrot.slane %v5557, 6
        %v5591 = vrot.slane %v5590, 4
        %v5592 = vrot.slane %v5292, 6
        %v5593 = vsel %vm1681, %v5591, %v5592
        %v5594 = vrot.slane %v5558, 6
        %v5595 = vrot.slane %v5594, 4
        %v5596 = vrot.slane %v5293, 6
        %v5597 = vsel %vm1681, %v5595, %v5596
        %v5598 = vrot.slane %v5559, 6
        %v5599 = vrot.slane %v5598, 4
        %v5600 = vrot.slane %v5294, 6
        %v5601 = vsel %vm1681, %v5599, %v5600
        %v5602 = vrot.slane %v5560, 6
        %v5603 = vrot.slane %v5602, 4
        %v5604 = vrot.slane %v5295, 6
        %v5605 = vsel %vm1681, %v5603, %v5604
        %v5606 = vrot.slane %v5561, 6
        %v5607 = vrot.slane %v5606, 4
        %v5608 = vrot.slane %v5296, 6
        %v5609 = vsel %vm1681, %v5607, %v5608
        %s5610 = scalar_lea.vmem %s3, 288
        %v5611 = vld [vmem:[%s5610] sm:$0xf]
        %v5612 = vld [vmem:[%s5610 + $0x4] sm:$0xf]
        %v5613 = vld [vmem:[%s5610 + $0x8] sm:$0xf]
        %v5614 = vunpack.c.l.b16 %v5581
        %v5615 = vunpack.c.l.b16 %v5585
        %v5616 = vunpack.c.l.b16 %v5589
        %v5617 = vunpack.c.l.b16 %v5593
        %v5618 = vunpack.c.l.b16 %v5597
        %v5619 = vunpack.c.l.b16 %v5601
        %v5620 = vunpack.c.l.b16 %v5605
        %v5621 = vunpack.c.l.b16 %v5609
        %v5622 = vpack.c.b16 %v5615, %v5614
        %v5623 = vpack.c.b16 %v5617, %v5616
        %v5624 = vpack.c.b16 %v5619, %v5618
        %v5625 = vpack.c.b16 %v5621, %v5620
        %v5629 = vunpack.c.l.b16 %v5611
        %v5630 = vunpack.c.l.b16 %v5612
        %v5631 = vunpack.c.l.b16 %v5613
        %v5632 = vpack.c.b16 %v5630, %v5629
        %v5633 = vpack.c.b16 %v5631, %v5631
        %v5636 = vsel %vm1024, %v5622, 0
        %v5639 = vsel %vm1024, %v5623, 0
        %v5642 = vsel %vm1024, %v5624, 0
        %v5645 = vsel %vm1024, %v5625, 0
        %v5648 = vsel %vm1037, %v5633, 0
        %5650 = vmatprep.subr.bf16.mxu0 0
        %5651 = vmatpush1.bf16.msra.mxu0 %v5632
        %5652 = vmatprep.subr.bf16.mxu0 0
        %5653 = vmatpush1.bf16.msra.mxu0 %v5648
        %5654 = vmatprep.subr.bf16.mxu0 0
        %5655 = vmatpush1.bf16.msra.mxu0 0
        %5656 = vmatprep.subr.bf16.mxu0 0
        %5657 = vmatpush1.bf16.msra.mxu0 0
        %5658 = vmatprep.subr.bf16.mxu0 0
        %5659 = vmatpush1.bf16.msra.mxu0 0
        %5660 = vmatprep.subr.bf16.mxu0 0
        %5661 = vmatpush1.bf16.msra.mxu0 0
        %5662 = vmatprep.subr.bf16.mxu0 0
        %5663 = vmatpush1.bf16.msra.mxu0 0
        %5664 = vmatprep.subr.bf16.mxu0 0
        %5665 = vmatpush1.bf16.msra.mxu0 0
        %5666 = vmatprep.subr.bf16.mxu0 0
        %5667 = vmatpush1.bf16.msra.mxu0 0
        %5668 = vmatprep.subr.bf16.mxu0 0
        %5669 = vmatpush1.bf16.msra.mxu0 0
        %5670 = vmatprep.subr.bf16.mxu0 0
        %5671 = vmatpush1.bf16.msra.mxu0 0
        %5672 = vmatprep.subr.bf16.mxu0 0
        %5673 = vmatpush1.bf16.msra.mxu0 0
        %5674 = vmatprep.subr.bf16.mxu0 0
        %5675 = vmatpush1.bf16.msra.mxu0 0
        %5676 = vmatprep.subr.bf16.mxu0 0
        %5677 = vmatpush1.bf16.msra.mxu0 0
        %5678 = vmatprep.subr.bf16.mxu0 0
        %5679 = vmatpush1.bf16.msra.mxu0 0
        %5680 = vmatprep.subr.bf16.mxu0 0
        %5681 = vmatpush1.bf16.msra.mxu0 0
        %5682 = vmatprep.mubr.bf16.mxu0 0
        %5683 = vmatmul.mubr.bf16.gmra.mrb[0].mxu0 %v5636
        %v5684 = vpop.f32.mrb[0].mxu0
        %v5685 = vadd.f32 0.0, %v5684
        %v5686 = vpop.f32.mrb[0].mxu0
        %v5687 = vpop.f32.mrb[0].mxu0
        %v5688 = vadd.f32 0.0, %v5687
        %v5689 = vpop.f32.mrb[0].mxu0
        %5690 = vmatprep.mubr.bf16.mxu0 0
        %5691 = vmatmul.mubr.bf16.gmra.mrb[0].mxu0 %v5639
        %v5692 = vpop.f32.mrb[0].mxu0
        %v5693 = vadd.f32 0.0, %v5692
        %v5694 = vpop.f32.mrb[0].mxu0
        %v5695 = vpop.f32.mrb[0].mxu0
        %v5696 = vadd.f32 0.0, %v5695
        %v5697 = vpop.f32.mrb[0].mxu0
        %5698 = vmatprep.mubr.bf16.mxu0 0
        %5699 = vmatmul.mubr.bf16.gmra.mrb[0].mxu0 %v5642
        %v5700 = vpop.f32.mrb[0].mxu0
        %v5701 = vadd.f32 0.0, %v5700
        %v5702 = vpop.f32.mrb[0].mxu0
        %v5703 = vpop.f32.mrb[0].mxu0
        %v5704 = vadd.f32 0.0, %v5703
        %v5705 = vpop.f32.mrb[0].mxu0
        %5706 = vmatprep.mubr.bf16.mxu0 0
        %5707 = vmatmul.mubr.bf16.gmra.mrb[0].mxu0 %v5645
        %v5708 = vpop.f32.mrb[0].mxu0
        %v5709 = vadd.f32 0.0, %v5708
        %v5710 = vpop.f32.mrb[0].mxu0
        %v5711 = vpop.f32.mrb[0].mxu0
        %v5712 = vadd.f32 0.0, %v5711
        %v5713 = vpop.f32.mrb[0].mxu0
        %5714 = vdwg.mxu0
        %v5715 = vadd.f32 %v5546, %v5685
        %v5716 = vadd.f32 %v5547, %v5688
        %v5717 = vadd.f32 %v5548, %v5693
        %v5718 = vadd.f32 %v5549, %v5696
        %v5719 = vadd.f32 %v5550, %v5701
        %v5720 = vadd.f32 %v5551, %v5704
        %v5721 = vadd.f32 %v5552, %v5709
        %v5722 = vadd.f32 %v5553, %v5712
        %v5723 = vld [vmem:[%s4] sm:$0x1]
        %v5725 = vlaneseq
        %v5726 = vshrl.u32 %v5725, 7
        %v5727 = vsub.s32 0, %v5726
        %v5728 = vrot.slane %v5723, %v5727
        %v5730 = vadd.f32 %v5715, %v5728
        %v5731 = vadd.f32 %v5716, %v5728
        %v5732 = vadd.f32 %v5717, %v5728
        %v5733 = vadd.f32 %v5718, %v5728
        %v5734 = vadd.f32 %v5719, %v5728
        %v5735 = vadd.f32 %v5720, %v5728
        %v5736 = vadd.f32 %v5721, %v5728
        %v5737 = vadd.f32 %v5722, %v5728
        %v5738 = vmax.f32 %v5730, 0.0
        %v5739 = vmax.f32 %v5731, 0.0
        %v5740 = vmax.f32 %v5732, 0.0
        %v5741 = vmax.f32 %v5733, 0.0
        %v5742 = vmax.f32 %v5734, 0.0
        %v5743 = vmax.f32 %v5735, 0.0
        %v5744 = vmax.f32 %v5736, 0.0
        %v5745 = vmax.f32 %v5737, 0.0
        %vm5746 = vcmask 523264
        %5747 = vst.msk [vmem:[%s218] sm:$0xff] %vm5746, %v5738
        %5748 = vst.msk [vmem:[%s218 + $0x8] sm:$0xff] %vm5746, %v5739
        %5749 = vst.msk [vmem:[%s218 + $0x10] sm:$0xff] %vm5746, %v5740
        %5750 = vst.msk [vmem:[%s218 + $0x18] sm:$0xff] %vm5746, %v5741
        %5751 = vst.msk [vmem:[%s218 + $0x20] sm:$0xff] %vm5746, %v5742
        %5752 = vst.msk [vmem:[%s218 + $0x28] sm:$0xff] %vm5746, %v5743
        %5753 = vst.msk [vmem:[%s218 + $0x30] sm:$0xff] %vm5746, %v5744
        %5754 = vst.msk [vmem:[%s218 + $0x38] sm:$0xff] %vm5746, %v5745
        %s5755 = sand.u32 %s137, 1
        %s5756 = scalar_lea.sflag [#allocation4], %s5755
        %s5757 = sand.u32 %s137, 1
        %s5758 = smul.addr %s5757, 64
        %s5759 = scalar_lea.vmem [#allocation3], %s5758
        // Predicated region
        $region41: #{forward.1} parent=39 // pred_check
          %p5760 = pneg %p147
        $region42: #{forward.1} parent=39 // pred_check_branch
          %5762 = sbr.rel (%p5760) target = $region44
        $region43: #{forward.1} parent=39 // pred_region
          %s5763 = smul.u32 8, %s19
          %s5765 = ssub.s32 1024, 1024
          %5766 = vsyncadd %s5756, %s5765
          %s5767 = smul.addr %s5763, 128
          %s5768 = scalar_lea.hbm %s5, %s5767
          %s5769 = sshll.u32 %s5759, 4
          %s5770 = int_to_ptr.vmem [resolvable:$true] %s5769
          %5775 = dma.vmem_to_hbm [thread:$0]  %s5770, 1024, %s5768, %s5756, 128, 128, 8
        $region44: #{forward.1} parent=39 // pred_fallthru
          _
      $region40: #{forward.1} parent=5 // pred_fallthru
        _
      %p5776 = scmp.le.s32.totalorder 2, %s14
      // Predicated region
      $region45: #{forward.1} parent=5 // pred_check
        %p5777 = pneg %p5776
      $region46: #{forward.1} parent=5 // pred_check_branch
        %5779 = sbr.rel (%p5777) target = $region48
      $region47: #{forward.1} parent=5 // pred_region
        %s5780 = ssub.s32 %s14, 2
        // Predicated region
        $region49: #{forward.1} parent=47 // pred_check
          %p5781 = pneg %p153
        $region50: #{forward.1} parent=47 // pred_check_branch
          %5783 = sbr.rel (%p5781) target = $region52
        $region51: #{forward.1} parent=47 // pred_region
          %s5784 = sand.u32 %s138, 1
          %s5785 = scalar_lea.sflag [#allocation4], %s5784
          %s5786 = sand.u32 %s138, 1
          %s5787 = smul.addr %s5786, 64
          %s5788 = scalar_lea.vmem [#allocation3], %s5787
          %5789 = dma.done %s5785, 1024
        $region52: #{forward.1} parent=47 // pred_fallthru
          _
      $region48: #{forward.1} parent=5 // pred_fallthru
        _
    $region6: #{forward.1} parent=1 // loop_footer
      %s18 = sadd.s32 1, %s14
    $region7: #{forward.1} parent=1 // loop_footer_branch
      %13 = sbr.rel target = $region3
    $region8: #{forward.1} parent=1 // loop_exit
      _
    %5790 = vsyncpa [#allocation4], 1
    %s5791 = scalar_lea.sflag [#allocation4], 1
    %5792 = vsyncpa %s5791, 1

</llo_original>
